<compile_context>
chip_gen: v7x
topology: tpu7x:2x2x1
jax: 0.10.0
libtpu: 0.0.40
codegen_flags: <defaults>
</compile_context>

<pallas_src>
import numpy as np
import jax
import jax.numpy as jnp
from jax import lax
from jax.experimental import pallas as pl
from jax.experimental.pallas import tpu as pltpu

# ---------------- physical constants (same as the torch script) -------------
um = 1e-06
nm = 1e-09
cm = 0.01
d = 8 * um                 # pixel pitch  -> dx = dy = d (extent = N * d)
wavelength = 632.8 * nm
z = 10 * cm
LN_EPS = 1e-5              # torch.nn.LayerNorm default eps

# ---------------- small demo shapes ------------------------------------------
NY = 16                    # torch module uses Ny=1080; small here
NX = 128                   # torch module uses Nx=1620; small here
NUM_LAYERS = 2


# ---------------- constant (parameter-like) setup on host --------------------
def dft_matrices(n):
    """W[u, k] = exp(-2*pi*i*u*k/n) as (real, imag) float64 numpy."""
    k = np.arange(n)
    ang = -2.0 * np.pi * np.outer(k, k) / n
    return np.cos(ang), np.sin(ang)


def transfer_function(ny, nx, dy, dx, lam, dist):
    """H = exp(1j * kz * z) on the (unshifted) fftfreq grid, as (re, im)."""
    fy = np.fft.fftfreq(ny, d=dy)
    fx = np.fft.fftfreq(nx, d=dx)
    arg = (2.0 * np.pi) ** 2 * ((1.0 / lam) ** 2
                                - fy[:, None] ** 2 - fx[None, :] ** 2)
    tmp = np.sqrt(np.abs(arg))
    h_re = np.where(arg >= 0, np.cos(tmp * dist), np.exp(-tmp * dist))
    h_im = np.where(arg >= 0, np.sin(tmp * dist), 0.0)
    return h_re, h_im


# ---------------- the Pallas kernel ------------------------------------------
def don_kernel(x_ref, cp_ref, sp_ref,
               hr_ref, hi_ref, hpr_ref, hpi_ref,
               wyr_ref, wyi_ref, wys_ref,
               wxr_ref, wxi_ref, wxs_ref,
               vyi_ref, vys_ref,
               vxr_ref, vxi_ref, vxs_ref,
               out_ref):
    ny, nx = out_ref.shape
    inv_cnt = jnp.float32(1.0 / (ny * nx))

    # forward DFT matrices (bf16, host-precomputed sums for Gauss 3-mult)
    wyr, wyi, wys = wyr_ref[...], wyi_ref[...], wys_ref[...]
    wxr, wxi, wxs = wxr_ref[...], wxi_ref[...], wxs_ref[...]
    # inverse (conjugate) DFT matrices; conj(Wy) real part == Wyr, and the
    # 1/(Ny*Nx) scale is already folded into the vx* constants on host.
    vyr, vyi, vys = wyr, vyi_ref[...], vys_ref[...]
    vxr, vxi, vxs = vxr_ref[...], vxi_ref[...], vxs_ref[...]
    hr, hi = hr_ref[...], hi_ref[...]          # H                 (Ny, Nx)
    hpr, hpi = hpr_ref[...], hpi_ref[...]      # [H | H^2] stacked (Ny, 2Nx)

    bf16 = lambda a: a.astype(jnp.bfloat16)
    dot = lambda a, b: jnp.dot(a, b, preferred_element_type=jnp.float32)

    def cmm_lconst(cr, ci, cs, er, ei):
        # (cr + i*ci) @ (er + i*ei), constant on the LEFT; cs = cr + ci.
        # Gauss 3-mult: rr = P1 - P2, ri = P3 - P1 - P2.
        ebr, ebi, ebs = bf16(er), bf16(ei), bf16(er + ei)
        p1, p2, p3 = dot(cr, ebr), dot(ci, ebi), dot(cs, ebs)
        return p1 - p2, p3 - p1 - p2

    def cmm_rconst(er, ei, cr, ci, cs):
        # (er + i*ei) @ (cr + i*ci), constant on the RIGHT; cs = cr + ci.
        ebr, ebi, ebs = bf16(er), bf16(ei), bf16(er + ei)
        p1, p2, p3 = dot(ebr, cr), dot(ebi, ci), dot(ebs, cs)
        return p1 - p2, p3 - p1 - p2

    def fft2(er, ei):
        tr, ti = cmm_lconst(wyr, wyi, wys, er, ei)        # Wy @ E
        return cmm_rconst(tr, ti, wxr, wxi, wxs)          # ... @ Wx

    def fft2_real(er):
        # imaginary part of the input is identically zero -> only 2 real dots
        # in the Wy stage (Mosaic does not eliminate dots against zeros).
        eb = bf16(er)
        tr, ti = dot(wyr, eb), dot(wyi, eb)
        return cmm_rconst(tr, ti, wxr, wxi, wxs)

    def ifft2(cr, ci):
        # conj(Wy) @ C @ conj(Wx) / (Ny*Nx); scale folded into vx* on host.
        tr, ti = cmm_lconst(vyr, vyi, vys, cr, ci)
        return cmm_rconst(tr, ti, vxr, vxi, vxs)

    def ifft2_pair(pr, pi):
        # pr/pi hold two fields lane-stacked as [A | B] with shape (Ny, 2*Nx).
        # Both DFT stages are issued as ONE wide MXU complex matmul each,
        # halving the dot-dispatch count vs. two separate ifft2 calls.
        tr, ti = cmm_lconst(vyr, vyi, vys, pr, pi)                 # (Ny, 2Nx)
        # restack [T_A | T_B] -> [T_A ; T_B] so the Vx stage is also one dot
        tr2 = jnp.concatenate([tr[:, :nx], tr[:, nx:]], axis=0)    # (2Ny, Nx)
        ti2 = jnp.concatenate([ti[:, :nx], ti[:, nx:]], axis=0)
        rr, ri = cmm_rconst(tr2, ti2, vxr, vxi, vxs)               # (2Ny, Nx)
        return (rr[:ny], ri[:ny]), (rr[ny:], ri[ny:])

    def cmul(ar, ai, br, bi):                             # elementwise complex *
        return ar * br - ai * bi, ar * bi + ai * br

    x = x_ref[...]
    num_layers = cp_ref.shape[0]
    for i in range(num_layers):                           # static, small count
        # C = fft2(x)                      (F.set_source_amplitude; x is real)
        cr, ci = fft2_real(x)
        # Lane-stack C with itself and multiply by the host-stacked [H | H^2]
        # in a single element-wise pass -> [C*H | C*H^2].
        c2r = jnp.concatenate([cr, cr], axis=1)
        c2i = jnp.concatenate([ci, ci], axis=1)
        pr, pi = cmul(c2r, c2i, hpr, hpi)
        # E1 = ifft2(C*H)                  (F.propagate(z))
        # E2 = ifft2(C*H^2)                (F.shortcut(): fft2(E1) == C*H, so
        #                                   the redundant fft2 is eliminated)
        (e1r, e1i), (e2r, e2i) = ifft2_pair(pr, pi)
        res = e2r * e2r + e2i * e2i
        # F.diffractive_layer(phase):  E *= exp(1j*phase)  (cos/sin from host)
        e3r, e3i = cmul(e1r, e1i, cp_ref[i], sp_ref[i])
        # F.propagate(z);  I = |E|^2
        fr, fi = fft2(e3r, e3i)
        qr, qi = cmul(fr, fi, hr, hi)
        e4r, e4i = ifft2(qr, qi)
        inten = e4r * e4r + e4i * e4i
        # mix + LayerNorm([Ny, Nx], elementwise_affine=False), fused stats
        x = 0.5 * res + 0.5 * inten
        mean = jnp.sum(x) * inv_cnt
        var = jnp.maximum(jnp.sum(x * x) * inv_cnt - mean * mean,
                          jnp.float32(0.0))
        x = (x - mean) * lax.rsqrt(var + jnp.float32(LN_EPS))

    out_ref[...] = x


# ---------------- wrapper -----------------------------------------------------
def don_forward(x, layer_phases):
    ny, nx = x.shape
    inv_n = 1.0 / (ny * nx)

    wy_re, wy_im = dft_matrices(ny)
    wx_re, wx_im = dft_matrices(nx)
    h_re, h_im = transfer_function(ny, nx, d, d, wavelength, z)
    h2_re = h_re * h_re - h_im * h_im          # H^2 (for the shortcut path)
    h2_im = 2.0 * h_re * h_im
    # host-stacked [H | H^2] so the kernel masks C for both ifft2s in one pass
    hp_re = np.concatenate([h_re, h2_re], axis=1)
    hp_im = np.concatenate([h_im, h2_im], axis=1)

    bf = lambda a: jnp.asarray(a, jnp.bfloat16)
    f32 = lambda a: jnp.asarray(a, jnp.float32)

    # forward DFT (bf16 MXU operands; f32 accumulation inside the kernel)
    wyr, wyi, wys = bf(wy_re), bf(wy_im), bf(wy_re + wy_im)
    wxr, wxi, wxs = bf(wx_re), bf(wx_im), bf(wx_re + wx_im)
    # conjugate (inverse) DFT; 1/(Ny*Nx) folded into the Wx-side constants
    vyi, vys = bf(-wy_im), bf(wy_re - wy_im)
    vxr = bf(wx_re * inv_n)
    vxi = bf(-wx_im * inv_n)
    vxs = bf((wx_re - wx_im) * inv_n)

    # phases only ever appear through cos/sin -> precompute outside the kernel
    phases = jnp.asarray(layer_phases, jnp.float32)
    cosp, sinp = jnp.cos(phases), jnp.sin(phases)

    vmem = pl.BlockSpec(memory_space=pltpu.MemorySpace.VMEM)
    return pl.pallas_call(
        don_kernel,
        out_shape=jax.ShapeDtypeStruct((ny, nx), jnp.float32),
        in_specs=[vmem] * 18,
        out_specs=vmem,
    )(f32(x), cosp, sinp,
      f32(h_re), f32(h_im), f32(hp_re), f32(hp_im),
      wyr, wyi, wys, wxr, wxi, wxs,
      vyi, vys, vxr, vxi, vxs)


# ---------------- demo --------------------------------------------------------
if __name__ == "__main__":
    key = jax.random.PRNGKey(0)
    kx, kp = jax.random.split(key)
    # input image (non-negative, like an intensity pattern)
    x = jnp.abs(jax.random.normal(kx, (NY, NX), dtype=jnp.float32))
    # deterministic diffractive phase layers, shape (L, Ny, Nx)
    layer_phases = jax.random.uniform(
        kp, (NUM_LAYERS, NY, NX), dtype=jnp.float32,
        minval=0.0, maxval=2.0 * np.pi)

    out = don_forward(x, layer_phases)
    jax.block_until_ready(out)
    assert out.shape == (NY, NX) and out.dtype == jnp.float32
    assert bool(jnp.all(jnp.isfinite(out)))
    print("KERNEL_OK")
</pallas_src>

<mosaic_0001>
module attributes {stable_mosaic.version = 11 : i64} {
  func.func @don_kernel(%arg0: memref<16x128xf32, #tpu.memory_space<vmem>>, %arg1: memref<2x16x128xf32, #tpu.memory_space<vmem>>, %arg2: memref<2x16x128xf32, #tpu.memory_space<vmem>>, %arg3: memref<16x128xf32, #tpu.memory_space<vmem>>, %arg4: memref<16x128xf32, #tpu.memory_space<vmem>>, %arg5: memref<16x256xf32, #tpu.memory_space<vmem>>, %arg6: memref<16x256xf32, #tpu.memory_space<vmem>>, %arg7: memref<16x16xbf16, #tpu.memory_space<vmem>>, %arg8: memref<16x16xbf16, #tpu.memory_space<vmem>>, %arg9: memref<16x16xbf16, #tpu.memory_space<vmem>>, %arg10: memref<128x128xbf16, #tpu.memory_space<vmem>>, %arg11: memref<128x128xbf16, #tpu.memory_space<vmem>>, %arg12: memref<128x128xbf16, #tpu.memory_space<vmem>>, %arg13: memref<16x16xbf16, #tpu.memory_space<vmem>>, %arg14: memref<16x16xbf16, #tpu.memory_space<vmem>>, %arg15: memref<128x128xbf16, #tpu.memory_space<vmem>>, %arg16: memref<128x128xbf16, #tpu.memory_space<vmem>>, %arg17: memref<128x128xbf16, #tpu.memory_space<vmem>>, %arg18: memref<16x128xf32, #tpu.memory_space<vmem>>) attributes {dimension_semantics = [], scalar_prefetch = 0 : i64, scratch_operands = 0 : i64, tpu.core_type = #tpu.core_type<tc>} {
    %c0 = arith.constant 0 : index
    %c0_0 = arith.constant 0 : index
    %0 = vector.load %arg7[%c0, %c0_0] : memref<16x16xbf16, #tpu.memory_space<vmem>>, vector<16x16xbf16>
    %c0_1 = arith.constant 0 : index
    %c0_2 = arith.constant 0 : index
    %1 = vector.load %arg8[%c0_1, %c0_2] : memref<16x16xbf16, #tpu.memory_space<vmem>>, vector<16x16xbf16>
    %c0_3 = arith.constant 0 : index
    %c0_4 = arith.constant 0 : index
    %2 = vector.load %arg9[%c0_3, %c0_4] : memref<16x16xbf16, #tpu.memory_space<vmem>>, vector<16x16xbf16>
    %c0_5 = arith.constant 0 : index
    %c0_6 = arith.constant 0 : index
    %3 = vector.load %arg10[%c0_5, %c0_6] : memref<128x128xbf16, #tpu.memory_space<vmem>>, vector<128x128xbf16>
    %c0_7 = arith.constant 0 : index
    %c0_8 = arith.constant 0 : index
    %4 = vector.load %arg11[%c0_7, %c0_8] : memref<128x128xbf16, #tpu.memory_space<vmem>>, vector<128x128xbf16>
    %c0_9 = arith.constant 0 : index
    %c0_10 = arith.constant 0 : index
    %5 = vector.load %arg12[%c0_9, %c0_10] : memref<128x128xbf16, #tpu.memory_space<vmem>>, vector<128x128xbf16>
    %c0_11 = arith.constant 0 : index
    %c0_12 = arith.constant 0 : index
    %6 = vector.load %arg13[%c0_11, %c0_12] : memref<16x16xbf16, #tpu.memory_space<vmem>>, vector<16x16xbf16>
    %c0_13 = arith.constant 0 : index
    %c0_14 = arith.constant 0 : index
    %7 = vector.load %arg14[%c0_13, %c0_14] : memref<16x16xbf16, #tpu.memory_space<vmem>>, vector<16x16xbf16>
    %c0_15 = arith.constant 0 : index
    %c0_16 = arith.constant 0 : index
    %8 = vector.load %arg15[%c0_15, %c0_16] : memref<128x128xbf16, #tpu.memory_space<vmem>>, vector<128x128xbf16>
    %c0_17 = arith.constant 0 : index
    %c0_18 = arith.constant 0 : index
    %9 = vector.load %arg16[%c0_17, %c0_18] : memref<128x128xbf16, #tpu.memory_space<vmem>>, vector<128x128xbf16>
    %c0_19 = arith.constant 0 : index
    %c0_20 = arith.constant 0 : index
    %10 = vector.load %arg17[%c0_19, %c0_20] : memref<128x128xbf16, #tpu.memory_space<vmem>>, vector<128x128xbf16>
    %c0_21 = arith.constant 0 : index
    %c0_22 = arith.constant 0 : index
    %11 = vector.load %arg3[%c0_21, %c0_22] : memref<16x128xf32, #tpu.memory_space<vmem>>, vector<16x128xf32>
    %c0_23 = arith.constant 0 : index
    %c0_24 = arith.constant 0 : index
    %12 = vector.load %arg4[%c0_23, %c0_24] : memref<16x128xf32, #tpu.memory_space<vmem>>, vector<16x128xf32>
    %c0_25 = arith.constant 0 : index
    %c0_26 = arith.constant 0 : index
    %13 = vector.load %arg5[%c0_25, %c0_26] : memref<16x256xf32, #tpu.memory_space<vmem>>, vector<16x256xf32>
    %c0_27 = arith.constant 0 : index
    %c0_28 = arith.constant 0 : index
    %14 = vector.load %arg6[%c0_27, %c0_28] : memref<16x256xf32, #tpu.memory_space<vmem>>, vector<16x256xf32>
    %c0_29 = arith.constant 0 : index
    %c0_30 = arith.constant 0 : index
    %15 = vector.load %arg0[%c0_29, %c0_30] : memref<16x128xf32, #tpu.memory_space<vmem>>, vector<16x128xf32>
    %16 = arith.truncf %15 : vector<16x128xf32> to vector<16x128xbf16>
    %cst = arith.constant dense<0.000000e+00> : vector<16x128xf32>
    %17 = tpu.matmul %0, %16, %cst {dimension_numbers = #tpu.dot_dimension_numbers<[1], [0], [0], [1], [0, 0, 1, 1], [], []>} : vector<16x16xbf16>, vector<16x128xbf16>, vector<16x128xf32> -> vector<16x128xf32>
    %cst_31 = arith.constant dense<0.000000e+00> : vector<16x128xf32>
    %18 = tpu.matmul %1, %16, %cst_31 {dimension_numbers = #tpu.dot_dimension_numbers<[1], [0], [0], [1], [0, 0, 1, 1], [], []>} : vector<16x16xbf16>, vector<16x128xbf16>, vector<16x128xf32> -> vector<16x128xf32>
    %19 = arith.truncf %17 : vector<16x128xf32> to vector<16x128xbf16>
    %20 = arith.truncf %18 : vector<16x128xf32> to vector<16x128xbf16>
    %21 = arith.addf %17, %18 : vector<16x128xf32>
    %22 = arith.truncf %21 : vector<16x128xf32> to vector<16x128xbf16>
    %cst_32 = arith.constant dense<0.000000e+00> : vector<16x128xf32>
    %23 = tpu.matmul %19, %3, %cst_32 {dimension_numbers = #tpu.dot_dimension_numbers<[1], [0], [0], [1], [0, 0, 1, 1], [], []>} : vector<16x128xbf16>, vector<128x128xbf16>, vector<16x128xf32> -> vector<16x128xf32>
    %cst_33 = arith.constant dense<0.000000e+00> : vector<16x128xf32>
    %24 = tpu.matmul %20, %4, %cst_33 {dimension_numbers = #tpu.dot_dimension_numbers<[1], [0], [0], [1], [0, 0, 1, 1], [], []>} : vector<16x128xbf16>, vector<128x128xbf16>, vector<16x128xf32> -> vector<16x128xf32>
    %cst_34 = arith.constant dense<0.000000e+00> : vector<16x128xf32>
    %25 = tpu.matmul %22, %5, %cst_34 {dimension_numbers = #tpu.dot_dimension_numbers<[1], [0], [0], [1], [0, 0, 1, 1], [], []>} : vector<16x128xbf16>, vector<128x128xbf16>, vector<16x128xf32> -> vector<16x128xf32>
    %26 = arith.subf %23, %24 : vector<16x128xf32>
    %27 = arith.subf %25, %23 : vector<16x128xf32>
    %28 = arith.subf %27, %24 : vector<16x128xf32>
    %29 = tpu.concatenate %26, %26 in 1 : vector<16x128xf32>, vector<16x128xf32> -> vector<16x256xf32>
    %30 = tpu.concatenate %28, %28 in 1 : vector<16x128xf32>, vector<16x128xf32> -> vector<16x256xf32>
    %31 = arith.mulf %29, %13 : vector<16x256xf32>
    %32 = arith.mulf %30, %14 : vector<16x256xf32>
    %33 = arith.subf %31, %32 : vector<16x256xf32>
    %34 = arith.mulf %29, %14 : vector<16x256xf32>
    %35 = arith.mulf %30, %13 : vector<16x256xf32>
    %36 = arith.addf %34, %35 : vector<16x256xf32>
    %37 = arith.truncf %33 : vector<16x256xf32> to vector<16x256xbf16>
    %38 = arith.truncf %36 : vector<16x256xf32> to vector<16x256xbf16>
    %39 = arith.addf %33, %36 : vector<16x256xf32>
    %40 = arith.truncf %39 : vector<16x256xf32> to vector<16x256xbf16>
    %cst_35 = arith.constant dense<0.000000e+00> : vector<16x256xf32>
    %41 = tpu.matmul %0, %37, %cst_35 {dimension_numbers = #tpu.dot_dimension_numbers<[1], [0], [0], [1], [0, 0, 1, 1], [], []>} : vector<16x16xbf16>, vector<16x256xbf16>, vector<16x256xf32> -> vector<16x256xf32>
    %cst_36 = arith.constant dense<0.000000e+00> : vector<16x256xf32>
    %42 = tpu.matmul %6, %38, %cst_36 {dimension_numbers = #tpu.dot_dimension_numbers<[1], [0], [0], [1], [0, 0, 1, 1], [], []>} : vector<16x16xbf16>, vector<16x256xbf16>, vector<16x256xf32> -> vector<16x256xf32>
    %cst_37 = arith.constant dense<0.000000e+00> : vector<16x256xf32>
    %43 = tpu.matmul %7, %40, %cst_37 {dimension_numbers = #tpu.dot_dimension_numbers<[1], [0], [0], [1], [0, 0, 1, 1], [], []>} : vector<16x16xbf16>, vector<16x256xbf16>, vector<16x256xf32> -> vector<16x256xf32>
    %44 = arith.subf %41, %42 : vector<16x256xf32>
    %45 = arith.subf %43, %41 : vector<16x256xf32>
    %46 = arith.subf %45, %42 : vector<16x256xf32>
    %47 = vector.extract_strided_slice %44 {offsets = [0, 0], sizes = [16, 128], strides = [1, 1]} : vector<16x256xf32> to vector<16x128xf32>
    %48 = vector.extract_strided_slice %44 {offsets = [0, 128], sizes = [16, 128], strides = [1, 1]} : vector<16x256xf32> to vector<16x128xf32>
    %49 = tpu.concatenate %47, %48 in 0 : vector<16x128xf32>, vector<16x128xf32> -> vector<32x128xf32>
    %50 = vector.extract_strided_slice %46 {offsets = [0, 0], sizes = [16, 128], strides = [1, 1]} : vector<16x256xf32> to vector<16x128xf32>
    %51 = vector.extract_strided_slice %46 {offsets = [0, 128], sizes = [16, 128], strides = [1, 1]} : vector<16x256xf32> to vector<16x128xf32>
    %52 = tpu.concatenate %50, %51 in 0 : vector<16x128xf32>, vector<16x128xf32> -> vector<32x128xf32>
    %53 = arith.truncf %49 : vector<32x128xf32> to vector<32x128xbf16>
    %54 = arith.truncf %52 : vector<32x128xf32> to vector<32x128xbf16>
    %55 = arith.addf %49, %52 : vector<32x128xf32>
    %56 = arith.truncf %55 : vector<32x128xf32> to vector<32x128xbf16>
    %cst_38 = arith.constant dense<0.000000e+00> : vector<32x128xf32>
    %57 = tpu.matmul %53, %8, %cst_38 {dimension_numbers = #tpu.dot_dimension_numbers<[1], [0], [0], [1], [0, 0, 1, 1], [], []>} : vector<32x128xbf16>, vector<128x128xbf16>, vector<32x128xf32> -> vector<32x128xf32>
    %cst_39 = arith.constant dense<0.000000e+00> : vector<32x128xf32>
    %58 = tpu.matmul %54, %9, %cst_39 {dimension_numbers = #tpu.dot_dimension_numbers<[1], [0], [0], [1], [0, 0, 1, 1], [], []>} : vector<32x128xbf16>, vector<128x128xbf16>, vector<32x128xf32> -> vector<32x128xf32>
    %cst_40 = arith.constant dense<0.000000e+00> : vector<32x128xf32>
    %59 = tpu.matmul %56, %10, %cst_40 {dimension_numbers = #tpu.dot_dimension_numbers<[1], [0], [0], [1], [0, 0, 1, 1], [], []>} : vector<32x128xbf16>, vector<128x128xbf16>, vector<32x128xf32> -> vector<32x128xf32>
    %60 = arith.subf %57, %58 : vector<32x128xf32>
    %61 = arith.subf %59, %57 : vector<32x128xf32>
    %62 = arith.subf %61, %58 : vector<32x128xf32>
    %63 = vector.extract_strided_slice %60 {offsets = [0, 0], sizes = [16, 128], strides = [1, 1]} : vector<32x128xf32> to vector<16x128xf32>
    %64 = vector.extract_strided_slice %62 {offsets = [0, 0], sizes = [16, 128], strides = [1, 1]} : vector<32x128xf32> to vector<16x128xf32>
    %65 = vector.extract_strided_slice %60 {offsets = [16, 0], sizes = [16, 128], strides = [1, 1]} : vector<32x128xf32> to vector<16x128xf32>
    %66 = vector.extract_strided_slice %62 {offsets = [16, 0], sizes = [16, 128], strides = [1, 1]} : vector<32x128xf32> to vector<16x128xf32>
    %67 = arith.mulf %65, %65 : vector<16x128xf32>
    %68 = arith.mulf %66, %66 : vector<16x128xf32>
    %69 = arith.addf %67, %68 : vector<16x128xf32>
    %c0_41 = arith.constant 0 : index
    %c0_42 = arith.constant 0 : index
    %c0_43 = arith.constant 0 : index
    %70 = vector.load %arg1[%c0_41, %c0_42, %c0_43] : memref<2x16x128xf32, #tpu.memory_space<vmem>>, vector<1x16x128xf32>
    %71 = vector.shape_cast %70 : vector<1x16x128xf32> to vector<16x128xf32>
    %c0_44 = arith.constant 0 : index
    %c0_45 = arith.constant 0 : index
    %c0_46 = arith.constant 0 : index
    %72 = vector.load %arg2[%c0_44, %c0_45, %c0_46] : memref<2x16x128xf32, #tpu.memory_space<vmem>>, vector<1x16x128xf32>
    %73 = vector.shape_cast %72 : vector<1x16x128xf32> to vector<16x128xf32>
    %74 = arith.mulf %63, %71 : vector<16x128xf32>
    %75 = arith.mulf %64, %73 : vector<16x128xf32>
    %76 = arith.subf %74, %75 : vector<16x128xf32>
    %77 = arith.mulf %63, %73 : vector<16x128xf32>
    %78 = arith.mulf %64, %71 : vector<16x128xf32>
    %79 = arith.addf %77, %78 : vector<16x128xf32>
    %80 = arith.truncf %76 : vector<16x128xf32> to vector<16x128xbf16>
    %81 = arith.truncf %79 : vector<16x128xf32> to vector<16x128xbf16>
    %82 = arith.addf %76, %79 : vector<16x128xf32>
    %83 = arith.truncf %82 : vector<16x128xf32> to vector<16x128xbf16>
    %cst_47 = arith.constant dense<0.000000e+00> : vector<16x128xf32>
    %84 = tpu.matmul %0, %80, %cst_47 {dimension_numbers = #tpu.dot_dimension_numbers<[1], [0], [0], [1], [0, 0, 1, 1], [], []>} : vector<16x16xbf16>, vector<16x128xbf16>, vector<16x128xf32> -> vector<16x128xf32>
    %cst_48 = arith.constant dense<0.000000e+00> : vector<16x128xf32>
    %85 = tpu.matmul %1, %81, %cst_48 {dimension_numbers = #tpu.dot_dimension_numbers<[1], [0], [0], [1], [0, 0, 1, 1], [], []>} : vector<16x16xbf16>, vector<16x128xbf16>, vector<16x128xf32> -> vector<16x128xf32>
    %cst_49 = arith.constant dense<0.000000e+00> : vector<16x128xf32>
    %86 = tpu.matmul %2, %83, %cst_49 {dimension_numbers = #tpu.dot_dimension_numbers<[1], [0], [0], [1], [0, 0, 1, 1], [], []>} : vector<16x16xbf16>, vector<16x128xbf16>, vector<16x128xf32> -> vector<16x128xf32>
    %87 = arith.subf %84, %85 : vector<16x128xf32>
    %88 = arith.subf %86, %84 : vector<16x128xf32>
    %89 = arith.subf %88, %85 : vector<16x128xf32>
    %90 = arith.truncf %87 : vector<16x128xf32> to vector<16x128xbf16>
    %91 = arith.truncf %89 : vector<16x128xf32> to vector<16x128xbf16>
    %92 = arith.addf %87, %89 : vector<16x128xf32>
    %93 = arith.truncf %92 : vector<16x128xf32> to vector<16x128xbf16>
    %cst_50 = arith.constant dense<0.000000e+00> : vector<16x128xf32>
    %94 = tpu.matmul %90, %3, %cst_50 {dimension_numbers = #tpu.dot_dimension_numbers<[1], [0], [0], [1], [0, 0, 1, 1], [], []>} : vector<16x128xbf16>, vector<128x128xbf16>, vector<16x128xf32> -> vector<16x128xf32>
    %cst_51 = arith.constant dense<0.000000e+00> : vector<16x128xf32>
    %95 = tpu.matmul %91, %4, %cst_51 {dimension_numbers = #tpu.dot_dimension_numbers<[1], [0], [0], [1], [0, 0, 1, 1], [], []>} : vector<16x128xbf16>, vector<128x128xbf16>, vector<16x128xf32> -> vector<16x128xf32>
    %cst_52 = arith.constant dense<0.000000e+00> : vector<16x128xf32>
    %96 = tpu.matmul %93, %5, %cst_52 {dimension_numbers = #tpu.dot_dimension_numbers<[1], [0], [0], [1], [0, 0, 1, 1], [], []>} : vector<16x128xbf16>, vector<128x128xbf16>, vector<16x128xf32> -> vector<16x128xf32>
    %97 = arith.subf %94, %95 : vector<16x128xf32>
    %98 = arith.subf %96, %94 : vector<16x128xf32>
    %99 = arith.subf %98, %95 : vector<16x128xf32>
    %100 = arith.mulf %97, %11 : vector<16x128xf32>
    %101 = arith.mulf %99, %12 : vector<16x128xf32>
    %102 = arith.subf %100, %101 : vector<16x128xf32>
    %103 = arith.mulf %97, %12 : vector<16x128xf32>
    %104 = arith.mulf %99, %11 : vector<16x128xf32>
    %105 = arith.addf %103, %104 : vector<16x128xf32>
    %106 = arith.truncf %102 : vector<16x128xf32> to vector<16x128xbf16>
    %107 = arith.truncf %105 : vector<16x128xf32> to vector<16x128xbf16>
    %108 = arith.addf %102, %105 : vector<16x128xf32>
    %109 = arith.truncf %108 : vector<16x128xf32> to vector<16x128xbf16>
    %cst_53 = arith.constant dense<0.000000e+00> : vector<16x128xf32>
    %110 = tpu.matmul %0, %106, %cst_53 {dimension_numbers = #tpu.dot_dimension_numbers<[1], [0], [0], [1], [0, 0, 1, 1], [], []>} : vector<16x16xbf16>, vector<16x128xbf16>, vector<16x128xf32> -> vector<16x128xf32>
    %cst_54 = arith.constant dense<0.000000e+00> : vector<16x128xf32>
    %111 = tpu.matmul %6, %107, %cst_54 {dimension_numbers = #tpu.dot_dimension_numbers<[1], [0], [0], [1], [0, 0, 1, 1], [], []>} : vector<16x16xbf16>, vector<16x128xbf16>, vector<16x128xf32> -> vector<16x128xf32>
    %cst_55 = arith.constant dense<0.000000e+00> : vector<16x128xf32>
    %112 = tpu.matmul %7, %109, %cst_55 {dimension_numbers = #tpu.dot_dimension_numbers<[1], [0], [0], [1], [0, 0, 1, 1], [], []>} : vector<16x16xbf16>, vector<16x128xbf16>, vector<16x128xf32> -> vector<16x128xf32>
    %113 = arith.subf %110, %111 : vector<16x128xf32>
    %114 = arith.subf %112, %110 : vector<16x128xf32>
    %115 = arith.subf %114, %111 : vector<16x128xf32>
    %116 = arith.truncf %113 : vector<16x128xf32> to vector<16x128xbf16>
    %117 = arith.truncf %115 : vector<16x128xf32> to vector<16x128xbf16>
    %118 = arith.addf %113, %115 : vector<16x128xf32>
    %119 = arith.truncf %118 : vector<16x128xf32> to vector<16x128xbf16>
    %cst_56 = arith.constant dense<0.000000e+00> : vector<16x128xf32>
    %120 = tpu.matmul %116, %8, %cst_56 {dimension_numbers = #tpu.dot_dimension_numbers<[1], [0], [0], [1], [0, 0, 1, 1], [], []>} : vector<16x128xbf16>, vector<128x128xbf16>, vector<16x128xf32> -> vector<16x128xf32>
    %cst_57 = arith.constant dense<0.000000e+00> : vector<16x128xf32>
    %121 = tpu.matmul %117, %9, %cst_57 {dimension_numbers = #tpu.dot_dimension_numbers<[1], [0], [0], [1], [0, 0, 1, 1], [], []>} : vector<16x128xbf16>, vector<128x128xbf16>, vector<16x128xf32> -> vector<16x128xf32>
    %cst_58 = arith.constant dense<0.000000e+00> : vector<16x128xf32>
    %122 = tpu.matmul %119, %10, %cst_58 {dimension_numbers = #tpu.dot_dimension_numbers<[1], [0], [0], [1], [0, 0, 1, 1], [], []>} : vector<16x128xbf16>, vector<128x128xbf16>, vector<16x128xf32> -> vector<16x128xf32>
    %123 = arith.subf %120, %121 : vector<16x128xf32>
    %124 = arith.subf %122, %120 : vector<16x128xf32>
    %125 = arith.subf %124, %121 : vector<16x128xf32>
    %126 = arith.mulf %123, %123 : vector<16x128xf32>
    %127 = arith.mulf %125, %125 : vector<16x128xf32>
    %128 = arith.addf %126, %127 : vector<16x128xf32>
    %cst_59 = arith.constant 5.000000e-01 : f32
    %129 = vector.broadcast %cst_59 : f32 to vector<16x128xf32>
    %130 = arith.mulf %129, %69 : vector<16x128xf32>
    %cst_60 = arith.constant 5.000000e-01 : f32
    %131 = vector.broadcast %cst_60 : f32 to vector<16x128xf32>
    %132 = arith.mulf %131, %128 : vector<16x128xf32>
    %133 = arith.addf %130, %132 : vector<16x128xf32>
    %134 = vector.shape_cast %133 : vector<16x128xf32> to vector<1x16x128xf32>
    %cst_61 = arith.constant dense<0.000000e+00> : vector<1xf32>
    %135 = vector.multi_reduction <add>, %134, %cst_61 [1, 2] : vector<1x16x128xf32> to vector<1xf32>
    %136 = vector.shape_cast %135 : vector<1xf32> to vector<1x1x1xf32>
    %137 = vector.extract %136[0, 0, 0] : f32 from vector<1x1x1xf32>
    %cst_62 = arith.constant 4.8828125E-4 : f32
    %138 = arith.mulf %137, %cst_62 : f32
    %139 = arith.mulf %133, %133 : vector<16x128xf32>
    %140 = vector.shape_cast %139 : vector<16x128xf32> to vector<1x16x128xf32>
    %cst_63 = arith.constant dense<0.000000e+00> : vector<1xf32>
    %141 = vector.multi_reduction <add>, %140, %cst_63 [1, 2] : vector<1x16x128xf32> to vector<1xf32>
    %142 = vector.shape_cast %141 : vector<1xf32> to vector<1x1x1xf32>
    %143 = vector.extract %142[0, 0, 0] : f32 from vector<1x1x1xf32>
    %cst_64 = arith.constant 4.8828125E-4 : f32
    %144 = arith.mulf %143, %cst_64 : f32
    %145 = arith.mulf %138, %138 : f32
    %146 = arith.subf %144, %145 : f32
    %cst_65 = arith.constant 0.000000e+00 : f32
    %147 = arith.maximumf %146, %cst_65 : f32
    %148 = vector.broadcast %138 : f32 to vector<16x128xf32>
    %149 = arith.subf %133, %148 : vector<16x128xf32>
    %cst_66 = arith.constant 9.99999974E-6 : f32
    %150 = arith.addf %147, %cst_66 : f32
    %151 = math.rsqrt %150 : f32
    %152 = vector.broadcast %151 : f32 to vector<16x128xf32>
    %153 = arith.mulf %149, %152 : vector<16x128xf32>
    %154 = arith.truncf %153 : vector<16x128xf32> to vector<16x128xbf16>
    %cst_67 = arith.constant dense<0.000000e+00> : vector<16x128xf32>
    %155 = tpu.matmul %0, %154, %cst_67 {dimension_numbers = #tpu.dot_dimension_numbers<[1], [0], [0], [1], [0, 0, 1, 1], [], []>} : vector<16x16xbf16>, vector<16x128xbf16>, vector<16x128xf32> -> vector<16x128xf32>
    %cst_68 = arith.constant dense<0.000000e+00> : vector<16x128xf32>
    %156 = tpu.matmul %1, %154, %cst_68 {dimension_numbers = #tpu.dot_dimension_numbers<[1], [0], [0], [1], [0, 0, 1, 1], [], []>} : vector<16x16xbf16>, vector<16x128xbf16>, vector<16x128xf32> -> vector<16x128xf32>
    %157 = arith.truncf %155 : vector<16x128xf32> to vector<16x128xbf16>
    %158 = arith.truncf %156 : vector<16x128xf32> to vector<16x128xbf16>
    %159 = arith.addf %155, %156 : vector<16x128xf32>
    %160 = arith.truncf %159 : vector<16x128xf32> to vector<16x128xbf16>
    %cst_69 = arith.constant dense<0.000000e+00> : vector<16x128xf32>
    %161 = tpu.matmul %157, %3, %cst_69 {dimension_numbers = #tpu.dot_dimension_numbers<[1], [0], [0], [1], [0, 0, 1, 1], [], []>} : vector<16x128xbf16>, vector<128x128xbf16>, vector<16x128xf32> -> vector<16x128xf32>
    %cst_70 = arith.constant dense<0.000000e+00> : vector<16x128xf32>
    %162 = tpu.matmul %158, %4, %cst_70 {dimension_numbers = #tpu.dot_dimension_numbers<[1], [0], [0], [1], [0, 0, 1, 1], [], []>} : vector<16x128xbf16>, vector<128x128xbf16>, vector<16x128xf32> -> vector<16x128xf32>
    %cst_71 = arith.constant dense<0.000000e+00> : vector<16x128xf32>
    %163 = tpu.matmul %160, %5, %cst_71 {dimension_numbers = #tpu.dot_dimension_numbers<[1], [0], [0], [1], [0, 0, 1, 1], [], []>} : vector<16x128xbf16>, vector<128x128xbf16>, vector<16x128xf32> -> vector<16x128xf32>
    %164 = arith.subf %161, %162 : vector<16x128xf32>
    %165 = arith.subf %163, %161 : vector<16x128xf32>
    %166 = arith.subf %165, %162 : vector<16x128xf32>
    %167 = tpu.concatenate %164, %164 in 1 : vector<16x128xf32>, vector<16x128xf32> -> vector<16x256xf32>
    %168 = tpu.concatenate %166, %166 in 1 : vector<16x128xf32>, vector<16x128xf32> -> vector<16x256xf32>
    %169 = arith.mulf %167, %13 : vector<16x256xf32>
    %170 = arith.mulf %168, %14 : vector<16x256xf32>
    %171 = arith.subf %169, %170 : vector<16x256xf32>
    %172 = arith.mulf %167, %14 : vector<16x256xf32>
    %173 = arith.mulf %168, %13 : vector<16x256xf32>
    %174 = arith.addf %172, %173 : vector<16x256xf32>
    %175 = arith.truncf %171 : vector<16x256xf32> to vector<16x256xbf16>
    %176 = arith.truncf %174 : vector<16x256xf32> to vector<16x256xbf16>
    %177 = arith.addf %171, %174 : vector<16x256xf32>
    %178 = arith.truncf %177 : vector<16x256xf32> to vector<16x256xbf16>
    %cst_72 = arith.constant dense<0.000000e+00> : vector<16x256xf32>
    %179 = tpu.matmul %0, %175, %cst_72 {dimension_numbers = #tpu.dot_dimension_numbers<[1], [0], [0], [1], [0, 0, 1, 1], [], []>} : vector<16x16xbf16>, vector<16x256xbf16>, vector<16x256xf32> -> vector<16x256xf32>
    %cst_73 = arith.constant dense<0.000000e+00> : vector<16x256xf32>
    %180 = tpu.matmul %6, %176, %cst_73 {dimension_numbers = #tpu.dot_dimension_numbers<[1], [0], [0], [1], [0, 0, 1, 1], [], []>} : vector<16x16xbf16>, vector<16x256xbf16>, vector<16x256xf32> -> vector<16x256xf32>
    %cst_74 = arith.constant dense<0.000000e+00> : vector<16x256xf32>
    %181 = tpu.matmul %7, %178, %cst_74 {dimension_numbers = #tpu.dot_dimension_numbers<[1], [0], [0], [1], [0, 0, 1, 1], [], []>} : vector<16x16xbf16>, vector<16x256xbf16>, vector<16x256xf32> -> vector<16x256xf32>
    %182 = arith.subf %179, %180 : vector<16x256xf32>
    %183 = arith.subf %181, %179 : vector<16x256xf32>
    %184 = arith.subf %183, %180 : vector<16x256xf32>
    %185 = vector.extract_strided_slice %182 {offsets = [0, 0], sizes = [16, 128], strides = [1, 1]} : vector<16x256xf32> to vector<16x128xf32>
    %186 = vector.extract_strided_slice %182 {offsets = [0, 128], sizes = [16, 128], strides = [1, 1]} : vector<16x256xf32> to vector<16x128xf32>
    %187 = tpu.concatenate %185, %186 in 0 : vector<16x128xf32>, vector<16x128xf32> -> vector<32x128xf32>
    %188 = vector.extract_strided_slice %184 {offsets = [0, 0], sizes = [16, 128], strides = [1, 1]} : vector<16x256xf32> to vector<16x128xf32>
    %189 = vector.extract_strided_slice %184 {offsets = [0, 128], sizes = [16, 128], strides = [1, 1]} : vector<16x256xf32> to vector<16x128xf32>
    %190 = tpu.concatenate %188, %189 in 0 : vector<16x128xf32>, vector<16x128xf32> -> vector<32x128xf32>
    %191 = arith.truncf %187 : vector<32x128xf32> to vector<32x128xbf16>
    %192 = arith.truncf %190 : vector<32x128xf32> to vector<32x128xbf16>
    %193 = arith.addf %187, %190 : vector<32x128xf32>
    %194 = arith.truncf %193 : vector<32x128xf32> to vector<32x128xbf16>
    %cst_75 = arith.constant dense<0.000000e+00> : vector<32x128xf32>
    %195 = tpu.matmul %191, %8, %cst_75 {dimension_numbers = #tpu.dot_dimension_numbers<[1], [0], [0], [1], [0, 0, 1, 1], [], []>} : vector<32x128xbf16>, vector<128x128xbf16>, vector<32x128xf32> -> vector<32x128xf32>
    %cst_76 = arith.constant dense<0.000000e+00> : vector<32x128xf32>
    %196 = tpu.matmul %192, %9, %cst_76 {dimension_numbers = #tpu.dot_dimension_numbers<[1], [0], [0], [1], [0, 0, 1, 1], [], []>} : vector<32x128xbf16>, vector<128x128xbf16>, vector<32x128xf32> -> vector<32x128xf32>
    %cst_77 = arith.constant dense<0.000000e+00> : vector<32x128xf32>
    %197 = tpu.matmul %194, %10, %cst_77 {dimension_numbers = #tpu.dot_dimension_numbers<[1], [0], [0], [1], [0, 0, 1, 1], [], []>} : vector<32x128xbf16>, vector<128x128xbf16>, vector<32x128xf32> -> vector<32x128xf32>
    %198 = arith.subf %195, %196 : vector<32x128xf32>
    %199 = arith.subf %197, %195 : vector<32x128xf32>
    %200 = arith.subf %199, %196 : vector<32x128xf32>
    %201 = vector.extract_strided_slice %198 {offsets = [0, 0], sizes = [16, 128], strides = [1, 1]} : vector<32x128xf32> to vector<16x128xf32>
    %202 = vector.extract_strided_slice %200 {offsets = [0, 0], sizes = [16, 128], strides = [1, 1]} : vector<32x128xf32> to vector<16x128xf32>
    %203 = vector.extract_strided_slice %198 {offsets = [16, 0], sizes = [16, 128], strides = [1, 1]} : vector<32x128xf32> to vector<16x128xf32>
    %204 = vector.extract_strided_slice %200 {offsets = [16, 0], sizes = [16, 128], strides = [1, 1]} : vector<32x128xf32> to vector<16x128xf32>
    %205 = arith.mulf %203, %203 : vector<16x128xf32>
    %206 = arith.mulf %204, %204 : vector<16x128xf32>
    %207 = arith.addf %205, %206 : vector<16x128xf32>
    %c1 = arith.constant 1 : index
    %c0_78 = arith.constant 0 : index
    %c0_79 = arith.constant 0 : index
    %208 = vector.load %arg1[%c1, %c0_78, %c0_79] : memref<2x16x128xf32, #tpu.memory_space<vmem>>, vector<1x16x128xf32>
    %209 = vector.shape_cast %208 : vector<1x16x128xf32> to vector<16x128xf32>
    %c1_80 = arith.constant 1 : index
    %c0_81 = arith.constant 0 : index
    %c0_82 = arith.constant 0 : index
    %210 = vector.load %arg2[%c1_80, %c0_81, %c0_82] : memref<2x16x128xf32, #tpu.memory_space<vmem>>, vector<1x16x128xf32>
    %211 = vector.shape_cast %210 : vector<1x16x128xf32> to vector<16x128xf32>
    %212 = arith.mulf %201, %209 : vector<16x128xf32>
    %213 = arith.mulf %202, %211 : vector<16x128xf32>
    %214 = arith.subf %212, %213 : vector<16x128xf32>
    %215 = arith.mulf %201, %211 : vector<16x128xf32>
    %216 = arith.mulf %202, %209 : vector<16x128xf32>
    %217 = arith.addf %215, %216 : vector<16x128xf32>
    %218 = arith.truncf %214 : vector<16x128xf32> to vector<16x128xbf16>
    %219 = arith.truncf %217 : vector<16x128xf32> to vector<16x128xbf16>
    %220 = arith.addf %214, %217 : vector<16x128xf32>
    %221 = arith.truncf %220 : vector<16x128xf32> to vector<16x128xbf16>
    %cst_83 = arith.constant dense<0.000000e+00> : vector<16x128xf32>
    %222 = tpu.matmul %0, %218, %cst_83 {dimension_numbers = #tpu.dot_dimension_numbers<[1], [0], [0], [1], [0, 0, 1, 1], [], []>} : vector<16x16xbf16>, vector<16x128xbf16>, vector<16x128xf32> -> vector<16x128xf32>
    %cst_84 = arith.constant dense<0.000000e+00> : vector<16x128xf32>
    %223 = tpu.matmul %1, %219, %cst_84 {dimension_numbers = #tpu.dot_dimension_numbers<[1], [0], [0], [1], [0, 0, 1, 1], [], []>} : vector<16x16xbf16>, vector<16x128xbf16>, vector<16x128xf32> -> vector<16x128xf32>
    %cst_85 = arith.constant dense<0.000000e+00> : vector<16x128xf32>
    %224 = tpu.matmul %2, %221, %cst_85 {dimension_numbers = #tpu.dot_dimension_numbers<[1], [0], [0], [1], [0, 0, 1, 1], [], []>} : vector<16x16xbf16>, vector<16x128xbf16>, vector<16x128xf32> -> vector<16x128xf32>
    %225 = arith.subf %222, %223 : vector<16x128xf32>
    %226 = arith.subf %224, %222 : vector<16x128xf32>
    %227 = arith.subf %226, %223 : vector<16x128xf32>
    %228 = arith.truncf %225 : vector<16x128xf32> to vector<16x128xbf16>
    %229 = arith.truncf %227 : vector<16x128xf32> to vector<16x128xbf16>
    %230 = arith.addf %225, %227 : vector<16x128xf32>
    %231 = arith.truncf %230 : vector<16x128xf32> to vector<16x128xbf16>
    %cst_86 = arith.constant dense<0.000000e+00> : vector<16x128xf32>
    %232 = tpu.matmul %228, %3, %cst_86 {dimension_numbers = #tpu.dot_dimension_numbers<[1], [0], [0], [1], [0, 0, 1, 1], [], []>} : vector<16x128xbf16>, vector<128x128xbf16>, vector<16x128xf32> -> vector<16x128xf32>
    %cst_87 = arith.constant dense<0.000000e+00> : vector<16x128xf32>
    %233 = tpu.matmul %229, %4, %cst_87 {dimension_numbers = #tpu.dot_dimension_numbers<[1], [0], [0], [1], [0, 0, 1, 1], [], []>} : vector<16x128xbf16>, vector<128x128xbf16>, vector<16x128xf32> -> vector<16x128xf32>
    %cst_88 = arith.constant dense<0.000000e+00> : vector<16x128xf32>
    %234 = tpu.matmul %231, %5, %cst_88 {dimension_numbers = #tpu.dot_dimension_numbers<[1], [0], [0], [1], [0, 0, 1, 1], [], []>} : vector<16x128xbf16>, vector<128x128xbf16>, vector<16x128xf32> -> vector<16x128xf32>
    %235 = arith.subf %232, %233 : vector<16x128xf32>
    %236 = arith.subf %234, %232 : vector<16x128xf32>
    %237 = arith.subf %236, %233 : vector<16x128xf32>
    %238 = arith.mulf %235, %11 : vector<16x128xf32>
    %239 = arith.mulf %237, %12 : vector<16x128xf32>
    %240 = arith.subf %238, %239 : vector<16x128xf32>
    %241 = arith.mulf %235, %12 : vector<16x128xf32>
    %242 = arith.mulf %237, %11 : vector<16x128xf32>
    %243 = arith.addf %241, %242 : vector<16x128xf32>
    %244 = arith.truncf %240 : vector<16x128xf32> to vector<16x128xbf16>
    %245 = arith.truncf %243 : vector<16x128xf32> to vector<16x128xbf16>
    %246 = arith.addf %240, %243 : vector<16x128xf32>
    %247 = arith.truncf %246 : vector<16x128xf32> to vector<16x128xbf16>
    %cst_89 = arith.constant dense<0.000000e+00> : vector<16x128xf32>
    %248 = tpu.matmul %0, %244, %cst_89 {dimension_numbers = #tpu.dot_dimension_numbers<[1], [0], [0], [1], [0, 0, 1, 1], [], []>} : vector<16x16xbf16>, vector<16x128xbf16>, vector<16x128xf32> -> vector<16x128xf32>
    %cst_90 = arith.constant dense<0.000000e+00> : vector<16x128xf32>
    %249 = tpu.matmul %6, %245, %cst_90 {dimension_numbers = #tpu.dot_dimension_numbers<[1], [0], [0], [1], [0, 0, 1, 1], [], []>} : vector<16x16xbf16>, vector<16x128xbf16>, vector<16x128xf32> -> vector<16x128xf32>
    %cst_91 = arith.constant dense<0.000000e+00> : vector<16x128xf32>
    %250 = tpu.matmul %7, %247, %cst_91 {dimension_numbers = #tpu.dot_dimension_numbers<[1], [0], [0], [1], [0, 0, 1, 1], [], []>} : vector<16x16xbf16>, vector<16x128xbf16>, vector<16x128xf32> -> vector<16x128xf32>
    %251 = arith.subf %248, %249 : vector<16x128xf32>
    %252 = arith.subf %250, %248 : vector<16x128xf32>
    %253 = arith.subf %252, %249 : vector<16x128xf32>
    %254 = arith.truncf %251 : vector<16x128xf32> to vector<16x128xbf16>
    %255 = arith.truncf %253 : vector<16x128xf32> to vector<16x128xbf16>
    %256 = arith.addf %251, %253 : vector<16x128xf32>
    %257 = arith.truncf %256 : vector<16x128xf32> to vector<16x128xbf16>
    %cst_92 = arith.constant dense<0.000000e+00> : vector<16x128xf32>
    %258 = tpu.matmul %254, %8, %cst_92 {dimension_numbers = #tpu.dot_dimension_numbers<[1], [0], [0], [1], [0, 0, 1, 1], [], []>} : vector<16x128xbf16>, vector<128x128xbf16>, vector<16x128xf32> -> vector<16x128xf32>
    %cst_93 = arith.constant dense<0.000000e+00> : vector<16x128xf32>
    %259 = tpu.matmul %255, %9, %cst_93 {dimension_numbers = #tpu.dot_dimension_numbers<[1], [0], [0], [1], [0, 0, 1, 1], [], []>} : vector<16x128xbf16>, vector<128x128xbf16>, vector<16x128xf32> -> vector<16x128xf32>
    %cst_94 = arith.constant dense<0.000000e+00> : vector<16x128xf32>
    %260 = tpu.matmul %257, %10, %cst_94 {dimension_numbers = #tpu.dot_dimension_numbers<[1], [0], [0], [1], [0, 0, 1, 1], [], []>} : vector<16x128xbf16>, vector<128x128xbf16>, vector<16x128xf32> -> vector<16x128xf32>
    %261 = arith.subf %258, %259 : vector<16x128xf32>
    %262 = arith.subf %260, %258 : vector<16x128xf32>
    %263 = arith.subf %262, %259 : vector<16x128xf32>
    %264 = arith.mulf %261, %261 : vector<16x128xf32>
    %265 = arith.mulf %263, %263 : vector<16x128xf32>
    %266 = arith.addf %264, %265 : vector<16x128xf32>
    %cst_95 = arith.constant 5.000000e-01 : f32
    %267 = vector.broadcast %cst_95 : f32 to vector<16x128xf32>
    %268 = arith.mulf %267, %207 : vector<16x128xf32>
    %cst_96 = arith.constant 5.000000e-01 : f32
    %269 = vector.broadcast %cst_96 : f32 to vector<16x128xf32>
    %270 = arith.mulf %269, %266 : vector<16x128xf32>
    %271 = arith.addf %268, %270 : vector<16x128xf32>
    %272 = vector.shape_cast %271 : vector<16x128xf32> to vector<1x16x128xf32>
    %cst_97 = arith.constant dense<0.000000e+00> : vector<1xf32>
    %273 = vector.multi_reduction <add>, %272, %cst_97 [1, 2] : vector<1x16x128xf32> to vector<1xf32>
    %274 = vector.shape_cast %273 : vector<1xf32> to vector<1x1x1xf32>
    %275 = vector.extract %274[0, 0, 0] : f32 from vector<1x1x1xf32>
    %cst_98 = arith.constant 4.8828125E-4 : f32
    %276 = arith.mulf %275, %cst_98 : f32
    %277 = arith.mulf %271, %271 : vector<16x128xf32>
    %278 = vector.shape_cast %277 : vector<16x128xf32> to vector<1x16x128xf32>
    %cst_99 = arith.constant dense<0.000000e+00> : vector<1xf32>
    %279 = vector.multi_reduction <add>, %278, %cst_99 [1, 2] : vector<1x16x128xf32> to vector<1xf32>
    %280 = vector.shape_cast %279 : vector<1xf32> to vector<1x1x1xf32>
    %281 = vector.extract %280[0, 0, 0] : f32 from vector<1x1x1xf32>
    %cst_100 = arith.constant 4.8828125E-4 : f32
    %282 = arith.mulf %281, %cst_100 : f32
    %283 = arith.mulf %276, %276 : f32
    %284 = arith.subf %282, %283 : f32
    %cst_101 = arith.constant 0.000000e+00 : f32
    %285 = arith.maximumf %284, %cst_101 : f32
    %286 = vector.broadcast %276 : f32 to vector<16x128xf32>
    %287 = arith.subf %271, %286 : vector<16x128xf32>
    %cst_102 = arith.constant 9.99999974E-6 : f32
    %288 = arith.addf %285, %cst_102 : f32
    %289 = math.rsqrt %288 : f32
    %290 = vector.broadcast %289 : f32 to vector<16x128xf32>
    %291 = arith.mulf %287, %290 : vector<16x128xf32>
    %c0_103 = arith.constant 0 : index
    %c0_104 = arith.constant 0 : index
    %292 = vector.load %arg18[%c0_103, %c0_104] : memref<16x128xf32, #tpu.memory_space<vmem>>, vector<16x128xf32>
    tpu.vector_store %arg18[%c0_103, %c0_104], %291 {strides = array<i32>} : memref<16x128xf32, #tpu.memory_space<vmem>>, vector<16x128xf32>,
    return
  }
}

</mosaic_0001>

<llo_original>
// kernel: tpu_custom_call.1
$region0: #{tpu_custom_call.1}
  #allocation0 [shape = 'u32[]', space=smem, size = 0x4, offset = 0x4, fixed_abs, tag = 'smem constant byte address 0x4 - core index']
  #allocation1 [shape = 'u32[144,128]{1,0:T(1,128)}', space=vmem, size = 0x12000, scoped, tag = 'internal scratch']
  %s0 = inlined_call_operand.hbm [shape: f32[16,128], index: 0, kind: input, shape index: {}]
  %s1 = inlined_call_operand.hbm [shape: f32[2,16,128], index: 1, kind: input, shape index: {}]
  %s2 = inlined_call_operand.hbm [shape: f32[2,16,128], index: 2, kind: input, shape index: {}]
  %s3 = inlined_call_operand.hbm [shape: f32[16,128], index: 3, kind: input, shape index: {}]
  %s4 = inlined_call_operand.hbm [shape: f32[16,128], index: 4, kind: input, shape index: {}]
  %s5 = inlined_call_operand.hbm [shape: f32[16,256], index: 5, kind: input, shape index: {}]
  %s6 = inlined_call_operand.hbm [shape: f32[16,256], index: 6, kind: input, shape index: {}]
  %s7 = inlined_call_operand.hbm [shape: bf16[16,16], index: 7, kind: input, shape index: {}]
  %s8 = inlined_call_operand.hbm [shape: bf16[16,16], index: 8, kind: input, shape index: {}]
  %s9 = inlined_call_operand.hbm [shape: bf16[16,16], index: 9, kind: input, shape index: {}]
  %s10 = inlined_call_operand.hbm [shape: bf16[128,128], index: 10, kind: input, shape index: {}]
  %s11 = inlined_call_operand.hbm [shape: bf16[128,128], index: 11, kind: input, shape index: {}]
  %s12 = inlined_call_operand.hbm [shape: bf16[128,128], index: 12, kind: input, shape index: {}]
  %s13 = inlined_call_operand.hbm [shape: bf16[16,16], index: 13, kind: input, shape index: {}]
  %s14 = inlined_call_operand.hbm [shape: bf16[16,16], index: 14, kind: input, shape index: {}]
  %s15 = inlined_call_operand.hbm [shape: bf16[128,128], index: 15, kind: input, shape index: {}]
  %s16 = inlined_call_operand.hbm [shape: bf16[128,128], index: 16, kind: input, shape index: {}]
  %s17 = inlined_call_operand.vmem [shape: bf16[128,128], index: 17, kind: input, shape index: {}]
  %s18 = inlined_call_operand.hbm [shape: f32[16,128], index: 18, kind: output, shape index: {}]
  %s19 = sld [smem:[#allocation0]]
  $region150: #{tpu_custom_call.1} parent=0
    _
  %s21 = ssub.s32 1, %s19
  %s22 = scalar_select 0, %s21, %s19
  $region1: #{tpu_custom_call.1} parent=0
    #allocation2 [shape = 'u8[8192]{0}', space=vmem, size = 0x2000, scoped, tag = 'input window, operand 0, single buffered']
    #allocation3 [shape = 's32[1]{0}', space=sflag, size = 0x4, scoped, tag = 'scoped memory for tpu_custom_call.1']
    #allocation4 [shape = 's32[1]{0}', space=sflag, size = 0x4, scoped, tag = 'scoped memory for tpu_custom_call.1']
    #allocation5 [shape = 'u8[16384]{0}', space=vmem, size = 0x4000, scoped, tag = 'input window, operand 1, single buffered']
    #allocation6 [shape = 's32[1]{0}', space=sflag, size = 0x4, scoped, tag = 'scoped memory for tpu_custom_call.1']
    #allocation7 [shape = 'u8[16384]{0}', space=vmem, size = 0x4000, scoped, tag = 'input window, operand 2, single buffered']
    #allocation8 [shape = 'u8[8192]{0}', space=vmem, size = 0x2000, scoped, tag = 'input window, operand 3, single buffered']
    #allocation9 [shape = 's32[1]{0}', space=sflag, size = 0x4, scoped, tag = 'scoped memory for tpu_custom_call.1']
    #allocation10 [shape = 'u8[8192]{0}', space=vmem, size = 0x2000, scoped, tag = 'input window, operand 4, single buffered']
    #allocation11 [shape = 'u8[16384]{0}', space=vmem, size = 0x4000, scoped, tag = 'input window, operand 5, single buffered']
    #allocation12 [shape = 's32[1]{0}', space=sflag, size = 0x4, scoped, tag = 'scoped memory for tpu_custom_call.1']
    #allocation13 [shape = 'u8[16384]{0}', space=vmem, size = 0x4000, scoped, tag = 'input window, operand 6, single buffered']
    #allocation14 [shape = 'u8[4096]{0}', space=vmem, size = 0x1000, scoped, tag = 'input window, operand 7, single buffered']
    #allocation15 [shape = 's32[1]{0}', space=sflag, size = 0x4, scoped, tag = 'scoped memory for tpu_custom_call.1']
    #allocation16 [shape = 'u8[4096]{0}', space=vmem, size = 0x1000, scoped, tag = 'input window, operand 8, single buffered']
    #allocation17 [shape = 'u8[4096]{0}', space=vmem, size = 0x1000, scoped, tag = 'input window, operand 9, single buffered']
    #allocation18 [shape = 's32[1]{0}', space=sflag, size = 0x4, scoped, tag = 'scoped memory for tpu_custom_call.1']
    #allocation19 [shape = 'u8[32768]{0}', space=vmem, size = 0x8000, scoped, tag = 'input window, operand 10, single buffered']
    #allocation20 [shape = 'u8[32768]{0}', space=vmem, size = 0x8000, scoped, tag = 'input window, operand 11, single buffered']
    #allocation21 [shape = 's32[1]{0}', space=sflag, size = 0x4, scoped, tag = 'scoped memory for tpu_custom_call.1']
    #allocation22 [shape = 'u8[32768]{0}', space=vmem, size = 0x8000, scoped, tag = 'input window, operand 12, single buffered']
    #allocation23 [shape = 'u8[4096]{0}', space=vmem, size = 0x1000, scoped, tag = 'input window, operand 13, single buffered']
    #allocation24 [shape = 's32[1]{0}', space=sflag, size = 0x4, scoped, tag = 'scoped memory for tpu_custom_call.1']
    #allocation25 [shape = 'u8[4096]{0}', space=vmem, size = 0x1000, scoped, tag = 'input window, operand 14, single buffered']
    #allocation26 [shape = 'u8[32768]{0}', space=vmem, size = 0x8000, scoped, tag = 'input window, operand 15, single buffered']
    #allocation27 [shape = 's32[1]{0}', space=sflag, size = 0x4, scoped, tag = 'scoped memory for tpu_custom_call.1']
    #allocation28 [shape = 'u8[32768]{0}', space=vmem, size = 0x8000, scoped, tag = 'input window, operand 16, single buffered']
    #allocation29 [shape = 'u8[8192]{0}', space=vmem, size = 0x2000, scoped, tag = 'output window, operand 0, single buffered']
    %23 = vsyncpa [#allocation3], 0
    %24 = vsyncpa [#allocation6], 0
    %25 = vsyncpa [#allocation9], 0
    %26 = vsyncpa [#allocation12], 0
    %27 = vsyncpa [#allocation15], 0
    %28 = vsyncpa [#allocation18], 0
    %29 = vsyncpa [#allocation21], 0
    %30 = vsyncpa [#allocation24], 0
    %31 = vsyncpa [#allocation27], 0
    %32 = vsyncpa [#allocation4], 0
    // Predicated region
    $region2: #{tpu_custom_call.1} parent=1 // pred_check
      _
    $region3: #{tpu_custom_call.1} parent=1 // pred_check_branch
      %34 = sbr.rel (0) target = $region5
    $region4: #{tpu_custom_call.1} parent=1 // pred_region
      %s36 = ssub.s32 256, 256
      %37 = vsyncadd [#allocation3], %s36
      %s38 = sshll.u32 [#allocation2], 4
      %s39 = int_to_ptr.vmem [resolvable:$true] %s38
      %44 = dma.hbm_to_vmem [thread:$0]  %s0, 256, %s39, [#allocation3], 128, 128, 8
    $region5: #{tpu_custom_call.1} parent=1 // pred_fallthru
      _
    // Predicated region
    $region6: #{tpu_custom_call.1} parent=1 // pred_check
      _
    $region7: #{tpu_custom_call.1} parent=1 // pred_check_branch
      %46 = sbr.rel (0) target = $region9
    $region8: #{tpu_custom_call.1} parent=1 // pred_region
      %s48 = ssub.s32 512, 512
      %49 = vsyncadd [#allocation6], %s48
      %s50 = sshll.u32 [#allocation5], 4
      %s51 = int_to_ptr.vmem [resolvable:$true] %s50
      %56 = dma.hbm_to_vmem [thread:$0]  %s1, 512, %s51, [#allocation6], 128, 128, 8
    $region9: #{tpu_custom_call.1} parent=1 // pred_fallthru
      _
    // Predicated region
    $region10: #{tpu_custom_call.1} parent=1 // pred_check
      _
    $region11: #{tpu_custom_call.1} parent=1 // pred_check_branch
      %58 = sbr.rel (0) target = $region13
    $region12: #{tpu_custom_call.1} parent=1 // pred_region
      %s60 = ssub.s32 512, 512
      %61 = vsyncadd [#allocation6], %s60
      %s62 = sshll.u32 [#allocation7], 4
      %s63 = int_to_ptr.vmem [resolvable:$true] %s62
      %68 = dma.hbm_to_vmem [thread:$0]  %s2, 512, %s63, [#allocation6], 128, 128, 8
    $region13: #{tpu_custom_call.1} parent=1 // pred_fallthru
      _
    // Predicated region
    $region14: #{tpu_custom_call.1} parent=1 // pred_check
      _
    $region15: #{tpu_custom_call.1} parent=1 // pred_check_branch
      %70 = sbr.rel (0) target = $region17
    $region16: #{tpu_custom_call.1} parent=1 // pred_region
      %s72 = ssub.s32 256, 256
      %73 = vsyncadd [#allocation9], %s72
      %s74 = sshll.u32 [#allocation8], 4
      %s75 = int_to_ptr.vmem [resolvable:$true] %s74
      %80 = dma.hbm_to_vmem [thread:$0]  %s3, 256, %s75, [#allocation9], 128, 128, 8
    $region17: #{tpu_custom_call.1} parent=1 // pred_fallthru
      _
    // Predicated region
    $region18: #{tpu_custom_call.1} parent=1 // pred_check
      _
    $region19: #{tpu_custom_call.1} parent=1 // pred_check_branch
      %82 = sbr.rel (0) target = $region21
    $region20: #{tpu_custom_call.1} parent=1 // pred_region
      %s84 = ssub.s32 256, 256
      %85 = vsyncadd [#allocation9], %s84
      %s86 = sshll.u32 [#allocation10], 4
      %s87 = int_to_ptr.vmem [resolvable:$true] %s86
      %92 = dma.hbm_to_vmem [thread:$0]  %s4, 256, %s87, [#allocation9], 128, 128, 8
    $region21: #{tpu_custom_call.1} parent=1 // pred_fallthru
      _
    // Predicated region
    $region22: #{tpu_custom_call.1} parent=1 // pred_check
      _
    $region23: #{tpu_custom_call.1} parent=1 // pred_check_branch
      %94 = sbr.rel (0) target = $region25
    $region24: #{tpu_custom_call.1} parent=1 // pred_region
      %s96 = ssub.s32 512, 512
      %97 = vsyncadd [#allocation12], %s96
      %s98 = sshll.u32 [#allocation11], 4
      %s99 = int_to_ptr.vmem [resolvable:$true] %s98
      %104 = dma.hbm_to_vmem [thread:$0]  %s5, 512, %s99, [#allocation12], 256, 256, 16
    $region25: #{tpu_custom_call.1} parent=1 // pred_fallthru
      _
    // Predicated region
    $region26: #{tpu_custom_call.1} parent=1 // pred_check
      _
    $region27: #{tpu_custom_call.1} parent=1 // pred_check_branch
      %106 = sbr.rel (0) target = $region29
    $region28: #{tpu_custom_call.1} parent=1 // pred_region
      %s108 = ssub.s32 512, 512
      %109 = vsyncadd [#allocation12], %s108
      %s110 = sshll.u32 [#allocation13], 4
      %s111 = int_to_ptr.vmem [resolvable:$true] %s110
      %116 = dma.hbm_to_vmem [thread:$0]  %s6, 512, %s111, [#allocation12], 256, 256, 16
    $region29: #{tpu_custom_call.1} parent=1 // pred_fallthru
      _
    // Predicated region
    $region30: #{tpu_custom_call.1} parent=1 // pred_check
      _
    $region31: #{tpu_custom_call.1} parent=1 // pred_check_branch
      %118 = sbr.rel (0) target = $region33
    $region32: #{tpu_custom_call.1} parent=1 // pred_region
      %s120 = ssub.s32 128, 128
      %121 = vsyncadd [#allocation15], %s120
      %s122 = sshll.u32 [#allocation14], 4
      %s123 = int_to_ptr.vmem [resolvable:$true] %s122
      %128 = dma.hbm_to_vmem [thread:$0]  %s7, 128, %s123, [#allocation15], 64, 64, 4
    $region33: #{tpu_custom_call.1} parent=1 // pred_fallthru
      _
    // Predicated region
    $region34: #{tpu_custom_call.1} parent=1 // pred_check
      _
    $region35: #{tpu_custom_call.1} parent=1 // pred_check_branch
      %130 = sbr.rel (0) target = $region37
    $region36: #{tpu_custom_call.1} parent=1 // pred_region
      %s132 = ssub.s32 128, 128
      %133 = vsyncadd [#allocation15], %s132
      %s134 = sshll.u32 [#allocation16], 4
      %s135 = int_to_ptr.vmem [resolvable:$true] %s134
      %140 = dma.hbm_to_vmem [thread:$0]  %s8, 128, %s135, [#allocation15], 64, 64, 4
    $region37: #{tpu_custom_call.1} parent=1 // pred_fallthru
      _
    // Predicated region
    $region38: #{tpu_custom_call.1} parent=1 // pred_check
      _
    $region39: #{tpu_custom_call.1} parent=1 // pred_check_branch
      %142 = sbr.rel (0) target = $region41
    $region40: #{tpu_custom_call.1} parent=1 // pred_region
      %s144 = ssub.s32 128, 128
      %145 = vsyncadd [#allocation18], %s144
      %s146 = sshll.u32 [#allocation17], 4
      %s147 = int_to_ptr.vmem [resolvable:$true] %s146
      %152 = dma.hbm_to_vmem [thread:$0]  %s9, 128, %s147, [#allocation18], 64, 64, 4
    $region41: #{tpu_custom_call.1} parent=1 // pred_fallthru
      _
    // Predicated region
    $region42: #{tpu_custom_call.1} parent=1 // pred_check
      _
    $region43: #{tpu_custom_call.1} parent=1 // pred_check_branch
      %154 = sbr.rel (0) target = $region45
    $region44: #{tpu_custom_call.1} parent=1 // pred_region
      %s156 = ssub.s32 1024, 1024
      %157 = vsyncadd [#allocation18], %s156
      %s158 = sshll.u32 [#allocation19], 4
      %s159 = int_to_ptr.vmem [resolvable:$true] %s158
      %164 = dma.hbm_to_vmem [thread:$0]  %s10, 1024, %s159, [#allocation18], 64, 64, 4
    $region45: #{tpu_custom_call.1} parent=1 // pred_fallthru
      _
    // Predicated region
    $region46: #{tpu_custom_call.1} parent=1 // pred_check
      _
    $region47: #{tpu_custom_call.1} parent=1 // pred_check_branch
      %166 = sbr.rel (0) target = $region49
    $region48: #{tpu_custom_call.1} parent=1 // pred_region
      %s168 = ssub.s32 1024, 1024
      %169 = vsyncadd [#allocation21], %s168
      %s170 = sshll.u32 [#allocation20], 4
      %s171 = int_to_ptr.vmem [resolvable:$true] %s170
      %176 = dma.hbm_to_vmem [thread:$0]  %s11, 1024, %s171, [#allocation21], 64, 64, 4
    $region49: #{tpu_custom_call.1} parent=1 // pred_fallthru
      _
    // Predicated region
    $region50: #{tpu_custom_call.1} parent=1 // pred_check
      _
    $region51: #{tpu_custom_call.1} parent=1 // pred_check_branch
      %178 = sbr.rel (0) target = $region53
    $region52: #{tpu_custom_call.1} parent=1 // pred_region
      %s180 = ssub.s32 1024, 1024
      %181 = vsyncadd [#allocation21], %s180
      %s182 = sshll.u32 [#allocation22], 4
      %s183 = int_to_ptr.vmem [resolvable:$true] %s182
      %188 = dma.hbm_to_vmem [thread:$0]  %s12, 1024, %s183, [#allocation21], 64, 64, 4
    $region53: #{tpu_custom_call.1} parent=1 // pred_fallthru
      _
    // Predicated region
    $region54: #{tpu_custom_call.1} parent=1 // pred_check
      _
    $region55: #{tpu_custom_call.1} parent=1 // pred_check_branch
      %190 = sbr.rel (0) target = $region57
    $region56: #{tpu_custom_call.1} parent=1 // pred_region
      %s192 = ssub.s32 128, 128
      %193 = vsyncadd [#allocation24], %s192
      %s194 = sshll.u32 [#allocation23], 4
      %s195 = int_to_ptr.vmem [resolvable:$true] %s194
      %200 = dma.hbm_to_vmem [thread:$0]  %s13, 128, %s195, [#allocation24], 64, 64, 4
    $region57: #{tpu_custom_call.1} parent=1 // pred_fallthru
      _
    // Predicated region
    $region58: #{tpu_custom_call.1} parent=1 // pred_check
      _
    $region59: #{tpu_custom_call.1} parent=1 // pred_check_branch
      %202 = sbr.rel (0) target = $region61
    $region60: #{tpu_custom_call.1} parent=1 // pred_region
      %s204 = ssub.s32 128, 128
      %205 = vsyncadd [#allocation24], %s204
      %s206 = sshll.u32 [#allocation25], 4
      %s207 = int_to_ptr.vmem [resolvable:$true] %s206
      %212 = dma.hbm_to_vmem [thread:$0]  %s14, 128, %s207, [#allocation24], 64, 64, 4
    $region61: #{tpu_custom_call.1} parent=1 // pred_fallthru
      _
    // Predicated region
    $region62: #{tpu_custom_call.1} parent=1 // pred_check
      _
    $region63: #{tpu_custom_call.1} parent=1 // pred_check_branch
      %214 = sbr.rel (0) target = $region65
    $region64: #{tpu_custom_call.1} parent=1 // pred_region
      %s216 = ssub.s32 1024, 1024
      %217 = vsyncadd [#allocation27], %s216
      %s218 = sshll.u32 [#allocation26], 4
      %s219 = int_to_ptr.vmem [resolvable:$true] %s218
      %224 = dma.hbm_to_vmem [thread:$0]  %s15, 1024, %s219, [#allocation27], 64, 64, 4
    $region65: #{tpu_custom_call.1} parent=1 // pred_fallthru
      _
    // Predicated region
    $region66: #{tpu_custom_call.1} parent=1 // pred_check
      _
    $region67: #{tpu_custom_call.1} parent=1 // pred_check_branch
      %226 = sbr.rel (0) target = $region69
    $region68: #{tpu_custom_call.1} parent=1 // pred_region
      %s228 = ssub.s32 1024, 1024
      %229 = vsyncadd [#allocation27], %s228
      %s230 = sshll.u32 [#allocation28], 4
      %s231 = int_to_ptr.vmem [resolvable:$true] %s230
      %236 = dma.hbm_to_vmem [thread:$0]  %s16, 1024, %s231, [#allocation27], 64, 64, 4
    $region69: #{tpu_custom_call.1} parent=1 // pred_fallthru
      _
    // Predicated region
    $region70: #{tpu_custom_call.1} parent=1 // pred_check
      _
    $region71: #{tpu_custom_call.1} parent=1 // pred_check_branch
      %238 = sbr.rel (0) target = $region73
    $region72: #{tpu_custom_call.1} parent=1 // pred_region
      _
    $region73: #{tpu_custom_call.1} parent=1 // pred_fallthru
      _
    // Predicated region
    $region74: #{tpu_custom_call.1} parent=1 // pred_check
      _
    $region75: #{tpu_custom_call.1} parent=1 // pred_check_branch
      %240 = sbr.rel (0) target = $region77
    $region76: #{tpu_custom_call.1} parent=1 // pred_region
      %241 = dma.done [#allocation3], 256
    $region77: #{tpu_custom_call.1} parent=1 // pred_fallthru
      _
    // Predicated region
    $region78: #{tpu_custom_call.1} parent=1 // pred_check
      _
    $region79: #{tpu_custom_call.1} parent=1 // pred_check_branch
      %243 = sbr.rel (0) target = $region81
    $region80: #{tpu_custom_call.1} parent=1 // pred_region
      %244 = dma.done [#allocation6], 512
    $region81: #{tpu_custom_call.1} parent=1 // pred_fallthru
      _
    // Predicated region
    $region82: #{tpu_custom_call.1} parent=1 // pred_check
      _
    $region83: #{tpu_custom_call.1} parent=1 // pred_check_branch
      %246 = sbr.rel (0) target = $region85
    $region84: #{tpu_custom_call.1} parent=1 // pred_region
      %247 = dma.done [#allocation6], 512
    $region85: #{tpu_custom_call.1} parent=1 // pred_fallthru
      _
    // Predicated region
    $region86: #{tpu_custom_call.1} parent=1 // pred_check
      _
    $region87: #{tpu_custom_call.1} parent=1 // pred_check_branch
      %249 = sbr.rel (0) target = $region89
    $region88: #{tpu_custom_call.1} parent=1 // pred_region
      %250 = dma.done [#allocation9], 256
    $region89: #{tpu_custom_call.1} parent=1 // pred_fallthru
      _
    // Predicated region
    $region90: #{tpu_custom_call.1} parent=1 // pred_check
      _
    $region91: #{tpu_custom_call.1} parent=1 // pred_check_branch
      %252 = sbr.rel (0) target = $region93
    $region92: #{tpu_custom_call.1} parent=1 // pred_region
      %253 = dma.done [#allocation9], 256
    $region93: #{tpu_custom_call.1} parent=1 // pred_fallthru
      _
    // Predicated region
    $region94: #{tpu_custom_call.1} parent=1 // pred_check
      _
    $region95: #{tpu_custom_call.1} parent=1 // pred_check_branch
      %255 = sbr.rel (0) target = $region97
    $region96: #{tpu_custom_call.1} parent=1 // pred_region
      %256 = dma.done [#allocation12], 512
    $region97: #{tpu_custom_call.1} parent=1 // pred_fallthru
      _
    // Predicated region
    $region98: #{tpu_custom_call.1} parent=1 // pred_check
      _
    $region99: #{tpu_custom_call.1} parent=1 // pred_check_branch
      %258 = sbr.rel (0) target = $region101
    $region100: #{tpu_custom_call.1} parent=1 // pred_region
      %259 = dma.done [#allocation12], 512
    $region101: #{tpu_custom_call.1} parent=1 // pred_fallthru
      _
    // Predicated region
    $region102: #{tpu_custom_call.1} parent=1 // pred_check
      _
    $region103: #{tpu_custom_call.1} parent=1 // pred_check_branch
      %261 = sbr.rel (0) target = $region105
    $region104: #{tpu_custom_call.1} parent=1 // pred_region
      %262 = dma.done [#allocation15], 128
    $region105: #{tpu_custom_call.1} parent=1 // pred_fallthru
      _
    // Predicated region
    $region106: #{tpu_custom_call.1} parent=1 // pred_check
      _
    $region107: #{tpu_custom_call.1} parent=1 // pred_check_branch
      %264 = sbr.rel (0) target = $region109
    $region108: #{tpu_custom_call.1} parent=1 // pred_region
      %265 = dma.done [#allocation15], 128
    $region109: #{tpu_custom_call.1} parent=1 // pred_fallthru
      _
    // Predicated region
    $region110: #{tpu_custom_call.1} parent=1 // pred_check
      _
    $region111: #{tpu_custom_call.1} parent=1 // pred_check_branch
      %267 = sbr.rel (0) target = $region113
    $region112: #{tpu_custom_call.1} parent=1 // pred_region
      %268 = dma.done [#allocation18], 128
    $region113: #{tpu_custom_call.1} parent=1 // pred_fallthru
      _
    // Predicated region
    $region114: #{tpu_custom_call.1} parent=1 // pred_check
      _
    $region115: #{tpu_custom_call.1} parent=1 // pred_check_branch
      %270 = sbr.rel (0) target = $region117
    $region116: #{tpu_custom_call.1} parent=1 // pred_region
      %271 = dma.done [#allocation18], 1024
    $region117: #{tpu_custom_call.1} parent=1 // pred_fallthru
      _
    // Predicated region
    $region118: #{tpu_custom_call.1} parent=1 // pred_check
      _
    $region119: #{tpu_custom_call.1} parent=1 // pred_check_branch
      %273 = sbr.rel (0) target = $region121
    $region120: #{tpu_custom_call.1} parent=1 // pred_region
      %274 = dma.done [#allocation21], 1024
    $region121: #{tpu_custom_call.1} parent=1 // pred_fallthru
      _
    // Predicated region
    $region122: #{tpu_custom_call.1} parent=1 // pred_check
      _
    $region123: #{tpu_custom_call.1} parent=1 // pred_check_branch
      %276 = sbr.rel (0) target = $region125
    $region124: #{tpu_custom_call.1} parent=1 // pred_region
      %277 = dma.done [#allocation21], 1024
    $region125: #{tpu_custom_call.1} parent=1 // pred_fallthru
      _
    // Predicated region
    $region126: #{tpu_custom_call.1} parent=1 // pred_check
      _
    $region127: #{tpu_custom_call.1} parent=1 // pred_check_branch
      %279 = sbr.rel (0) target = $region129
    $region128: #{tpu_custom_call.1} parent=1 // pred_region
      %280 = dma.done [#allocation24], 128
    $region129: #{tpu_custom_call.1} parent=1 // pred_fallthru
      _
    // Predicated region
    $region130: #{tpu_custom_call.1} parent=1 // pred_check
      _
    $region131: #{tpu_custom_call.1} parent=1 // pred_check_branch
      %282 = sbr.rel (0) target = $region133
    $region132: #{tpu_custom_call.1} parent=1 // pred_region
      %283 = dma.done [#allocation24], 128
    $region133: #{tpu_custom_call.1} parent=1 // pred_fallthru
      _
    // Predicated region
    $region134: #{tpu_custom_call.1} parent=1 // pred_check
      _
    $region135: #{tpu_custom_call.1} parent=1 // pred_check_branch
      %285 = sbr.rel (0) target = $region137
    $region136: #{tpu_custom_call.1} parent=1 // pred_region
      %286 = dma.done [#allocation27], 1024
    $region137: #{tpu_custom_call.1} parent=1 // pred_fallthru
      _
    // Predicated region
    $region138: #{tpu_custom_call.1} parent=1 // pred_check
      _
    $region139: #{tpu_custom_call.1} parent=1 // pred_check_branch
      %288 = sbr.rel (0) target = $region141
    $region140: #{tpu_custom_call.1} parent=1 // pred_region
      %289 = dma.done [#allocation27], 1024
    $region141: #{tpu_custom_call.1} parent=1 // pred_fallthru
      _
    %v291 = vld [vmem:[#allocation14] sm:$0xf]
    %v292 = vld [vmem:[#allocation14 + $0x4] sm:$0xf]
    %v293 = vld [vmem:[#allocation16] sm:$0xf]
    %v294 = vld [vmem:[#allocation16 + $0x4] sm:$0xf]
    %v295 = vld [vmem:[#allocation17] sm:$0xf]
    %v296 = vld [vmem:[#allocation17 + $0x4] sm:$0xf]
    %v297 = vld [vmem:[#allocation19] sm:$0xf]
    %v298 = vld [vmem:[#allocation19 + $0x4] sm:$0xf]
    %v299 = vld [vmem:[#allocation19 + $0x8] sm:$0xf]
    %v300 = vld [vmem:[#allocation19 + $0xc] sm:$0xf]
    %v301 = vld [vmem:[#allocation19 + $0x10] sm:$0xf]
    %v302 = vld [vmem:[#allocation19 + $0x14] sm:$0xf]
    %v303 = vld [vmem:[#allocation19 + $0x18] sm:$0xf]
    %v304 = vld [vmem:[#allocation19 + $0x1c] sm:$0xf]
    %v305 = vld [vmem:[#allocation19 + $0x20] sm:$0xf]
    %v306 = vld [vmem:[#allocation19 + $0x24] sm:$0xf]
    %v307 = vld [vmem:[#allocation19 + $0x28] sm:$0xf]
    %v308 = vld [vmem:[#allocation19 + $0x2c] sm:$0xf]
    %v309 = vld [vmem:[#allocation19 + $0x30] sm:$0xf]
    %v310 = vld [vmem:[#allocation19 + $0x34] sm:$0xf]
    %v311 = vld [vmem:[#allocation19 + $0x38] sm:$0xf]
    %v312 = vld [vmem:[#allocation19 + $0x3c] sm:$0xf]
    %v313 = vld [vmem:[#allocation20] sm:$0xf]
    %v314 = vld [vmem:[#allocation20 + $0x4] sm:$0xf]
    %v315 = vld [vmem:[#allocation20 + $0x8] sm:$0xf]
    %v316 = vld [vmem:[#allocation20 + $0xc] sm:$0xf]
    %v317 = vld [vmem:[#allocation20 + $0x10] sm:$0xf]
    %v318 = vld [vmem:[#allocation20 + $0x14] sm:$0xf]
    %v319 = vld [vmem:[#allocation20 + $0x18] sm:$0xf]
    %v320 = vld [vmem:[#allocation20 + $0x1c] sm:$0xf]
    %v321 = vld [vmem:[#allocation20 + $0x20] sm:$0xf]
    %v322 = vld [vmem:[#allocation20 + $0x24] sm:$0xf]
    %v323 = vld [vmem:[#allocation20 + $0x28] sm:$0xf]
    %v324 = vld [vmem:[#allocation20 + $0x2c] sm:$0xf]
    %v325 = vld [vmem:[#allocation20 + $0x30] sm:$0xf]
    %v326 = vld [vmem:[#allocation20 + $0x34] sm:$0xf]
    %v327 = vld [vmem:[#allocation20 + $0x38] sm:$0xf]
    %v328 = vld [vmem:[#allocation20 + $0x3c] sm:$0xf]
    %v329 = vld [vmem:[#allocation22] sm:$0xf]
    %v330 = vld [vmem:[#allocation22 + $0x4] sm:$0xf]
    %v331 = vld [vmem:[#allocation22 + $0x8] sm:$0xf]
    %v332 = vld [vmem:[#allocation22 + $0xc] sm:$0xf]
    %v333 = vld [vmem:[#allocation22 + $0x10] sm:$0xf]
    %v334 = vld [vmem:[#allocation22 + $0x14] sm:$0xf]
    %v335 = vld [vmem:[#allocation22 + $0x18] sm:$0xf]
    %v336 = vld [vmem:[#allocation22 + $0x1c] sm:$0xf]
    %v337 = vld [vmem:[#allocation22 + $0x20] sm:$0xf]
    %v338 = vld [vmem:[#allocation22 + $0x24] sm:$0xf]
    %v339 = vld [vmem:[#allocation22 + $0x28] sm:$0xf]
    %v340 = vld [vmem:[#allocation22 + $0x2c] sm:$0xf]
    %v341 = vld [vmem:[#allocation22 + $0x30] sm:$0xf]
    %v342 = vld [vmem:[#allocation22 + $0x34] sm:$0xf]
    %v343 = vld [vmem:[#allocation22 + $0x38] sm:$0xf]
    %v344 = vld [vmem:[#allocation22 + $0x3c] sm:$0xf]
    %v345 = vld [vmem:[#allocation23] sm:$0xf]
    %v346 = vld [vmem:[#allocation23 + $0x4] sm:$0xf]
    %v347 = vld [vmem:[#allocation25] sm:$0xf]
    %v348 = vld [vmem:[#allocation25 + $0x4] sm:$0xf]
    %v349 = vld [vmem:[#allocation26] sm:$0xf]
    %v350 = vld [vmem:[#allocation26 + $0x4] sm:$0xf]
    %v351 = vld [vmem:[#allocation26 + $0x8] sm:$0xf]
    %v352 = vld [vmem:[#allocation26 + $0xc] sm:$0xf]
    %v353 = vld [vmem:[#allocation26 + $0x10] sm:$0xf]
    %v354 = vld [vmem:[#allocation26 + $0x14] sm:$0xf]
    %v355 = vld [vmem:[#allocation26 + $0x18] sm:$0xf]
    %v356 = vld [vmem:[#allocation26 + $0x1c] sm:$0xf]
    %v357 = vld [vmem:[#allocation26 + $0x20] sm:$0xf]
    %v358 = vld [vmem:[#allocation26 + $0x24] sm:$0xf]
    %v359 = vld [vmem:[#allocation26 + $0x28] sm:$0xf]
    %v360 = vld [vmem:[#allocation26 + $0x2c] sm:$0xf]
    %v361 = vld [vmem:[#allocation26 + $0x30] sm:$0xf]
    %v362 = vld [vmem:[#allocation26 + $0x34] sm:$0xf]
    %v363 = vld [vmem:[#allocation26 + $0x38] sm:$0xf]
    %v364 = vld [vmem:[#allocation26 + $0x3c] sm:$0xf]
    %v365 = vld [vmem:[#allocation28] sm:$0xf]
    %v366 = vld [vmem:[#allocation28 + $0x4] sm:$0xf]
    %v367 = vld [vmem:[#allocation28 + $0x8] sm:$0xf]
    %v368 = vld [vmem:[#allocation28 + $0xc] sm:$0xf]
    %v369 = vld [vmem:[#allocation28 + $0x10] sm:$0xf]
    %v370 = vld [vmem:[#allocation28 + $0x14] sm:$0xf]
    %v371 = vld [vmem:[#allocation28 + $0x18] sm:$0xf]
    %v372 = vld [vmem:[#allocation28 + $0x1c] sm:$0xf]
    %v373 = vld [vmem:[#allocation28 + $0x20] sm:$0xf]
    %v374 = vld [vmem:[#allocation28 + $0x24] sm:$0xf]
    %v375 = vld [vmem:[#allocation28 + $0x28] sm:$0xf]
    %v376 = vld [vmem:[#allocation28 + $0x2c] sm:$0xf]
    %v377 = vld [vmem:[#allocation28 + $0x30] sm:$0xf]
    %v378 = vld [vmem:[#allocation28 + $0x34] sm:$0xf]
    %v379 = vld [vmem:[#allocation28 + $0x38] sm:$0xf]
    %v380 = vld [vmem:[#allocation28 + $0x3c] sm:$0xf]
    %v381 = vld [vmem:[%s17] sm:$0xf]
    %v382 = vld [vmem:[%s17 + $0x4] sm:$0xf]
    %v383 = vld [vmem:[%s17 + $0x8] sm:$0xf]
    %v384 = vld [vmem:[%s17 + $0xc] sm:$0xf]
    %v385 = vld [vmem:[%s17 + $0x10] sm:$0xf]
    %v386 = vld [vmem:[%s17 + $0x14] sm:$0xf]
    %v387 = vld [vmem:[%s17 + $0x18] sm:$0xf]
    %v388 = vld [vmem:[%s17 + $0x1c] sm:$0xf]
    %v389 = vld [vmem:[%s17 + $0x20] sm:$0xf]
    %v390 = vld [vmem:[%s17 + $0x24] sm:$0xf]
    %v391 = vld [vmem:[%s17 + $0x28] sm:$0xf]
    %v392 = vld [vmem:[%s17 + $0x2c] sm:$0xf]
    %v393 = vld [vmem:[%s17 + $0x30] sm:$0xf]
    %v394 = vld [vmem:[%s17 + $0x34] sm:$0xf]
    %v395 = vld [vmem:[%s17 + $0x38] sm:$0xf]
    %v396 = vld [vmem:[%s17 + $0x3c] sm:$0xf]
    %v397 = vld [vmem:[#allocation8] sm:$0xff]
    %v398 = vld [vmem:[#allocation8 + $0x8] sm:$0xff]
    %v399 = vld [vmem:[#allocation10] sm:$0xff]
    %v400 = vld [vmem:[#allocation10 + $0x8] sm:$0xff]
    %v401 = vld [vmem:[#allocation11] sm:$0xff]
    %v402 = vld [vmem:[#allocation11 + $0x8] sm:$0xff]
    %v403 = vld [vmem:[#allocation11 + $0x10] sm:$0xff]
    %v404 = vld [vmem:[#allocation11 + $0x18] sm:$0xff]
    %v405 = vld [vmem:[#allocation13] sm:$0xff]
    %v406 = vld [vmem:[#allocation13 + $0x8] sm:$0xff]
    %v407 = vld [vmem:[#allocation13 + $0x10] sm:$0xff]
    %v408 = vld [vmem:[#allocation13 + $0x18] sm:$0xff]
    %v409 = vld [vmem:[#allocation2] sm:$0xff]
    %v410 = vld [vmem:[#allocation2 + $0x8] sm:$0xff]
    %v411 = vpack.c.bf16 %v410, %v409
    %v414 = vunpack.c.l.b16 %v291
    %v415 = vunpack.c.l.b16 %v292
    %v416 = vpack.c.b16 %v415, %v414
    %vm417 = vcmask 130048
    %v419 = vsel %vm417, %v416, 0
    %421 = vmatprep.subr.bf16.mxu0 0
    %422 = vmatpush1.bf16.msra.mxu0 %v411
    %423 = vmatprep.subr.bf16.mxu0 0
    %424 = vmatpush1.bf16.msra.mxu0 0
    %425 = vmatprep.subr.bf16.mxu0 0
    %426 = vmatpush1.bf16.msra.mxu0 0
    %427 = vmatprep.subr.bf16.mxu0 0
    %428 = vmatpush1.bf16.msra.mxu0 0
    %429 = vmatprep.subr.bf16.mxu0 0
    %430 = vmatpush1.bf16.msra.mxu0 0
    %431 = vmatprep.subr.bf16.mxu0 0
    %432 = vmatpush1.bf16.msra.mxu0 0
    %433 = vmatprep.subr.bf16.mxu0 0
    %434 = vmatpush1.bf16.msra.mxu0 0
    %435 = vmatprep.subr.bf16.mxu0 0
    %436 = vmatpush1.bf16.msra.mxu0 0
    %437 = vmatprep.subr.bf16.mxu0 0
    %438 = vmatpush1.bf16.msra.mxu0 0
    %439 = vmatprep.subr.bf16.mxu0 0
    %440 = vmatpush1.bf16.msra.mxu0 0
    %441 = vmatprep.subr.bf16.mxu0 0
    %442 = vmatpush1.bf16.msra.mxu0 0
    %443 = vmatprep.subr.bf16.mxu0 0
    %444 = vmatpush1.bf16.msra.mxu0 0
    %445 = vmatprep.subr.bf16.mxu0 0
    %446 = vmatpush1.bf16.msra.mxu0 0
    %447 = vmatprep.subr.bf16.mxu0 0
    %448 = vmatpush1.bf16.msra.mxu0 0
    %449 = vmatprep.subr.bf16.mxu0 0
    %450 = vmatpush1.bf16.msra.mxu0 0
    %451 = vmatprep.subr.bf16.mxu0 0
    %452 = vmatpush1.bf16.msra.mxu0 0
    %453 = vmatprep.mubr.bf16.mxu0 0
    %454 = vmatmul.mubr.bf16.gmra.mrb[0].mxu0 %v419
    %v455 = vpop.f32.mrb[0].mxu0
    %v456 = vadd.f32 0.0, %v455
    %v457 = vpop.f32.mrb[0].mxu0
    %v458 = vpop.f32.mrb[0].mxu0
    %v459 = vadd.f32 0.0, %v458
    %v460 = vpop.f32.mrb[0].mxu0
    %461 = vdwg.mxu0
    %v464 = vunpack.c.l.b16 %v293
    %v465 = vunpack.c.l.b16 %v294
    %v466 = vpack.c.b16 %v465, %v464
    %v468 = vsel %vm417, %v466, 0
    %470 = vmatprep.subr.bf16.mxu0 0
    %471 = vmatpush1.bf16.msra.mxu0 %v411
    %472 = vmatprep.subr.bf16.mxu0 0
    %473 = vmatpush1.bf16.msra.mxu0 0
    %474 = vmatprep.subr.bf16.mxu0 0
    %475 = vmatpush1.bf16.msra.mxu0 0
    %476 = vmatprep.subr.bf16.mxu0 0
    %477 = vmatpush1.bf16.msra.mxu0 0
    %478 = vmatprep.subr.bf16.mxu0 0
    %479 = vmatpush1.bf16.msra.mxu0 0
    %480 = vmatprep.subr.bf16.mxu0 0
    %481 = vmatpush1.bf16.msra.mxu0 0
    %482 = vmatprep.subr.bf16.mxu0 0
    %483 = vmatpush1.bf16.msra.mxu0 0
    %484 = vmatprep.subr.bf16.mxu0 0
    %485 = vmatpush1.bf16.msra.mxu0 0
    %486 = vmatprep.subr.bf16.mxu0 0
    %487 = vmatpush1.bf16.msra.mxu0 0
    %488 = vmatprep.subr.bf16.mxu0 0
    %489 = vmatpush1.bf16.msra.mxu0 0
    %490 = vmatprep.subr.bf16.mxu0 0
    %491 = vmatpush1.bf16.msra.mxu0 0
    %492 = vmatprep.subr.bf16.mxu0 0
    %493 = vmatpush1.bf16.msra.mxu0 0
    %494 = vmatprep.subr.bf16.mxu0 0
    %495 = vmatpush1.bf16.msra.mxu0 0
    %496 = vmatprep.subr.bf16.mxu0 0
    %497 = vmatpush1.bf16.msra.mxu0 0
    %498 = vmatprep.subr.bf16.mxu0 0
    %499 = vmatpush1.bf16.msra.mxu0 0
    %500 = vmatprep.subr.bf16.mxu0 0
    %501 = vmatpush1.bf16.msra.mxu0 0
    %502 = vmatprep.mubr.bf16.mxu0 0
    %503 = vmatmul.mubr.bf16.gmra.mrb[0].mxu0 %v468
    %v504 = vpop.f32.mrb[0].mxu0
    %v505 = vadd.f32 0.0, %v504
    %v506 = vpop.f32.mrb[0].mxu0
    %v507 = vpop.f32.mrb[0].mxu0
    %v508 = vadd.f32 0.0, %v507
    %v509 = vpop.f32.mrb[0].mxu0
    %510 = vdwg.mxu0
    %v511 = vpack.c.bf16 %v459, %v456
    %v512 = vpack.c.bf16 %v508, %v505
    %v513 = vadd.f32 %v456, %v505
    %v514 = vadd.f32 %v459, %v508
    %v515 = vpack.c.bf16 %v514, %v513
    %v532 = vunpack.c.l.b16 %v297
    %v533 = vunpack.c.l.b16 %v298
    %v534 = vunpack.c.l.b16 %v299
    %v535 = vunpack.c.l.b16 %v300
    %v536 = vunpack.c.l.b16 %v301
    %v537 = vunpack.c.l.b16 %v302
    %v538 = vunpack.c.l.b16 %v303
    %v539 = vunpack.c.l.b16 %v304
    %v540 = vunpack.c.l.b16 %v305
    %v541 = vunpack.c.l.b16 %v306
    %v542 = vunpack.c.l.b16 %v307
    %v543 = vunpack.c.l.b16 %v308
    %v544 = vunpack.c.l.b16 %v309
    %v545 = vunpack.c.l.b16 %v310
    %v546 = vunpack.c.l.b16 %v311
    %v547 = vunpack.c.l.b16 %v312
    %v548 = vpack.c.b16 %v533, %v532
    %v549 = vpack.c.b16 %v535, %v534
    %v550 = vpack.c.b16 %v537, %v536
    %v551 = vpack.c.b16 %v539, %v538
    %v552 = vpack.c.b16 %v541, %v540
    %v553 = vpack.c.b16 %v543, %v542
    %v554 = vpack.c.b16 %v545, %v544
    %v555 = vpack.c.b16 %v547, %v546
    %564 = vmatprep.subr.bf16.mxu0 0
    %565 = vmatpush1.bf16.msra.mxu0 %v548
    %566 = vmatprep.subr.bf16.mxu0 0
    %567 = vmatpush1.bf16.msra.mxu0 %v549
    %568 = vmatprep.subr.bf16.mxu0 0
    %569 = vmatpush1.bf16.msra.mxu0 %v550
    %570 = vmatprep.subr.bf16.mxu0 0
    %571 = vmatpush1.bf16.msra.mxu0 %v551
    %572 = vmatprep.subr.bf16.mxu0 0
    %573 = vmatpush1.bf16.msra.mxu0 %v552
    %574 = vmatprep.subr.bf16.mxu0 0
    %575 = vmatpush1.bf16.msra.mxu0 %v553
    %576 = vmatprep.subr.bf16.mxu0 0
    %577 = vmatpush1.bf16.msra.mxu0 %v554
    %578 = vmatprep.subr.bf16.mxu0 0
    %579 = vmatpush1.bf16.msra.mxu0 %v555
    %580 = vmatprep.subr.bf16.mxu0 0
    %581 = vmatpush1.bf16.msra.mxu0 0
    %582 = vmatprep.subr.bf16.mxu0 0
    %583 = vmatpush1.bf16.msra.mxu0 0
    %584 = vmatprep.subr.bf16.mxu0 0
    %585 = vmatpush1.bf16.msra.mxu0 0
    %586 = vmatprep.subr.bf16.mxu0 0
    %587 = vmatpush1.bf16.msra.mxu0 0
    %588 = vmatprep.subr.bf16.mxu0 0
    %589 = vmatpush1.bf16.msra.mxu0 0
    %590 = vmatprep.subr.bf16.mxu0 0
    %591 = vmatpush1.bf16.msra.mxu0 0
    %592 = vmatprep.subr.bf16.mxu0 0
    %593 = vmatpush1.bf16.msra.mxu0 0
    %594 = vmatprep.subr.bf16.mxu0 0
    %595 = vmatpush1.bf16.msra.mxu0 0
    %596 = vmatprep.mubr.bf16.mxu0 0
    %597 = vmatmul.mubr.bf16.gmra.mrb[0].mxu0 %v511
    %v598 = vpop.f32.mrb[0].mxu0
    %v599 = vadd.f32 0.0, %v598
    %v600 = vpop.f32.mrb[0].mxu0
    %v601 = vpop.f32.mrb[0].mxu0
    %v602 = vadd.f32 0.0, %v601
    %v603 = vpop.f32.mrb[0].mxu0
    %604 = vdwg.mxu0
    %v621 = vunpack.c.l.b16 %v313
    %v622 = vunpack.c.l.b16 %v314
    %v623 = vunpack.c.l.b16 %v315
    %v624 = vunpack.c.l.b16 %v316
    %v625 = vunpack.c.l.b16 %v317
    %v626 = vunpack.c.l.b16 %v318
    %v627 = vunpack.c.l.b16 %v319
    %v628 = vunpack.c.l.b16 %v320
    %v629 = vunpack.c.l.b16 %v321
    %v630 = vunpack.c.l.b16 %v322
    %v631 = vunpack.c.l.b16 %v323
    %v632 = vunpack.c.l.b16 %v324
    %v633 = vunpack.c.l.b16 %v325
    %v634 = vunpack.c.l.b16 %v326
    %v635 = vunpack.c.l.b16 %v327
    %v636 = vunpack.c.l.b16 %v328
    %v637 = vpack.c.b16 %v622, %v621
    %v638 = vpack.c.b16 %v624, %v623
    %v639 = vpack.c.b16 %v626, %v625
    %v640 = vpack.c.b16 %v628, %v627
    %v641 = vpack.c.b16 %v630, %v629
    %v642 = vpack.c.b16 %v632, %v631
    %v643 = vpack.c.b16 %v634, %v633
    %v644 = vpack.c.b16 %v636, %v635
    %653 = vmatprep.subr.bf16.mxu0 0
    %654 = vmatpush1.bf16.msra.mxu0 %v637
    %655 = vmatprep.subr.bf16.mxu0 0
    %656 = vmatpush1.bf16.msra.mxu0 %v638
    %657 = vmatprep.subr.bf16.mxu0 0
    %658 = vmatpush1.bf16.msra.mxu0 %v639
    %659 = vmatprep.subr.bf16.mxu0 0
    %660 = vmatpush1.bf16.msra.mxu0 %v640
    %661 = vmatprep.subr.bf16.mxu0 0
    %662 = vmatpush1.bf16.msra.mxu0 %v641
    %663 = vmatprep.subr.bf16.mxu0 0
    %664 = vmatpush1.bf16.msra.mxu0 %v642
    %665 = vmatprep.subr.bf16.mxu0 0
    %666 = vmatpush1.bf16.msra.mxu0 %v643
    %667 = vmatprep.subr.bf16.mxu0 0
    %668 = vmatpush1.bf16.msra.mxu0 %v644
    %669 = vmatprep.subr.bf16.mxu0 0
    %670 = vmatpush1.bf16.msra.mxu0 0
    %671 = vmatprep.subr.bf16.mxu0 0
    %672 = vmatpush1.bf16.msra.mxu0 0
    %673 = vmatprep.subr.bf16.mxu0 0
    %674 = vmatpush1.bf16.msra.mxu0 0
    %675 = vmatprep.subr.bf16.mxu0 0
    %676 = vmatpush1.bf16.msra.mxu0 0
    %677 = vmatprep.subr.bf16.mxu0 0
    %678 = vmatpush1.bf16.msra.mxu0 0
    %679 = vmatprep.subr.bf16.mxu0 0
    %680 = vmatpush1.bf16.msra.mxu0 0
    %681 = vmatprep.subr.bf16.mxu0 0
    %682 = vmatpush1.bf16.msra.mxu0 0
    %683 = vmatprep.subr.bf16.mxu0 0
    %684 = vmatpush1.bf16.msra.mxu0 0
    %685 = vmatprep.mubr.bf16.mxu0 0
    %686 = vmatmul.mubr.bf16.gmra.mrb[0].mxu0 %v512
    %v687 = vpop.f32.mrb[0].mxu0
    %v688 = vadd.f32 0.0, %v687
    %v689 = vpop.f32.mrb[0].mxu0
    %v690 = vpop.f32.mrb[0].mxu0
    %v691 = vadd.f32 0.0, %v690
    %v692 = vpop.f32.mrb[0].mxu0
    %693 = vdwg.mxu0
    %v710 = vunpack.c.l.b16 %v329
    %v711 = vunpack.c.l.b16 %v330
    %v712 = vunpack.c.l.b16 %v331
    %v713 = vunpack.c.l.b16 %v332
    %v714 = vunpack.c.l.b16 %v333
    %v715 = vunpack.c.l.b16 %v334
    %v716 = vunpack.c.l.b16 %v335
    %v717 = vunpack.c.l.b16 %v336
    %v718 = vunpack.c.l.b16 %v337
    %v719 = vunpack.c.l.b16 %v338
    %v720 = vunpack.c.l.b16 %v339
    %v721 = vunpack.c.l.b16 %v340
    %v722 = vunpack.c.l.b16 %v341
    %v723 = vunpack.c.l.b16 %v342
    %v724 = vunpack.c.l.b16 %v343
    %v725 = vunpack.c.l.b16 %v344
    %v726 = vpack.c.b16 %v711, %v710
    %v727 = vpack.c.b16 %v713, %v712
    %v728 = vpack.c.b16 %v715, %v714
    %v729 = vpack.c.b16 %v717, %v716
    %v730 = vpack.c.b16 %v719, %v718
    %v731 = vpack.c.b16 %v721, %v720
    %v732 = vpack.c.b16 %v723, %v722
    %v733 = vpack.c.b16 %v725, %v724
    %742 = vmatprep.subr.bf16.mxu0 0
    %743 = vmatpush1.bf16.msra.mxu0 %v726
    %744 = vmatprep.subr.bf16.mxu0 0
    %745 = vmatpush1.bf16.msra.mxu0 %v727
    %746 = vmatprep.subr.bf16.mxu0 0
    %747 = vmatpush1.bf16.msra.mxu0 %v728
    %748 = vmatprep.subr.bf16.mxu0 0
    %749 = vmatpush1.bf16.msra.mxu0 %v729
    %750 = vmatprep.subr.bf16.mxu0 0
    %751 = vmatpush1.bf16.msra.mxu0 %v730
    %752 = vmatprep.subr.bf16.mxu0 0
    %753 = vmatpush1.bf16.msra.mxu0 %v731
    %754 = vmatprep.subr.bf16.mxu0 0
    %755 = vmatpush1.bf16.msra.mxu0 %v732
    %756 = vmatprep.subr.bf16.mxu0 0
    %757 = vmatpush1.bf16.msra.mxu0 %v733
    %758 = vmatprep.subr.bf16.mxu0 0
    %759 = vmatpush1.bf16.msra.mxu0 0
    %760 = vmatprep.subr.bf16.mxu0 0
    %761 = vmatpush1.bf16.msra.mxu0 0
    %762 = vmatprep.subr.bf16.mxu0 0
    %763 = vmatpush1.bf16.msra.mxu0 0
    %764 = vmatprep.subr.bf16.mxu0 0
    %765 = vmatpush1.bf16.msra.mxu0 0
    %766 = vmatprep.subr.bf16.mxu0 0
    %767 = vmatpush1.bf16.msra.mxu0 0
    %768 = vmatprep.subr.bf16.mxu0 0
    %769 = vmatpush1.bf16.msra.mxu0 0
    %770 = vmatprep.subr.bf16.mxu0 0
    %771 = vmatpush1.bf16.msra.mxu0 0
    %772 = vmatprep.subr.bf16.mxu0 0
    %773 = vmatpush1.bf16.msra.mxu0 0
    %774 = vmatprep.mubr.bf16.mxu0 0
    %775 = vmatmul.mubr.bf16.gmra.mrb[0].mxu0 %v515
    %v776 = vpop.f32.mrb[0].mxu0
    %v777 = vadd.f32 0.0, %v776
    %v778 = vpop.f32.mrb[0].mxu0
    %v779 = vpop.f32.mrb[0].mxu0
    %v780 = vadd.f32 0.0, %v779
    %v781 = vpop.f32.mrb[0].mxu0
    %782 = vdwg.mxu0
    %v783 = vsub.f32 %v599, %v688
    %v784 = vsub.f32 %v602, %v691
    %v785 = vsub.f32 %v777, %v599
    %v786 = vsub.f32 %v780, %v602
    %v787 = vsub.f32 %v785, %v688
    %v788 = vsub.f32 %v786, %v691
    %v789 = vmul.f32 %v783, %v401
    %v790 = vmul.f32 %v783, %v402
    %v791 = vmul.f32 %v784, %v403
    %v792 = vmul.f32 %v784, %v404
    %v793 = vmul.f32 %v787, %v405
    %v794 = vmul.f32 %v787, %v406
    %v795 = vmul.f32 %v788, %v407
    %v796 = vmul.f32 %v788, %v408
    %v797 = vsub.f32 %v789, %v793
    %v798 = vsub.f32 %v790, %v794
    %v799 = vsub.f32 %v791, %v795
    %v800 = vsub.f32 %v792, %v796
    %v801 = vmul.f32 %v783, %v405
    %v802 = vmul.f32 %v783, %v406
    %v803 = vmul.f32 %v784, %v407
    %v804 = vmul.f32 %v784, %v408
    %v805 = vmul.f32 %v787, %v401
    %v806 = vmul.f32 %v787, %v402
    %v807 = vmul.f32 %v788, %v403
    %v808 = vmul.f32 %v788, %v404
    %v809 = vadd.f32 %v801, %v805
    %v810 = vadd.f32 %v802, %v806
    %v811 = vadd.f32 %v803, %v807
    %v812 = vadd.f32 %v804, %v808
    %v813 = vpack.c.bf16 %v799, %v797
    %v814 = vpack.c.bf16 %v800, %v798
    %v815 = vpack.c.bf16 %v811, %v809
    %v816 = vpack.c.bf16 %v812, %v810
    %v817 = vadd.f32 %v797, %v809
    %v818 = vadd.f32 %v798, %v810
    %v819 = vadd.f32 %v799, %v811
    %v820 = vadd.f32 %v800, %v812
    %v821 = vpack.c.bf16 %v819, %v817
    %v822 = vpack.c.bf16 %v820, %v818
    %823 = vmatprep.subr.bf16.mxu0 %v814
    %824 = vmatpush1.bf16.msra.mxu0 %v813
    %825 = vmatprep.subr.bf16.mxu0 0
    %826 = vmatpush1.bf16.msra.mxu0 0
    %827 = vmatprep.subr.bf16.mxu0 0
    %828 = vmatpush1.bf16.msra.mxu0 0
    %829 = vmatprep.subr.bf16.mxu0 0
    %830 = vmatpush1.bf16.msra.mxu0 0
    %831 = vmatprep.subr.bf16.mxu0 0
    %832 = vmatpush1.bf16.msra.mxu0 0
    %833 = vmatprep.subr.bf16.mxu0 0
    %834 = vmatpush1.bf16.msra.mxu0 0
    %835 = vmatprep.subr.bf16.mxu0 0
    %836 = vmatpush1.bf16.msra.mxu0 0
    %837 = vmatprep.subr.bf16.mxu0 0
    %838 = vmatpush1.bf16.msra.mxu0 0
    %839 = vmatprep.subr.bf16.mxu0 0
    %840 = vmatpush1.bf16.msra.mxu0 0
    %841 = vmatprep.subr.bf16.mxu0 0
    %842 = vmatpush1.bf16.msra.mxu0 0
    %843 = vmatprep.subr.bf16.mxu0 0
    %844 = vmatpush1.bf16.msra.mxu0 0
    %845 = vmatprep.subr.bf16.mxu0 0
    %846 = vmatpush1.bf16.msra.mxu0 0
    %847 = vmatprep.subr.bf16.mxu0 0
    %848 = vmatpush1.bf16.msra.mxu0 0
    %849 = vmatprep.subr.bf16.mxu0 0
    %850 = vmatpush1.bf16.msra.mxu0 0
    %851 = vmatprep.subr.bf16.mxu0 0
    %852 = vmatpush1.bf16.msra.mxu0 0
    %853 = vmatprep.subr.bf16.mxu0 0
    %854 = vmatpush1.bf16.msra.mxu0 0
    %855 = vmatprep.mubr.bf16.mxu0 0
    %856 = vmatmul.mubr.bf16.gmra.mrb[0].mxu0 %v419
    %v857 = vpop.f32.mrb[0].mxu0
    %v858 = vadd.f32 0.0, %v857
    %v859 = vpop.f32.mrb[0].mxu0
    %v860 = vadd.f32 0.0, %v859
    %v861 = vpop.f32.mrb[0].mxu0
    %v862 = vadd.f32 0.0, %v861
    %v863 = vpop.f32.mrb[0].mxu0
    %v864 = vadd.f32 0.0, %v863
    %865 = vdwg.mxu0
    %v868 = vunpack.c.l.b16 %v345
    %v869 = vunpack.c.l.b16 %v346
    %v870 = vpack.c.b16 %v869, %v868
    %v872 = vsel %vm417, %v870, 0
    %874 = vmatprep.subr.bf16.mxu0 %v816
    %875 = vmatpush1.bf16.msra.mxu0 %v815
    %876 = vmatprep.subr.bf16.mxu0 0
    %877 = vmatpush1.bf16.msra.mxu0 0
    %878 = vmatprep.subr.bf16.mxu0 0
    %879 = vmatpush1.bf16.msra.mxu0 0
    %880 = vmatprep.subr.bf16.mxu0 0
    %881 = vmatpush1.bf16.msra.mxu0 0
    %882 = vmatprep.subr.bf16.mxu0 0
    %883 = vmatpush1.bf16.msra.mxu0 0
    %884 = vmatprep.subr.bf16.mxu0 0
    %885 = vmatpush1.bf16.msra.mxu0 0
    %886 = vmatprep.subr.bf16.mxu0 0
    %887 = vmatpush1.bf16.msra.mxu0 0
    %888 = vmatprep.subr.bf16.mxu0 0
    %889 = vmatpush1.bf16.msra.mxu0 0
    %890 = vmatprep.subr.bf16.mxu0 0
    %891 = vmatpush1.bf16.msra.mxu0 0
    %892 = vmatprep.subr.bf16.mxu0 0
    %893 = vmatpush1.bf16.msra.mxu0 0
    %894 = vmatprep.subr.bf16.mxu0 0
    %895 = vmatpush1.bf16.msra.mxu0 0
    %896 = vmatprep.subr.bf16.mxu0 0
    %897 = vmatpush1.bf16.msra.mxu0 0
    %898 = vmatprep.subr.bf16.mxu0 0
    %899 = vmatpush1.bf16.msra.mxu0 0
    %900 = vmatprep.subr.bf16.mxu0 0
    %901 = vmatpush1.bf16.msra.mxu0 0
    %902 = vmatprep.subr.bf16.mxu0 0
    %903 = vmatpush1.bf16.msra.mxu0 0
    %904 = vmatprep.subr.bf16.mxu0 0
    %905 = vmatpush1.bf16.msra.mxu0 0
    %906 = vmatprep.mubr.bf16.mxu0 0
    %907 = vmatmul.mubr.bf16.gmra.mrb[0].mxu0 %v872
    %v908 = vpop.f32.mrb[0].mxu0
    %v909 = vadd.f32 0.0, %v908
    %v910 = vpop.f32.mrb[0].mxu0
    %v911 = vadd.f32 0.0, %v910
    %v912 = vpop.f32.mrb[0].mxu0
    %v913 = vadd.f32 0.0, %v912
    %v914 = vpop.f32.mrb[0].mxu0
    %v915 = vadd.f32 0.0, %v914
    %916 = vdwg.mxu0
    %v919 = vunpack.c.l.b16 %v347
    %v920 = vunpack.c.l.b16 %v348
    %v921 = vpack.c.b16 %v920, %v919
    %v923 = vsel %vm417, %v921, 0
    %925 = vmatprep.subr.bf16.mxu0 %v822
    %926 = vmatpush1.bf16.msra.mxu0 %v821
    %927 = vmatprep.subr.bf16.mxu0 0
    %928 = vmatpush1.bf16.msra.mxu0 0
    %929 = vmatprep.subr.bf16.mxu0 0
    %930 = vmatpush1.bf16.msra.mxu0 0
    %931 = vmatprep.subr.bf16.mxu0 0
    %932 = vmatpush1.bf16.msra.mxu0 0
    %933 = vmatprep.subr.bf16.mxu0 0
    %934 = vmatpush1.bf16.msra.mxu0 0
    %935 = vmatprep.subr.bf16.mxu0 0
    %936 = vmatpush1.bf16.msra.mxu0 0
    %937 = vmatprep.subr.bf16.mxu0 0
    %938 = vmatpush1.bf16.msra.mxu0 0
    %939 = vmatprep.subr.bf16.mxu0 0
    %940 = vmatpush1.bf16.msra.mxu0 0
    %941 = vmatprep.subr.bf16.mxu0 0
    %942 = vmatpush1.bf16.msra.mxu0 0
    %943 = vmatprep.subr.bf16.mxu0 0
    %944 = vmatpush1.bf16.msra.mxu0 0
    %945 = vmatprep.subr.bf16.mxu0 0
    %946 = vmatpush1.bf16.msra.mxu0 0
    %947 = vmatprep.subr.bf16.mxu0 0
    %948 = vmatpush1.bf16.msra.mxu0 0
    %949 = vmatprep.subr.bf16.mxu0 0
    %950 = vmatpush1.bf16.msra.mxu0 0
    %951 = vmatprep.subr.bf16.mxu0 0
    %952 = vmatpush1.bf16.msra.mxu0 0
    %953 = vmatprep.subr.bf16.mxu0 0
    %954 = vmatpush1.bf16.msra.mxu0 0
    %955 = vmatprep.subr.bf16.mxu0 0
    %956 = vmatpush1.bf16.msra.mxu0 0
    %957 = vmatprep.mubr.bf16.mxu0 0
    %958 = vmatmul.mubr.bf16.gmra.mrb[0].mxu0 %v923
    %v959 = vpop.f32.mrb[0].mxu0
    %v960 = vadd.f32 0.0, %v959
    %v961 = vpop.f32.mrb[0].mxu0
    %v962 = vadd.f32 0.0, %v961
    %v963 = vpop.f32.mrb[0].mxu0
    %v964 = vadd.f32 0.0, %v963
    %v965 = vpop.f32.mrb[0].mxu0
    %v966 = vadd.f32 0.0, %v965
    %967 = vdwg.mxu0
    %v968 = vsub.f32 %v858, %v909
    %v969 = vsub.f32 %v860, %v911
    %v970 = vsub.f32 %v862, %v913
    %v971 = vsub.f32 %v864, %v915
    %v972 = vsub.f32 %v960, %v858
    %v973 = vsub.f32 %v962, %v860
    %v974 = vsub.f32 %v964, %v862
    %v975 = vsub.f32 %v966, %v864
    %v976 = vsub.f32 %v972, %v909
    %v977 = vsub.f32 %v973, %v911
    %v978 = vsub.f32 %v974, %v913
    %v979 = vsub.f32 %v975, %v915
    %v980 = vpack.c.bf16 %v970, %v968
    %v981 = vpack.c.bf16 %v971, %v969
    %v982 = vpack.c.bf16 %v978, %v976
    %v983 = vpack.c.bf16 %v979, %v977
    %v984 = vadd.f32 %v968, %v976
    %v985 = vadd.f32 %v970, %v978
    %v986 = vadd.f32 %v969, %v977
    %v987 = vadd.f32 %v971, %v979
    %v988 = vpack.c.bf16 %v985, %v984
    %v989 = vpack.c.bf16 %v987, %v986
    %v1006 = vunpack.c.l.b16 %v349
    %v1007 = vunpack.c.l.b16 %v350
    %v1008 = vunpack.c.l.b16 %v351
    %v1009 = vunpack.c.l.b16 %v352
    %v1010 = vunpack.c.l.b16 %v353
    %v1011 = vunpack.c.l.b16 %v354
    %v1012 = vunpack.c.l.b16 %v355
    %v1013 = vunpack.c.l.b16 %v356
    %v1014 = vunpack.c.l.b16 %v357
    %v1015 = vunpack.c.l.b16 %v358
    %v1016 = vunpack.c.l.b16 %v359
    %v1017 = vunpack.c.l.b16 %v360
    %v1018 = vunpack.c.l.b16 %v361
    %v1019 = vunpack.c.l.b16 %v362
    %v1020 = vunpack.c.l.b16 %v363
    %v1021 = vunpack.c.l.b16 %v364
    %v1022 = vpack.c.b16 %v1007, %v1006
    %v1023 = vpack.c.b16 %v1009, %v1008
    %v1024 = vpack.c.b16 %v1011, %v1010
    %v1025 = vpack.c.b16 %v1013, %v1012
    %v1026 = vpack.c.b16 %v1015, %v1014
    %v1027 = vpack.c.b16 %v1017, %v1016
    %v1028 = vpack.c.b16 %v1019, %v1018
    %v1029 = vpack.c.b16 %v1021, %v1020
    %1038 = vmatprep.subr.bf16.mxu0 0
    %1039 = vmatpush1.bf16.msra.mxu0 %v1022
    %1040 = vmatprep.subr.bf16.mxu0 0
    %1041 = vmatpush1.bf16.msra.mxu0 %v1023
    %1042 = vmatprep.subr.bf16.mxu0 0
    %1043 = vmatpush1.bf16.msra.mxu0 %v1024
    %1044 = vmatprep.subr.bf16.mxu0 0
    %1045 = vmatpush1.bf16.msra.mxu0 %v1025
    %1046 = vmatprep.subr.bf16.mxu0 0
    %1047 = vmatpush1.bf16.msra.mxu0 %v1026
    %1048 = vmatprep.subr.bf16.mxu0 0
    %1049 = vmatpush1.bf16.msra.mxu0 %v1027
    %1050 = vmatprep.subr.bf16.mxu0 0
    %1051 = vmatpush1.bf16.msra.mxu0 %v1028
    %1052 = vmatprep.subr.bf16.mxu0 0
    %1053 = vmatpush1.bf16.msra.mxu0 %v1029
    %1054 = vmatprep.subr.bf16.mxu0 0
    %1055 = vmatpush1.bf16.msra.mxu0 0
    %1056 = vmatprep.subr.bf16.mxu0 0
    %1057 = vmatpush1.bf16.msra.mxu0 0
    %1058 = vmatprep.subr.bf16.mxu0 0
    %1059 = vmatpush1.bf16.msra.mxu0 0
    %1060 = vmatprep.subr.bf16.mxu0 0
    %1061 = vmatpush1.bf16.msra.mxu0 0
    %1062 = vmatprep.subr.bf16.mxu0 0
    %1063 = vmatpush1.bf16.msra.mxu0 0
    %1064 = vmatprep.subr.bf16.mxu0 0
    %1065 = vmatpush1.bf16.msra.mxu0 0
    %1066 = vmatprep.subr.bf16.mxu0 0
    %1067 = vmatpush1.bf16.msra.mxu0 0
    %1068 = vmatprep.subr.bf16.mxu0 0
    %1069 = vmatpush1.bf16.msra.mxu0 0
    %1070 = vmatprep.mubr.bf16.mxu0 0
    %1071 = vmatmul.mubr.bf16.gmra.mrb[0].mxu0 %v980
    %v1072 = vpop.f32.mrb[0].mxu0
    %v1073 = vadd.f32 0.0, %v1072
    %v1074 = vpop.f32.mrb[0].mxu0
    %v1075 = vpop.f32.mrb[0].mxu0
    %v1076 = vadd.f32 0.0, %v1075
    %v1077 = vpop.f32.mrb[0].mxu0
    %1078 = vmatprep.mubr.bf16.mxu0 0
    %1079 = vmatmul.mubr.bf16.gmra.mrb[0].mxu0 %v981
    %v1080 = vpop.f32.mrb[0].mxu0
    %v1081 = vadd.f32 0.0, %v1080
    %v1082 = vpop.f32.mrb[0].mxu0
    %v1083 = vpop.f32.mrb[0].mxu0
    %v1084 = vadd.f32 0.0, %v1083
    %v1085 = vpop.f32.mrb[0].mxu0
    %1086 = vdwg.mxu0
    %v1103 = vunpack.c.l.b16 %v365
    %v1104 = vunpack.c.l.b16 %v366
    %v1105 = vunpack.c.l.b16 %v367
    %v1106 = vunpack.c.l.b16 %v368
    %v1107 = vunpack.c.l.b16 %v369
    %v1108 = vunpack.c.l.b16 %v370
    %v1109 = vunpack.c.l.b16 %v371
    %v1110 = vunpack.c.l.b16 %v372
    %v1111 = vunpack.c.l.b16 %v373
    %v1112 = vunpack.c.l.b16 %v374
    %v1113 = vunpack.c.l.b16 %v375
    %v1114 = vunpack.c.l.b16 %v376
    %v1115 = vunpack.c.l.b16 %v377
    %v1116 = vunpack.c.l.b16 %v378
    %v1117 = vunpack.c.l.b16 %v379
    %v1118 = vunpack.c.l.b16 %v380
    %v1119 = vpack.c.b16 %v1104, %v1103
    %v1120 = vpack.c.b16 %v1106, %v1105
    %v1121 = vpack.c.b16 %v1108, %v1107
    %v1122 = vpack.c.b16 %v1110, %v1109
    %v1123 = vpack.c.b16 %v1112, %v1111
    %v1124 = vpack.c.b16 %v1114, %v1113
    %v1125 = vpack.c.b16 %v1116, %v1115
    %v1126 = vpack.c.b16 %v1118, %v1117
    %1135 = vmatprep.subr.bf16.mxu0 0
    %1136 = vmatpush1.bf16.msra.mxu0 %v1119
    %1137 = vmatprep.subr.bf16.mxu0 0
    %1138 = vmatpush1.bf16.msra.mxu0 %v1120
    %1139 = vmatprep.subr.bf16.mxu0 0
    %1140 = vmatpush1.bf16.msra.mxu0 %v1121
    %1141 = vmatprep.subr.bf16.mxu0 0
    %1142 = vmatpush1.bf16.msra.mxu0 %v1122
    %1143 = vmatprep.subr.bf16.mxu0 0
    %1144 = vmatpush1.bf16.msra.mxu0 %v1123
    %1145 = vmatprep.subr.bf16.mxu0 0
    %1146 = vmatpush1.bf16.msra.mxu0 %v1124
    %1147 = vmatprep.subr.bf16.mxu0 0
    %1148 = vmatpush1.bf16.msra.mxu0 %v1125
    %1149 = vmatprep.subr.bf16.mxu0 0
    %1150 = vmatpush1.bf16.msra.mxu0 %v1126
    %1151 = vmatprep.subr.bf16.mxu0 0
    %1152 = vmatpush1.bf16.msra.mxu0 0
    %1153 = vmatprep.subr.bf16.mxu0 0
    %1154 = vmatpush1.bf16.msra.mxu0 0
    %1155 = vmatprep.subr.bf16.mxu0 0
    %1156 = vmatpush1.bf16.msra.mxu0 0
    %1157 = vmatprep.subr.bf16.mxu0 0
    %1158 = vmatpush1.bf16.msra.mxu0 0
    %1159 = vmatprep.subr.bf16.mxu0 0
    %1160 = vmatpush1.bf16.msra.mxu0 0
    %1161 = vmatprep.subr.bf16.mxu0 0
    %1162 = vmatpush1.bf16.msra.mxu0 0
    %1163 = vmatprep.subr.bf16.mxu0 0
    %1164 = vmatpush1.bf16.msra.mxu0 0
    %1165 = vmatprep.subr.bf16.mxu0 0
    %1166 = vmatpush1.bf16.msra.mxu0 0
    %1167 = vmatprep.mubr.bf16.mxu0 0
    %1168 = vmatmul.mubr.bf16.gmra.mrb[0].mxu0 %v982
    %v1169 = vpop.f32.mrb[0].mxu0
    %v1170 = vadd.f32 0.0, %v1169
    %v1171 = vpop.f32.mrb[0].mxu0
    %v1172 = vpop.f32.mrb[0].mxu0
    %v1173 = vadd.f32 0.0, %v1172
    %v1174 = vpop.f32.mrb[0].mxu0
    %1175 = vmatprep.mubr.bf16.mxu0 0
    %1176 = vmatmul.mubr.bf16.gmra.mrb[0].mxu0 %v983
    %v1177 = vpop.f32.mrb[0].mxu0
    %v1178 = vadd.f32 0.0, %v1177
    %v1179 = vpop.f32.mrb[0].mxu0
    %v1180 = vpop.f32.mrb[0].mxu0
    %v1181 = vadd.f32 0.0, %v1180
    %v1182 = vpop.f32.mrb[0].mxu0
    %1183 = vdwg.mxu0
    %v1200 = vunpack.c.l.b16 %v381
    %v1201 = vunpack.c.l.b16 %v382
    %v1202 = vunpack.c.l.b16 %v383
    %v1203 = vunpack.c.l.b16 %v384
    %v1204 = vunpack.c.l.b16 %v385
    %v1205 = vunpack.c.l.b16 %v386
    %v1206 = vunpack.c.l.b16 %v387
    %v1207 = vunpack.c.l.b16 %v388
    %v1208 = vunpack.c.l.b16 %v389
    %v1209 = vunpack.c.l.b16 %v390
    %v1210 = vunpack.c.l.b16 %v391
    %v1211 = vunpack.c.l.b16 %v392
    %v1212 = vunpack.c.l.b16 %v393
    %v1213 = vunpack.c.l.b16 %v394
    %v1214 = vunpack.c.l.b16 %v395
    %v1215 = vunpack.c.l.b16 %v396
    %v1216 = vpack.c.b16 %v1201, %v1200
    %v1217 = vpack.c.b16 %v1203, %v1202
    %v1218 = vpack.c.b16 %v1205, %v1204
    %v1219 = vpack.c.b16 %v1207, %v1206
    %v1220 = vpack.c.b16 %v1209, %v1208
    %v1221 = vpack.c.b16 %v1211, %v1210
    %v1222 = vpack.c.b16 %v1213, %v1212
    %v1223 = vpack.c.b16 %v1215, %v1214
    %1232 = vmatprep.subr.bf16.mxu0 0
    %1233 = vmatpush1.bf16.msra.mxu0 %v1216
    %1234 = vmatprep.subr.bf16.mxu0 0
    %1235 = vmatpush1.bf16.msra.mxu0 %v1217
    %1236 = vmatprep.subr.bf16.mxu0 0
    %1237 = vmatpush1.bf16.msra.mxu0 %v1218
    %1238 = vmatprep.subr.bf16.mxu0 0
    %1239 = vmatpush1.bf16.msra.mxu0 %v1219
    %1240 = vmatprep.subr.bf16.mxu0 0
    %1241 = vmatpush1.bf16.msra.mxu0 %v1220
    %1242 = vmatprep.subr.bf16.mxu0 0
    %1243 = vmatpush1.bf16.msra.mxu0 %v1221
    %1244 = vmatprep.subr.bf16.mxu0 0
    %1245 = vmatpush1.bf16.msra.mxu0 %v1222
    %1246 = vmatprep.subr.bf16.mxu0 0
    %1247 = vmatpush1.bf16.msra.mxu0 %v1223
    %1248 = vmatprep.subr.bf16.mxu0 0
    %1249 = vmatpush1.bf16.msra.mxu0 0
    %1250 = vmatprep.subr.bf16.mxu0 0
    %1251 = vmatpush1.bf16.msra.mxu0 0
    %1252 = vmatprep.subr.bf16.mxu0 0
    %1253 = vmatpush1.bf16.msra.mxu0 0
    %1254 = vmatprep.subr.bf16.mxu0 0
    %1255 = vmatpush1.bf16.msra.mxu0 0
    %1256 = vmatprep.subr.bf16.mxu0 0
    %1257 = vmatpush1.bf16.msra.mxu0 0
    %1258 = vmatprep.subr.bf16.mxu0 0
    %1259 = vmatpush1.bf16.msra.mxu0 0
    %1260 = vmatprep.subr.bf16.mxu0 0
    %1261 = vmatpush1.bf16.msra.mxu0 0
    %1262 = vmatprep.subr.bf16.mxu0 0
    %1263 = vmatpush1.bf16.msra.mxu0 0
    %1264 = vmatprep.mubr.bf16.mxu0 0
    %1265 = vmatmul.mubr.bf16.gmra.mrb[0].mxu0 %v988
    %v1266 = vpop.f32.mrb[0].mxu0
    %v1267 = vadd.f32 0.0, %v1266
    %v1268 = vpop.f32.mrb[0].mxu0
    %v1269 = vpop.f32.mrb[0].mxu0
    %v1270 = vadd.f32 0.0, %v1269
    %v1271 = vpop.f32.mrb[0].mxu0
    %1272 = vmatprep.mubr.bf16.mxu0 0
    %1273 = vmatmul.mubr.bf16.gmra.mrb[0].mxu0 %v989
    %v1274 = vpop.f32.mrb[0].mxu0
    %v1275 = vadd.f32 0.0, %v1274
    %v1276 = vpop.f32.mrb[0].mxu0
    %v1277 = vpop.f32.mrb[0].mxu0
    %v1278 = vadd.f32 0.0, %v1277
    %v1279 = vpop.f32.mrb[0].mxu0
    %1280 = vdwg.mxu0
    %v1281 = vsub.f32 %v1073, %v1170
    %v1282 = vsub.f32 %v1076, %v1173
    %v1283 = vsub.f32 %v1081, %v1178
    %v1284 = vsub.f32 %v1084, %v1181
    %v1285 = vsub.f32 %v1267, %v1073
    %v1286 = vsub.f32 %v1270, %v1076
    %v1287 = vsub.f32 %v1275, %v1081
    %v1288 = vsub.f32 %v1278, %v1084
    %v1289 = vsub.f32 %v1285, %v1170
    %v1290 = vsub.f32 %v1286, %v1173
    %v1291 = vsub.f32 %v1287, %v1178
    %v1292 = vsub.f32 %v1288, %v1181
    %v1293 = vmul.f32 %v1283, %v1283
    %v1294 = vmul.f32 %v1284, %v1284
    %v1295 = vmul.f32 %v1291, %v1291
    %v1296 = vmul.f32 %v1292, %v1292
    %v1297 = vadd.f32 %v1293, %v1295
    %v1298 = vadd.f32 %v1294, %v1296
    %v1299 = vld [vmem:[#allocation5] sm:$0xff]
    %v1300 = vld [vmem:[#allocation5 + $0x8] sm:$0xff]
    %v1301 = vld [vmem:[#allocation7] sm:$0xff]
    %v1302 = vld [vmem:[#allocation7 + $0x8] sm:$0xff]
    %v1303 = vmul.f32 %v1281, %v1299
    %v1304 = vmul.f32 %v1282, %v1300
    %v1305 = vmul.f32 %v1289, %v1301
    %v1306 = vmul.f32 %v1290, %v1302
    %v1307 = vsub.f32 %v1303, %v1305
    %v1308 = vsub.f32 %v1304, %v1306
    %v1309 = vmul.f32 %v1281, %v1301
    %v1310 = vmul.f32 %v1282, %v1302
    %v1311 = vmul.f32 %v1289, %v1299
    %v1312 = vmul.f32 %v1290, %v1300
    %v1313 = vadd.f32 %v1309, %v1311
    %v1314 = vadd.f32 %v1310, %v1312
    %v1315 = vpack.c.bf16 %v1308, %v1307
    %v1316 = vpack.c.bf16 %v1314, %v1313
    %v1317 = vadd.f32 %v1307, %v1313
    %v1318 = vadd.f32 %v1308, %v1314
    %v1319 = vpack.c.bf16 %v1318, %v1317
    %1320 = vmatprep.subr.bf16.mxu0 0
    %1321 = vmatpush1.bf16.msra.mxu0 %v1315
    %1322 = vmatprep.subr.bf16.mxu0 0
    %1323 = vmatpush1.bf16.msra.mxu0 0
    %1324 = vmatprep.subr.bf16.mxu0 0
    %1325 = vmatpush1.bf16.msra.mxu0 0
    %1326 = vmatprep.subr.bf16.mxu0 0
    %1327 = vmatpush1.bf16.msra.mxu0 0
    %1328 = vmatprep.subr.bf16.mxu0 0
    %1329 = vmatpush1.bf16.msra.mxu0 0
    %1330 = vmatprep.subr.bf16.mxu0 0
    %1331 = vmatpush1.bf16.msra.mxu0 0
    %1332 = vmatprep.subr.bf16.mxu0 0
    %1333 = vmatpush1.bf16.msra.mxu0 0
    %1334 = vmatprep.subr.bf16.mxu0 0
    %1335 = vmatpush1.bf16.msra.mxu0 0
    %1336 = vmatprep.subr.bf16.mxu0 0
    %1337 = vmatpush1.bf16.msra.mxu0 0
    %1338 = vmatprep.subr.bf16.mxu0 0
    %1339 = vmatpush1.bf16.msra.mxu0 0
    %1340 = vmatprep.subr.bf16.mxu0 0
    %1341 = vmatpush1.bf16.msra.mxu0 0
    %1342 = vmatprep.subr.bf16.mxu0 0
    %1343 = vmatpush1.bf16.msra.mxu0 0
    %1344 = vmatprep.subr.bf16.mxu0 0
    %1345 = vmatpush1.bf16.msra.mxu0 0
    %1346 = vmatprep.subr.bf16.mxu0 0
    %1347 = vmatpush1.bf16.msra.mxu0 0
    %1348 = vmatprep.subr.bf16.mxu0 0
    %1349 = vmatpush1.bf16.msra.mxu0 0
    %1350 = vmatprep.subr.bf16.mxu0 0
    %1351 = vmatpush1.bf16.msra.mxu0 0
    %1352 = vmatprep.mubr.bf16.mxu0 0
    %1353 = vmatmul.mubr.bf16.gmra.mrb[0].mxu0 %v419
    %v1354 = vpop.f32.mrb[0].mxu0
    %v1355 = vadd.f32 0.0, %v1354
    %v1356 = vpop.f32.mrb[0].mxu0
    %v1357 = vpop.f32.mrb[0].mxu0
    %v1358 = vadd.f32 0.0, %v1357
    %v1359 = vpop.f32.mrb[0].mxu0
    %1360 = vdwg.mxu0
    %1361 = vmatprep.subr.bf16.mxu0 0
    %1362 = vmatpush1.bf16.msra.mxu0 %v1316
    %1363 = vmatprep.subr.bf16.mxu0 0
    %1364 = vmatpush1.bf16.msra.mxu0 0
    %1365 = vmatprep.subr.bf16.mxu0 0
    %1366 = vmatpush1.bf16.msra.mxu0 0
    %1367 = vmatprep.subr.bf16.mxu0 0
    %1368 = vmatpush1.bf16.msra.mxu0 0
    %1369 = vmatprep.subr.bf16.mxu0 0
    %1370 = vmatpush1.bf16.msra.mxu0 0
    %1371 = vmatprep.subr.bf16.mxu0 0
    %1372 = vmatpush1.bf16.msra.mxu0 0
    %1373 = vmatprep.subr.bf16.mxu0 0
    %1374 = vmatpush1.bf16.msra.mxu0 0
    %1375 = vmatprep.subr.bf16.mxu0 0
    %1376 = vmatpush1.bf16.msra.mxu0 0
    %1377 = vmatprep.subr.bf16.mxu0 0
    %1378 = vmatpush1.bf16.msra.mxu0 0
    %1379 = vmatprep.subr.bf16.mxu0 0
    %1380 = vmatpush1.bf16.msra.mxu0 0
    %1381 = vmatprep.subr.bf16.mxu0 0
    %1382 = vmatpush1.bf16.msra.mxu0 0
    %1383 = vmatprep.subr.bf16.mxu0 0
    %1384 = vmatpush1.bf16.msra.mxu0 0
    %1385 = vmatprep.subr.bf16.mxu0 0
    %1386 = vmatpush1.bf16.msra.mxu0 0
    %1387 = vmatprep.subr.bf16.mxu0 0
    %1388 = vmatpush1.bf16.msra.mxu0 0
    %1389 = vmatprep.subr.bf16.mxu0 0
    %1390 = vmatpush1.bf16.msra.mxu0 0
    %1391 = vmatprep.subr.bf16.mxu0 0
    %1392 = vmatpush1.bf16.msra.mxu0 0
    %1393 = vmatprep.mubr.bf16.mxu0 0
    %1394 = vmatmul.mubr.bf16.gmra.mrb[0].mxu0 %v468
    %v1395 = vpop.f32.mrb[0].mxu0
    %v1396 = vadd.f32 0.0, %v1395
    %v1397 = vpop.f32.mrb[0].mxu0
    %v1398 = vpop.f32.mrb[0].mxu0
    %v1399 = vadd.f32 0.0, %v1398
    %v1400 = vpop.f32.mrb[0].mxu0
    %1401 = vdwg.mxu0
    %v1404 = vunpack.c.l.b16 %v295
    %v1405 = vunpack.c.l.b16 %v296
    %v1406 = vpack.c.b16 %v1405, %v1404
    %v1408 = vsel %vm417, %v1406, 0
    %1410 = vmatprep.subr.bf16.mxu0 0
    %1411 = vmatpush1.bf16.msra.mxu0 %v1319
    %1412 = vmatprep.subr.bf16.mxu0 0
    %1413 = vmatpush1.bf16.msra.mxu0 0
    %1414 = vmatprep.subr.bf16.mxu0 0
    %1415 = vmatpush1.bf16.msra.mxu0 0
    %1416 = vmatprep.subr.bf16.mxu0 0
    %1417 = vmatpush1.bf16.msra.mxu0 0
    %1418 = vmatprep.subr.bf16.mxu0 0
    %1419 = vmatpush1.bf16.msra.mxu0 0
    %1420 = vmatprep.subr.bf16.mxu0 0
    %1421 = vmatpush1.bf16.msra.mxu0 0
    %1422 = vmatprep.subr.bf16.mxu0 0
    %1423 = vmatpush1.bf16.msra.mxu0 0
    %1424 = vmatprep.subr.bf16.mxu0 0
    %1425 = vmatpush1.bf16.msra.mxu0 0
    %1426 = vmatprep.subr.bf16.mxu0 0
    %1427 = vmatpush1.bf16.msra.mxu0 0
    %1428 = vmatprep.subr.bf16.mxu0 0
    %1429 = vmatpush1.bf16.msra.mxu0 0
    %1430 = vmatprep.subr.bf16.mxu0 0
    %1431 = vmatpush1.bf16.msra.mxu0 0
    %1432 = vmatprep.subr.bf16.mxu0 0
    %1433 = vmatpush1.bf16.msra.mxu0 0
    %1434 = vmatprep.subr.bf16.mxu0 0
    %1435 = vmatpush1.bf16.msra.mxu0 0
    %1436 = vmatprep.subr.bf16.mxu0 0
    %1437 = vmatpush1.bf16.msra.mxu0 0
    %1438 = vmatprep.subr.bf16.mxu0 0
    %1439 = vmatpush1.bf16.msra.mxu0 0
    %1440 = vmatprep.subr.bf16.mxu0 0
    %1441 = vmatpush1.bf16.msra.mxu0 0
    %1442 = vmatprep.mubr.bf16.mxu0 0
    %1443 = vmatmul.mubr.bf16.gmra.mrb[0].mxu0 %v1408
    %v1444 = vpop.f32.mrb[0].mxu0
    %v1445 = vadd.f32 0.0, %v1444
    %v1446 = vpop.f32.mrb[0].mxu0
    %v1447 = vpop.f32.mrb[0].mxu0
    %v1448 = vadd.f32 0.0, %v1447
    %v1449 = vpop.f32.mrb[0].mxu0
    %1450 = vdwg.mxu0
    %v1451 = vsub.f32 %v1355, %v1396
    %v1452 = vsub.f32 %v1358, %v1399
    %v1453 = vsub.f32 %v1445, %v1355
    %v1454 = vsub.f32 %v1448, %v1358
    %v1455 = vsub.f32 %v1453, %v1396
    %v1456 = vsub.f32 %v1454, %v1399
    %v1457 = vpack.c.bf16 %v1452, %v1451
    %v1458 = vpack.c.bf16 %v1456, %v1455
    %v1459 = vadd.f32 %v1451, %v1455
    %v1460 = vadd.f32 %v1452, %v1456
    %v1461 = vpack.c.bf16 %v1460, %v1459
    %1462 = vmatprep.subr.bf16.mxu0 0
    %1463 = vmatpush1.bf16.msra.mxu0 %v548
    %1464 = vmatprep.subr.bf16.mxu0 0
    %1465 = vmatpush1.bf16.msra.mxu0 %v549
    %1466 = vmatprep.subr.bf16.mxu0 0
    %1467 = vmatpush1.bf16.msra.mxu0 %v550
    %1468 = vmatprep.subr.bf16.mxu0 0
    %1469 = vmatpush1.bf16.msra.mxu0 %v551
    %1470 = vmatprep.subr.bf16.mxu0 0
    %1471 = vmatpush1.bf16.msra.mxu0 %v552
    %1472 = vmatprep.subr.bf16.mxu0 0
    %1473 = vmatpush1.bf16.msra.mxu0 %v553
    %1474 = vmatprep.subr.bf16.mxu0 0
    %1475 = vmatpush1.bf16.msra.mxu0 %v554
    %1476 = vmatprep.subr.bf16.mxu0 0
    %1477 = vmatpush1.bf16.msra.mxu0 %v555
    %1478 = vmatprep.subr.bf16.mxu0 0
    %1479 = vmatpush1.bf16.msra.mxu0 0
    %1480 = vmatprep.subr.bf16.mxu0 0
    %1481 = vmatpush1.bf16.msra.mxu0 0
    %1482 = vmatprep.subr.bf16.mxu0 0
    %1483 = vmatpush1.bf16.msra.mxu0 0
    %1484 = vmatprep.subr.bf16.mxu0 0
    %1485 = vmatpush1.bf16.msra.mxu0 0
    %1486 = vmatprep.subr.bf16.mxu0 0
    %1487 = vmatpush1.bf16.msra.mxu0 0
    %1488 = vmatprep.subr.bf16.mxu0 0
    %1489 = vmatpush1.bf16.msra.mxu0 0
    %1490 = vmatprep.subr.bf16.mxu0 0
    %1491 = vmatpush1.bf16.msra.mxu0 0
    %1492 = vmatprep.subr.bf16.mxu0 0
    %1493 = vmatpush1.bf16.msra.mxu0 0
    %1494 = vmatprep.mubr.bf16.mxu0 0
    %1495 = vmatmul.mubr.bf16.gmra.mrb[0].mxu0 %v1457
    %v1496 = vpop.f32.mrb[0].mxu0
    %v1497 = vadd.f32 0.0, %v1496
    %v1498 = vpop.f32.mrb[0].mxu0
    %v1499 = vpop.f32.mrb[0].mxu0
    %v1500 = vadd.f32 0.0, %v1499
    %v1501 = vpop.f32.mrb[0].mxu0
    %1502 = vdwg.mxu0
    %1503 = vmatprep.subr.bf16.mxu0 0
    %1504 = vmatpush1.bf16.msra.mxu0 %v637
    %1505 = vmatprep.subr.bf16.mxu0 0
    %1506 = vmatpush1.bf16.msra.mxu0 %v638
    %1507 = vmatprep.subr.bf16.mxu0 0
    %1508 = vmatpush1.bf16.msra.mxu0 %v639
    %1509 = vmatprep.subr.bf16.mxu0 0
    %1510 = vmatpush1.bf16.msra.mxu0 %v640
    %1511 = vmatprep.subr.bf16.mxu0 0
    %1512 = vmatpush1.bf16.msra.mxu0 %v641
    %1513 = vmatprep.subr.bf16.mxu0 0
    %1514 = vmatpush1.bf16.msra.mxu0 %v642
    %1515 = vmatprep.subr.bf16.mxu0 0
    %1516 = vmatpush1.bf16.msra.mxu0 %v643
    %1517 = vmatprep.subr.bf16.mxu0 0
    %1518 = vmatpush1.bf16.msra.mxu0 %v644
    %1519 = vmatprep.subr.bf16.mxu0 0
    %1520 = vmatpush1.bf16.msra.mxu0 0
    %1521 = vmatprep.subr.bf16.mxu0 0
    %1522 = vmatpush1.bf16.msra.mxu0 0
    %1523 = vmatprep.subr.bf16.mxu0 0
    %1524 = vmatpush1.bf16.msra.mxu0 0
    %1525 = vmatprep.subr.bf16.mxu0 0
    %1526 = vmatpush1.bf16.msra.mxu0 0
    %1527 = vmatprep.subr.bf16.mxu0 0
    %1528 = vmatpush1.bf16.msra.mxu0 0
    %1529 = vmatprep.subr.bf16.mxu0 0
    %1530 = vmatpush1.bf16.msra.mxu0 0
    %1531 = vmatprep.subr.bf16.mxu0 0
    %1532 = vmatpush1.bf16.msra.mxu0 0
    %1533 = vmatprep.subr.bf16.mxu0 0
    %1534 = vmatpush1.bf16.msra.mxu0 0
    %1535 = vmatprep.mubr.bf16.mxu0 0
    %1536 = vmatmul.mubr.bf16.gmra.mrb[0].mxu0 %v1458
    %v1537 = vpop.f32.mrb[0].mxu0
    %v1538 = vadd.f32 0.0, %v1537
    %v1539 = vpop.f32.mrb[0].mxu0
    %v1540 = vpop.f32.mrb[0].mxu0
    %v1541 = vadd.f32 0.0, %v1540
    %v1542 = vpop.f32.mrb[0].mxu0
    %1543 = vdwg.mxu0
    %1544 = vmatprep.subr.bf16.mxu0 0
    %1545 = vmatpush1.bf16.msra.mxu0 %v726
    %1546 = vmatprep.subr.bf16.mxu0 0
    %1547 = vmatpush1.bf16.msra.mxu0 %v727
    %1548 = vmatprep.subr.bf16.mxu0 0
    %1549 = vmatpush1.bf16.msra.mxu0 %v728
    %1550 = vmatprep.subr.bf16.mxu0 0
    %1551 = vmatpush1.bf16.msra.mxu0 %v729
    %1552 = vmatprep.subr.bf16.mxu0 0
    %1553 = vmatpush1.bf16.msra.mxu0 %v730
    %1554 = vmatprep.subr.bf16.mxu0 0
    %1555 = vmatpush1.bf16.msra.mxu0 %v731
    %1556 = vmatprep.subr.bf16.mxu0 0
    %1557 = vmatpush1.bf16.msra.mxu0 %v732
    %1558 = vmatprep.subr.bf16.mxu0 0
    %1559 = vmatpush1.bf16.msra.mxu0 %v733
    %1560 = vmatprep.subr.bf16.mxu0 0
    %1561 = vmatpush1.bf16.msra.mxu0 0
    %1562 = vmatprep.subr.bf16.mxu0 0
    %1563 = vmatpush1.bf16.msra.mxu0 0
    %1564 = vmatprep.subr.bf16.mxu0 0
    %1565 = vmatpush1.bf16.msra.mxu0 0
    %1566 = vmatprep.subr.bf16.mxu0 0
    %1567 = vmatpush1.bf16.msra.mxu0 0
    %1568 = vmatprep.subr.bf16.mxu0 0
    %1569 = vmatpush1.bf16.msra.mxu0 0
    %1570 = vmatprep.subr.bf16.mxu0 0
    %1571 = vmatpush1.bf16.msra.mxu0 0
    %1572 = vmatprep.subr.bf16.mxu0 0
    %1573 = vmatpush1.bf16.msra.mxu0 0
    %1574 = vmatprep.subr.bf16.mxu0 0
    %1575 = vmatpush1.bf16.msra.mxu0 0
    %1576 = vmatprep.mubr.bf16.mxu0 0
    %1577 = vmatmul.mubr.bf16.gmra.mrb[0].mxu0 %v1461
    %v1578 = vpop.f32.mrb[0].mxu0
    %v1579 = vadd.f32 0.0, %v1578
    %v1580 = vpop.f32.mrb[0].mxu0
    %v1581 = vpop.f32.mrb[0].mxu0
    %v1582 = vadd.f32 0.0, %v1581
    %v1583 = vpop.f32.mrb[0].mxu0
    %1584 = vdwg.mxu0
    %v1585 = vsub.f32 %v1497, %v1538
    %v1586 = vsub.f32 %v1500, %v1541
    %v1587 = vsub.f32 %v1579, %v1497
    %v1588 = vsub.f32 %v1582, %v1500
    %v1589 = vsub.f32 %v1587, %v1538
    %v1590 = vsub.f32 %v1588, %v1541
    %v1591 = vmul.f32 %v1585, %v397
    %v1592 = vmul.f32 %v1586, %v398
    %v1593 = vmul.f32 %v1589, %v399
    %v1594 = vmul.f32 %v1590, %v400
    %v1595 = vsub.f32 %v1591, %v1593
    %v1596 = vsub.f32 %v1592, %v1594
    %v1597 = vmul.f32 %v1585, %v399
    %v1598 = vmul.f32 %v1586, %v400
    %v1599 = vmul.f32 %v1589, %v397
    %v1600 = vmul.f32 %v1590, %v398
    %v1601 = vadd.f32 %v1597, %v1599
    %v1602 = vadd.f32 %v1598, %v1600
    %v1603 = vpack.c.bf16 %v1596, %v1595
    %v1604 = vpack.c.bf16 %v1602, %v1601
    %v1605 = vadd.f32 %v1595, %v1601
    %v1606 = vadd.f32 %v1596, %v1602
    %v1607 = vpack.c.bf16 %v1606, %v1605
    %1608 = vmatprep.subr.bf16.mxu0 0
    %1609 = vmatpush1.bf16.msra.mxu0 %v1603
    %1610 = vmatprep.subr.bf16.mxu0 0
    %1611 = vmatpush1.bf16.msra.mxu0 0
    %1612 = vmatprep.subr.bf16.mxu0 0
    %1613 = vmatpush1.bf16.msra.mxu0 0
    %1614 = vmatprep.subr.bf16.mxu0 0
    %1615 = vmatpush1.bf16.msra.mxu0 0
    %1616 = vmatprep.subr.bf16.mxu0 0
    %1617 = vmatpush1.bf16.msra.mxu0 0
    %1618 = vmatprep.subr.bf16.mxu0 0
    %1619 = vmatpush1.bf16.msra.mxu0 0
    %1620 = vmatprep.subr.bf16.mxu0 0
    %1621 = vmatpush1.bf16.msra.mxu0 0
    %1622 = vmatprep.subr.bf16.mxu0 0
    %1623 = vmatpush1.bf16.msra.mxu0 0
    %1624 = vmatprep.subr.bf16.mxu0 0
    %1625 = vmatpush1.bf16.msra.mxu0 0
    %1626 = vmatprep.subr.bf16.mxu0 0
    %1627 = vmatpush1.bf16.msra.mxu0 0
    %1628 = vmatprep.subr.bf16.mxu0 0
    %1629 = vmatpush1.bf16.msra.mxu0 0
    %1630 = vmatprep.subr.bf16.mxu0 0
    %1631 = vmatpush1.bf16.msra.mxu0 0
    %1632 = vmatprep.subr.bf16.mxu0 0
    %1633 = vmatpush1.bf16.msra.mxu0 0
    %1634 = vmatprep.subr.bf16.mxu0 0
    %1635 = vmatpush1.bf16.msra.mxu0 0
    %1636 = vmatprep.subr.bf16.mxu0 0
    %1637 = vmatpush1.bf16.msra.mxu0 0
    %1638 = vmatprep.subr.bf16.mxu0 0
    %1639 = vmatpush1.bf16.msra.mxu0 0
    %1640 = vmatprep.mubr.bf16.mxu0 0
    %1641 = vmatmul.mubr.bf16.gmra.mrb[0].mxu0 %v419
    %v1642 = vpop.f32.mrb[0].mxu0
    %v1643 = vadd.f32 0.0, %v1642
    %v1644 = vpop.f32.mrb[0].mxu0
    %v1645 = vpop.f32.mrb[0].mxu0
    %v1646 = vadd.f32 0.0, %v1645
    %v1647 = vpop.f32.mrb[0].mxu0
    %1648 = vdwg.mxu0
    %1649 = vmatprep.subr.bf16.mxu0 0
    %1650 = vmatpush1.bf16.msra.mxu0 %v1604
    %1651 = vmatprep.subr.bf16.mxu0 0
    %1652 = vmatpush1.bf16.msra.mxu0 0
    %1653 = vmatprep.subr.bf16.mxu0 0
    %1654 = vmatpush1.bf16.msra.mxu0 0
    %1655 = vmatprep.subr.bf16.mxu0 0
    %1656 = vmatpush1.bf16.msra.mxu0 0
    %1657 = vmatprep.subr.bf16.mxu0 0
    %1658 = vmatpush1.bf16.msra.mxu0 0
    %1659 = vmatprep.subr.bf16.mxu0 0
    %1660 = vmatpush1.bf16.msra.mxu0 0
    %1661 = vmatprep.subr.bf16.mxu0 0
    %1662 = vmatpush1.bf16.msra.mxu0 0
    %1663 = vmatprep.subr.bf16.mxu0 0
    %1664 = vmatpush1.bf16.msra.mxu0 0
    %1665 = vmatprep.subr.bf16.mxu0 0
    %1666 = vmatpush1.bf16.msra.mxu0 0
    %1667 = vmatprep.subr.bf16.mxu0 0
    %1668 = vmatpush1.bf16.msra.mxu0 0
    %1669 = vmatprep.subr.bf16.mxu0 0
    %1670 = vmatpush1.bf16.msra.mxu0 0
    %1671 = vmatprep.subr.bf16.mxu0 0
    %1672 = vmatpush1.bf16.msra.mxu0 0
    %1673 = vmatprep.subr.bf16.mxu0 0
    %1674 = vmatpush1.bf16.msra.mxu0 0
    %1675 = vmatprep.subr.bf16.mxu0 0
    %1676 = vmatpush1.bf16.msra.mxu0 0
    %1677 = vmatprep.subr.bf16.mxu0 0
    %1678 = vmatpush1.bf16.msra.mxu0 0
    %1679 = vmatprep.subr.bf16.mxu0 0
    %1680 = vmatpush1.bf16.msra.mxu0 0
    %1681 = vmatprep.mubr.bf16.mxu0 0
    %1682 = vmatmul.mubr.bf16.gmra.mrb[0].mxu0 %v872
    %v1683 = vpop.f32.mrb[0].mxu0
    %v1684 = vadd.f32 0.0, %v1683
    %v1685 = vpop.f32.mrb[0].mxu0
    %v1686 = vpop.f32.mrb[0].mxu0
    %v1687 = vadd.f32 0.0, %v1686
    %v1688 = vpop.f32.mrb[0].mxu0
    %1689 = vdwg.mxu0
    %1690 = vmatprep.subr.bf16.mxu0 0
    %1691 = vmatpush1.bf16.msra.mxu0 %v1607
    %1692 = vmatprep.subr.bf16.mxu0 0
    %1693 = vmatpush1.bf16.msra.mxu0 0
    %1694 = vmatprep.subr.bf16.mxu0 0
    %1695 = vmatpush1.bf16.msra.mxu0 0
    %1696 = vmatprep.subr.bf16.mxu0 0
    %1697 = vmatpush1.bf16.msra.mxu0 0
    %1698 = vmatprep.subr.bf16.mxu0 0
    %1699 = vmatpush1.bf16.msra.mxu0 0
    %1700 = vmatprep.subr.bf16.mxu0 0
    %1701 = vmatpush1.bf16.msra.mxu0 0
    %1702 = vmatprep.subr.bf16.mxu0 0
    %1703 = vmatpush1.bf16.msra.mxu0 0
    %1704 = vmatprep.subr.bf16.mxu0 0
    %1705 = vmatpush1.bf16.msra.mxu0 0
    %1706 = vmatprep.subr.bf16.mxu0 0
    %1707 = vmatpush1.bf16.msra.mxu0 0
    %1708 = vmatprep.subr.bf16.mxu0 0
    %1709 = vmatpush1.bf16.msra.mxu0 0
    %1710 = vmatprep.subr.bf16.mxu0 0
    %1711 = vmatpush1.bf16.msra.mxu0 0
    %1712 = vmatprep.subr.bf16.mxu0 0
    %1713 = vmatpush1.bf16.msra.mxu0 0
    %1714 = vmatprep.subr.bf16.mxu0 0
    %1715 = vmatpush1.bf16.msra.mxu0 0
    %1716 = vmatprep.subr.bf16.mxu0 0
    %1717 = vmatpush1.bf16.msra.mxu0 0
    %1718 = vmatprep.subr.bf16.mxu0 0
    %1719 = vmatpush1.bf16.msra.mxu0 0
    %1720 = vmatprep.subr.bf16.mxu0 0
    %1721 = vmatpush1.bf16.msra.mxu0 0
    %1722 = vmatprep.mubr.bf16.mxu0 0
    %1723 = vmatmul.mubr.bf16.gmra.mrb[0].mxu0 %v923
    %v1724 = vpop.f32.mrb[0].mxu0
    %v1725 = vadd.f32 0.0, %v1724
    %v1726 = vpop.f32.mrb[0].mxu0
    %v1727 = vpop.f32.mrb[0].mxu0
    %v1728 = vadd.f32 0.0, %v1727
    %v1729 = vpop.f32.mrb[0].mxu0
    %1730 = vdwg.mxu0
    %v1731 = vsub.f32 %v1643, %v1684
    %v1732 = vsub.f32 %v1646, %v1687
    %v1733 = vsub.f32 %v1725, %v1643
    %v1734 = vsub.f32 %v1728, %v1646
    %v1735 = vsub.f32 %v1733, %v1684
    %v1736 = vsub.f32 %v1734, %v1687
    %v1737 = vpack.c.bf16 %v1732, %v1731
    %v1738 = vpack.c.bf16 %v1736, %v1735
    %v1739 = vadd.f32 %v1731, %v1735
    %v1740 = vadd.f32 %v1732, %v1736
    %v1741 = vpack.c.bf16 %v1740, %v1739
    %1742 = vmatprep.subr.bf16.mxu0 0
    %1743 = vmatpush1.bf16.msra.mxu0 %v1022
    %1744 = vmatprep.subr.bf16.mxu0 0
    %1745 = vmatpush1.bf16.msra.mxu0 %v1023
    %1746 = vmatprep.subr.bf16.mxu0 0
    %1747 = vmatpush1.bf16.msra.mxu0 %v1024
    %1748 = vmatprep.subr.bf16.mxu0 0
    %1749 = vmatpush1.bf16.msra.mxu0 %v1025
    %1750 = vmatprep.subr.bf16.mxu0 0
    %1751 = vmatpush1.bf16.msra.mxu0 %v1026
    %1752 = vmatprep.subr.bf16.mxu0 0
    %1753 = vmatpush1.bf16.msra.mxu0 %v1027
    %1754 = vmatprep.subr.bf16.mxu0 0
    %1755 = vmatpush1.bf16.msra.mxu0 %v1028
    %1756 = vmatprep.subr.bf16.mxu0 0
    %1757 = vmatpush1.bf16.msra.mxu0 %v1029
    %1758 = vmatprep.subr.bf16.mxu0 0
    %1759 = vmatpush1.bf16.msra.mxu0 0
    %1760 = vmatprep.subr.bf16.mxu0 0
    %1761 = vmatpush1.bf16.msra.mxu0 0
    %1762 = vmatprep.subr.bf16.mxu0 0
    %1763 = vmatpush1.bf16.msra.mxu0 0
    %1764 = vmatprep.subr.bf16.mxu0 0
    %1765 = vmatpush1.bf16.msra.mxu0 0
    %1766 = vmatprep.subr.bf16.mxu0 0
    %1767 = vmatpush1.bf16.msra.mxu0 0
    %1768 = vmatprep.subr.bf16.mxu0 0
    %1769 = vmatpush1.bf16.msra.mxu0 0
    %1770 = vmatprep.subr.bf16.mxu0 0
    %1771 = vmatpush1.bf16.msra.mxu0 0
    %1772 = vmatprep.subr.bf16.mxu0 0
    %1773 = vmatpush1.bf16.msra.mxu0 0
    %1774 = vmatprep.mubr.bf16.mxu0 0
    %1775 = vmatmul.mubr.bf16.gmra.mrb[0].mxu0 %v1737
    %v1776 = vpop.f32.mrb[0].mxu0
    %v1777 = vadd.f32 0.0, %v1776
    %v1778 = vpop.f32.mrb[0].mxu0
    %v1779 = vpop.f32.mrb[0].mxu0
    %v1780 = vadd.f32 0.0, %v1779
    %v1781 = vpop.f32.mrb[0].mxu0
    %1782 = vdwg.mxu0
    %1783 = vmatprep.subr.bf16.mxu0 0
    %1784 = vmatpush1.bf16.msra.mxu0 %v1119
    %1785 = vmatprep.subr.bf16.mxu0 0
    %1786 = vmatpush1.bf16.msra.mxu0 %v1120
    %1787 = vmatprep.subr.bf16.mxu0 0
    %1788 = vmatpush1.bf16.msra.mxu0 %v1121
    %1789 = vmatprep.subr.bf16.mxu0 0
    %1790 = vmatpush1.bf16.msra.mxu0 %v1122
    %1791 = vmatprep.subr.bf16.mxu0 0
    %1792 = vmatpush1.bf16.msra.mxu0 %v1123
    %1793 = vmatprep.subr.bf16.mxu0 0
    %1794 = vmatpush1.bf16.msra.mxu0 %v1124
    %1795 = vmatprep.subr.bf16.mxu0 0
    %1796 = vmatpush1.bf16.msra.mxu0 %v1125
    %1797 = vmatprep.subr.bf16.mxu0 0
    %1798 = vmatpush1.bf16.msra.mxu0 %v1126
    %1799 = vmatprep.subr.bf16.mxu0 0
    %1800 = vmatpush1.bf16.msra.mxu0 0
    %1801 = vmatprep.subr.bf16.mxu0 0
    %1802 = vmatpush1.bf16.msra.mxu0 0
    %1803 = vmatprep.subr.bf16.mxu0 0
    %1804 = vmatpush1.bf16.msra.mxu0 0
    %1805 = vmatprep.subr.bf16.mxu0 0
    %1806 = vmatpush1.bf16.msra.mxu0 0
    %1807 = vmatprep.subr.bf16.mxu0 0
    %1808 = vmatpush1.bf16.msra.mxu0 0
    %1809 = vmatprep.subr.bf16.mxu0 0
    %1810 = vmatpush1.bf16.msra.mxu0 0
    %1811 = vmatprep.subr.bf16.mxu0 0
    %1812 = vmatpush1.bf16.msra.mxu0 0
    %1813 = vmatprep.subr.bf16.mxu0 0
    %1814 = vmatpush1.bf16.msra.mxu0 0
    %1815 = vmatprep.mubr.bf16.mxu0 0
    %1816 = vmatmul.mubr.bf16.gmra.mrb[0].mxu0 %v1738
    %v1817 = vpop.f32.mrb[0].mxu0
    %v1818 = vadd.f32 0.0, %v1817
    %v1819 = vpop.f32.mrb[0].mxu0
    %v1820 = vpop.f32.mrb[0].mxu0
    %v1821 = vadd.f32 0.0, %v1820
    %v1822 = vpop.f32.mrb[0].mxu0
    %1823 = vdwg.mxu0
    %1824 = vmatprep.subr.bf16.mxu0 0
    %1825 = vmatpush1.bf16.msra.mxu0 %v1216
    %1826 = vmatprep.subr.bf16.mxu0 0
    %1827 = vmatpush1.bf16.msra.mxu0 %v1217
    %1828 = vmatprep.subr.bf16.mxu0 0
    %1829 = vmatpush1.bf16.msra.mxu0 %v1218
    %1830 = vmatprep.subr.bf16.mxu0 0
    %1831 = vmatpush1.bf16.msra.mxu0 %v1219
    %1832 = vmatprep.subr.bf16.mxu0 0
    %1833 = vmatpush1.bf16.msra.mxu0 %v1220
    %1834 = vmatprep.subr.bf16.mxu0 0
    %1835 = vmatpush1.bf16.msra.mxu0 %v1221
    %1836 = vmatprep.subr.bf16.mxu0 0
    %1837 = vmatpush1.bf16.msra.mxu0 %v1222
    %1838 = vmatprep.subr.bf16.mxu0 0
    %1839 = vmatpush1.bf16.msra.mxu0 %v1223
    %1840 = vmatprep.subr.bf16.mxu0 0
    %1841 = vmatpush1.bf16.msra.mxu0 0
    %1842 = vmatprep.subr.bf16.mxu0 0
    %1843 = vmatpush1.bf16.msra.mxu0 0
    %1844 = vmatprep.subr.bf16.mxu0 0
    %1845 = vmatpush1.bf16.msra.mxu0 0
    %1846 = vmatprep.subr.bf16.mxu0 0
    %1847 = vmatpush1.bf16.msra.mxu0 0
    %1848 = vmatprep.subr.bf16.mxu0 0
    %1849 = vmatpush1.bf16.msra.mxu0 0
    %1850 = vmatprep.subr.bf16.mxu0 0
    %1851 = vmatpush1.bf16.msra.mxu0 0
    %1852 = vmatprep.subr.bf16.mxu0 0
    %1853 = vmatpush1.bf16.msra.mxu0 0
    %1854 = vmatprep.subr.bf16.mxu0 0
    %1855 = vmatpush1.bf16.msra.mxu0 0
    %1856 = vmatprep.mubr.bf16.mxu0 0
    %1857 = vmatmul.mubr.bf16.gmra.mrb[0].mxu0 %v1741
    %v1858 = vpop.f32.mrb[0].mxu0
    %v1859 = vadd.f32 0.0, %v1858
    %v1860 = vpop.f32.mrb[0].mxu0
    %v1861 = vpop.f32.mrb[0].mxu0
    %v1862 = vadd.f32 0.0, %v1861
    %v1863 = vpop.f32.mrb[0].mxu0
    %1864 = vdwg.mxu0
    %v1865 = vsub.f32 %v1777, %v1818
    %v1866 = vsub.f32 %v1780, %v1821
    %v1867 = vsub.f32 %v1859, %v1777
    %v1868 = vsub.f32 %v1862, %v1780
    %v1869 = vsub.f32 %v1867, %v1818
    %v1870 = vsub.f32 %v1868, %v1821
    %v1871 = vmul.f32 %v1865, %v1865
    %v1872 = vmul.f32 %v1866, %v1866
    %v1873 = vmul.f32 %v1869, %v1869
    %v1874 = vmul.f32 %v1870, %v1870
    %v1875 = vadd.f32 %v1871, %v1873
    %v1876 = vadd.f32 %v1872, %v1874
    %v1877 = vmul.f32 %v1297, 0.5
    %v1878 = vmul.f32 %v1298, 0.5
    %v1879 = vmul.f32 %v1875, 0.5
    %v1880 = vmul.f32 %v1876, 0.5
    %v1881 = vadd.f32 %v1877, %v1879
    %v1882 = vadd.f32 %v1878, %v1880
    %v1883 = vadd.f32 %v1881, %v1882
    %1884 = vadd.xlane.f32.xlu0 %v1883
    %v1885 = vpop.xlane.xlu0 %1884
    %v1886 = vrot.slane %v1885, 4
    %v1887 = vadd.f32 %v1885, %v1886
    %v1888 = vrot.slane %v1887, 2
    %v1889 = vadd.f32 %v1887, %v1888
    %v1890 = vrot.slane %v1889, 1
    %v1891 = vadd.f32 %v1889, %v1890
    %s1892 = vtos %v1891
    %s1893 = smul.f32 %s1892, 0.00048828125
    %v1894 = vmul.f32 %v1881, %v1881
    %v1895 = vmul.f32 %v1882, %v1882
    %v1896 = vadd.f32 %v1894, %v1895
    %1897 = vadd.xlane.f32.xlu0 %v1896
    %v1898 = vpop.xlane.xlu0 %1897
    %v1899 = vrot.slane %v1898, 4
    %v1900 = vadd.f32 %v1898, %v1899
    %v1901 = vrot.slane %v1900, 2
    %v1902 = vadd.f32 %v1900, %v1901
    %v1903 = vrot.slane %v1902, 1
    %v1904 = vadd.f32 %v1902, %v1903
    %s1905 = vtos %v1904
    %s1906 = smul.f32 %s1905, 0.00048828125
    %s1907 = smul.f32 %s1893, %s1893
    %s1908 = ssub.f32 %s1906, %s1907
    %s1909 = smax.f32 %s1908, 0.0
    %v1910 = vstv %s1893
    %v1911 = vsub.f32 %v1881, %v1910
    %v1912 = vsub.f32 %v1882, %v1910
    %s1913 = sadd.f32 %s1909, 1e-05
    %v1914 = vstv %s1913
    %v1915 = vrsqrt.pop %v1914
    %s1916 = vtos %v1915
    %v1917 = vstv %s1916
    %v1918 = vmul.f32 %v1911, %v1917
    %v1919 = vmul.f32 %v1912, %v1917
    %v1920 = vpack.c.bf16 %v1919, %v1918
    %1921 = vmatprep.subr.bf16.mxu0 0
    %1922 = vmatpush1.bf16.msra.mxu0 %v1920
    %1923 = vmatprep.subr.bf16.mxu0 0
    %1924 = vmatpush1.bf16.msra.mxu0 0
    %1925 = vmatprep.subr.bf16.mxu0 0
    %1926 = vmatpush1.bf16.msra.mxu0 0
    %1927 = vmatprep.subr.bf16.mxu0 0
    %1928 = vmatpush1.bf16.msra.mxu0 0
    %1929 = vmatprep.subr.bf16.mxu0 0
    %1930 = vmatpush1.bf16.msra.mxu0 0
    %1931 = vmatprep.subr.bf16.mxu0 0
    %1932 = vmatpush1.bf16.msra.mxu0 0
    %1933 = vmatprep.subr.bf16.mxu0 0
    %1934 = vmatpush1.bf16.msra.mxu0 0
    %1935 = vmatprep.subr.bf16.mxu0 0
    %1936 = vmatpush1.bf16.msra.mxu0 0
    %1937 = vmatprep.subr.bf16.mxu0 0
    %1938 = vmatpush1.bf16.msra.mxu0 0
    %1939 = vmatprep.subr.bf16.mxu0 0
    %1940 = vmatpush1.bf16.msra.mxu0 0
    %1941 = vmatprep.subr.bf16.mxu0 0
    %1942 = vmatpush1.bf16.msra.mxu0 0
    %1943 = vmatprep.subr.bf16.mxu0 0
    %1944 = vmatpush1.bf16.msra.mxu0 0
    %1945 = vmatprep.subr.bf16.mxu0 0
    %1946 = vmatpush1.bf16.msra.mxu0 0
    %1947 = vmatprep.subr.bf16.mxu0 0
    %1948 = vmatpush1.bf16.msra.mxu0 0
    %1949 = vmatprep.subr.bf16.mxu0 0
    %1950 = vmatpush1.bf16.msra.mxu0 0
    %1951 = vmatprep.subr.bf16.mxu0 0
    %1952 = vmatpush1.bf16.msra.mxu0 0
    %1953 = vmatprep.mubr.bf16.mxu0 0
    %1954 = vmatmul.mubr.bf16.gmra.mrb[0].mxu0 %v419
    %v1955 = vpop.f32.mrb[0].mxu0
    %v1956 = vadd.f32 0.0, %v1955
    %v1957 = vpop.f32.mrb[0].mxu0
    %v1958 = vpop.f32.mrb[0].mxu0
    %v1959 = vadd.f32 0.0, %v1958
    %v1960 = vpop.f32.mrb[0].mxu0
    %1961 = vdwg.mxu0
    %1962 = vmatprep.subr.bf16.mxu0 0
    %1963 = vmatpush1.bf16.msra.mxu0 %v1920
    %1964 = vmatprep.subr.bf16.mxu0 0
    %1965 = vmatpush1.bf16.msra.mxu0 0
    %1966 = vmatprep.subr.bf16.mxu0 0
    %1967 = vmatpush1.bf16.msra.mxu0 0
    %1968 = vmatprep.subr.bf16.mxu0 0
    %1969 = vmatpush1.bf16.msra.mxu0 0
    %1970 = vmatprep.subr.bf16.mxu0 0
    %1971 = vmatpush1.bf16.msra.mxu0 0
    %1972 = vmatprep.subr.bf16.mxu0 0
    %1973 = vmatpush1.bf16.msra.mxu0 0
    %1974 = vmatprep.subr.bf16.mxu0 0
    %1975 = vmatpush1.bf16.msra.mxu0 0
    %1976 = vmatprep.subr.bf16.mxu0 0
    %1977 = vmatpush1.bf16.msra.mxu0 0
    %1978 = vmatprep.subr.bf16.mxu0 0
    %1979 = vmatpush1.bf16.msra.mxu0 0
    %1980 = vmatprep.subr.bf16.mxu0 0
    %1981 = vmatpush1.bf16.msra.mxu0 0
    %1982 = vmatprep.subr.bf16.mxu0 0
    %1983 = vmatpush1.bf16.msra.mxu0 0
    %1984 = vmatprep.subr.bf16.mxu0 0
    %1985 = vmatpush1.bf16.msra.mxu0 0
    %1986 = vmatprep.subr.bf16.mxu0 0
    %1987 = vmatpush1.bf16.msra.mxu0 0
    %1988 = vmatprep.subr.bf16.mxu0 0
    %1989 = vmatpush1.bf16.msra.mxu0 0
    %1990 = vmatprep.subr.bf16.mxu0 0
    %1991 = vmatpush1.bf16.msra.mxu0 0
    %1992 = vmatprep.subr.bf16.mxu0 0
    %1993 = vmatpush1.bf16.msra.mxu0 0
    %1994 = vmatprep.mubr.bf16.mxu0 0
    %1995 = vmatmul.mubr.bf16.gmra.mrb[0].mxu0 %v468
    %v1996 = vpop.f32.mrb[0].mxu0
    %v1997 = vadd.f32 0.0, %v1996
    %v1998 = vpop.f32.mrb[0].mxu0
    %v1999 = vpop.f32.mrb[0].mxu0
    %v2000 = vadd.f32 0.0, %v1999
    %v2001 = vpop.f32.mrb[0].mxu0
    %2002 = vdwg.mxu0
    %v2003 = vpack.c.bf16 %v1959, %v1956
    %v2004 = vpack.c.bf16 %v2000, %v1997
    %v2005 = vadd.f32 %v1956, %v1997
    %v2006 = vadd.f32 %v1959, %v2000
    %v2007 = vpack.c.bf16 %v2006, %v2005
    %2008 = vmatprep.subr.bf16.mxu0 0
    %2009 = vmatpush1.bf16.msra.mxu0 %v548
    %2010 = vmatprep.subr.bf16.mxu0 0
    %2011 = vmatpush1.bf16.msra.mxu0 %v549
    %2012 = vmatprep.subr.bf16.mxu0 0
    %2013 = vmatpush1.bf16.msra.mxu0 %v550
    %2014 = vmatprep.subr.bf16.mxu0 0
    %2015 = vmatpush1.bf16.msra.mxu0 %v551
    %2016 = vmatprep.subr.bf16.mxu0 0
    %2017 = vmatpush1.bf16.msra.mxu0 %v552
    %2018 = vmatprep.subr.bf16.mxu0 0
    %2019 = vmatpush1.bf16.msra.mxu0 %v553
    %2020 = vmatprep.subr.bf16.mxu0 0
    %2021 = vmatpush1.bf16.msra.mxu0 %v554
    %2022 = vmatprep.subr.bf16.mxu0 0
    %2023 = vmatpush1.bf16.msra.mxu0 %v555
    %2024 = vmatprep.subr.bf16.mxu0 0
    %2025 = vmatpush1.bf16.msra.mxu0 0
    %2026 = vmatprep.subr.bf16.mxu0 0
    %2027 = vmatpush1.bf16.msra.mxu0 0
    %2028 = vmatprep.subr.bf16.mxu0 0
    %2029 = vmatpush1.bf16.msra.mxu0 0
    %2030 = vmatprep.subr.bf16.mxu0 0
    %2031 = vmatpush1.bf16.msra.mxu0 0
    %2032 = vmatprep.subr.bf16.mxu0 0
    %2033 = vmatpush1.bf16.msra.mxu0 0
    %2034 = vmatprep.subr.bf16.mxu0 0
    %2035 = vmatpush1.bf16.msra.mxu0 0
    %2036 = vmatprep.subr.bf16.mxu0 0
    %2037 = vmatpush1.bf16.msra.mxu0 0
    %2038 = vmatprep.subr.bf16.mxu0 0
    %2039 = vmatpush1.bf16.msra.mxu0 0
    %2040 = vmatprep.mubr.bf16.mxu0 0
    %2041 = vmatmul.mubr.bf16.gmra.mrb[0].mxu0 %v2003
    %v2042 = vpop.f32.mrb[0].mxu0
    %v2043 = vadd.f32 0.0, %v2042
    %v2044 = vpop.f32.mrb[0].mxu0
    %v2045 = vpop.f32.mrb[0].mxu0
    %v2046 = vadd.f32 0.0, %v2045
    %v2047 = vpop.f32.mrb[0].mxu0
    %2048 = vdwg.mxu0
    %2049 = vmatprep.subr.bf16.mxu0 0
    %2050 = vmatpush1.bf16.msra.mxu0 %v637
    %2051 = vmatprep.subr.bf16.mxu0 0
    %2052 = vmatpush1.bf16.msra.mxu0 %v638
    %2053 = vmatprep.subr.bf16.mxu0 0
    %2054 = vmatpush1.bf16.msra.mxu0 %v639
    %2055 = vmatprep.subr.bf16.mxu0 0
    %2056 = vmatpush1.bf16.msra.mxu0 %v640
    %2057 = vmatprep.subr.bf16.mxu0 0
    %2058 = vmatpush1.bf16.msra.mxu0 %v641
    %2059 = vmatprep.subr.bf16.mxu0 0
    %2060 = vmatpush1.bf16.msra.mxu0 %v642
    %2061 = vmatprep.subr.bf16.mxu0 0
    %2062 = vmatpush1.bf16.msra.mxu0 %v643
    %2063 = vmatprep.subr.bf16.mxu0 0
    %2064 = vmatpush1.bf16.msra.mxu0 %v644
    %2065 = vmatprep.subr.bf16.mxu0 0
    %2066 = vmatpush1.bf16.msra.mxu0 0
    %2067 = vmatprep.subr.bf16.mxu0 0
    %2068 = vmatpush1.bf16.msra.mxu0 0
    %2069 = vmatprep.subr.bf16.mxu0 0
    %2070 = vmatpush1.bf16.msra.mxu0 0
    %2071 = vmatprep.subr.bf16.mxu0 0
    %2072 = vmatpush1.bf16.msra.mxu0 0
    %2073 = vmatprep.subr.bf16.mxu0 0
    %2074 = vmatpush1.bf16.msra.mxu0 0
    %2075 = vmatprep.subr.bf16.mxu0 0
    %2076 = vmatpush1.bf16.msra.mxu0 0
    %2077 = vmatprep.subr.bf16.mxu0 0
    %2078 = vmatpush1.bf16.msra.mxu0 0
    %2079 = vmatprep.subr.bf16.mxu0 0
    %2080 = vmatpush1.bf16.msra.mxu0 0
    %2081 = vmatprep.mubr.bf16.mxu0 0
    %2082 = vmatmul.mubr.bf16.gmra.mrb[0].mxu0 %v2004
    %v2083 = vpop.f32.mrb[0].mxu0
    %v2084 = vadd.f32 0.0, %v2083
    %v2085 = vpop.f32.mrb[0].mxu0
    %v2086 = vpop.f32.mrb[0].mxu0
    %v2087 = vadd.f32 0.0, %v2086
    %v2088 = vpop.f32.mrb[0].mxu0
    %2089 = vdwg.mxu0
    %2090 = vmatprep.subr.bf16.mxu0 0
    %2091 = vmatpush1.bf16.msra.mxu0 %v726
    %2092 = vmatprep.subr.bf16.mxu0 0
    %2093 = vmatpush1.bf16.msra.mxu0 %v727
    %2094 = vmatprep.subr.bf16.mxu0 0
    %2095 = vmatpush1.bf16.msra.mxu0 %v728
    %2096 = vmatprep.subr.bf16.mxu0 0
    %2097 = vmatpush1.bf16.msra.mxu0 %v729
    %2098 = vmatprep.subr.bf16.mxu0 0
    %2099 = vmatpush1.bf16.msra.mxu0 %v730
    %2100 = vmatprep.subr.bf16.mxu0 0
    %2101 = vmatpush1.bf16.msra.mxu0 %v731
    %2102 = vmatprep.subr.bf16.mxu0 0
    %2103 = vmatpush1.bf16.msra.mxu0 %v732
    %2104 = vmatprep.subr.bf16.mxu0 0
    %2105 = vmatpush1.bf16.msra.mxu0 %v733
    %2106 = vmatprep.subr.bf16.mxu0 0
    %2107 = vmatpush1.bf16.msra.mxu0 0
    %2108 = vmatprep.subr.bf16.mxu0 0
    %2109 = vmatpush1.bf16.msra.mxu0 0
    %2110 = vmatprep.subr.bf16.mxu0 0
    %2111 = vmatpush1.bf16.msra.mxu0 0
    %2112 = vmatprep.subr.bf16.mxu0 0
    %2113 = vmatpush1.bf16.msra.mxu0 0
    %2114 = vmatprep.subr.bf16.mxu0 0
    %2115 = vmatpush1.bf16.msra.mxu0 0
    %2116 = vmatprep.subr.bf16.mxu0 0
    %2117 = vmatpush1.bf16.msra.mxu0 0
    %2118 = vmatprep.subr.bf16.mxu0 0
    %2119 = vmatpush1.bf16.msra.mxu0 0
    %2120 = vmatprep.subr.bf16.mxu0 0
    %2121 = vmatpush1.bf16.msra.mxu0 0
    %2122 = vmatprep.mubr.bf16.mxu0 0
    %2123 = vmatmul.mubr.bf16.gmra.mrb[0].mxu0 %v2007
    %v2124 = vpop.f32.mrb[0].mxu0
    %v2125 = vadd.f32 0.0, %v2124
    %v2126 = vpop.f32.mrb[0].mxu0
    %v2127 = vpop.f32.mrb[0].mxu0
    %v2128 = vadd.f32 0.0, %v2127
    %v2129 = vpop.f32.mrb[0].mxu0
    %2130 = vdwg.mxu0
    %v2131 = vsub.f32 %v2043, %v2084
    %v2132 = vsub.f32 %v2046, %v2087
    %v2133 = vsub.f32 %v2125, %v2043
    %v2134 = vsub.f32 %v2128, %v2046
    %v2135 = vsub.f32 %v2133, %v2084
    %v2136 = vsub.f32 %v2134, %v2087
    %v2137 = vmul.f32 %v2131, %v401
    %v2138 = vmul.f32 %v2131, %v402
    %v2139 = vmul.f32 %v2132, %v403
    %v2140 = vmul.f32 %v2132, %v404
    %v2141 = vmul.f32 %v2135, %v405
    %v2142 = vmul.f32 %v2135, %v406
    %v2143 = vmul.f32 %v2136, %v407
    %v2144 = vmul.f32 %v2136, %v408
    %v2145 = vsub.f32 %v2137, %v2141
    %v2146 = vsub.f32 %v2138, %v2142
    %v2147 = vsub.f32 %v2139, %v2143
    %v2148 = vsub.f32 %v2140, %v2144
    %v2149 = vmul.f32 %v2131, %v405
    %v2150 = vmul.f32 %v2131, %v406
    %v2151 = vmul.f32 %v2132, %v407
    %v2152 = vmul.f32 %v2132, %v408
    %v2153 = vmul.f32 %v2135, %v401
    %v2154 = vmul.f32 %v2135, %v402
    %v2155 = vmul.f32 %v2136, %v403
    %v2156 = vmul.f32 %v2136, %v404
    %v2157 = vadd.f32 %v2149, %v2153
    %v2158 = vadd.f32 %v2150, %v2154
    %v2159 = vadd.f32 %v2151, %v2155
    %v2160 = vadd.f32 %v2152, %v2156
    %v2161 = vpack.c.bf16 %v2147, %v2145
    %v2162 = vpack.c.bf16 %v2148, %v2146
    %v2163 = vpack.c.bf16 %v2159, %v2157
    %v2164 = vpack.c.bf16 %v2160, %v2158
    %v2165 = vadd.f32 %v2145, %v2157
    %v2166 = vadd.f32 %v2146, %v2158
    %v2167 = vadd.f32 %v2147, %v2159
    %v2168 = vadd.f32 %v2148, %v2160
    %v2169 = vpack.c.bf16 %v2167, %v2165
    %v2170 = vpack.c.bf16 %v2168, %v2166
    %2171 = vmatprep.subr.bf16.mxu0 %v2162
    %2172 = vmatpush1.bf16.msra.mxu0 %v2161
    %2173 = vmatprep.subr.bf16.mxu0 0
    %2174 = vmatpush1.bf16.msra.mxu0 0
    %2175 = vmatprep.subr.bf16.mxu0 0
    %2176 = vmatpush1.bf16.msra.mxu0 0
    %2177 = vmatprep.subr.bf16.mxu0 0
    %2178 = vmatpush1.bf16.msra.mxu0 0
    %2179 = vmatprep.subr.bf16.mxu0 0
    %2180 = vmatpush1.bf16.msra.mxu0 0
    %2181 = vmatprep.subr.bf16.mxu0 0
    %2182 = vmatpush1.bf16.msra.mxu0 0
    %2183 = vmatprep.subr.bf16.mxu0 0
    %2184 = vmatpush1.bf16.msra.mxu0 0
    %2185 = vmatprep.subr.bf16.mxu0 0
    %2186 = vmatpush1.bf16.msra.mxu0 0
    %2187 = vmatprep.subr.bf16.mxu0 0
    %2188 = vmatpush1.bf16.msra.mxu0 0
    %2189 = vmatprep.subr.bf16.mxu0 0
    %2190 = vmatpush1.bf16.msra.mxu0 0
    %2191 = vmatprep.subr.bf16.mxu0 0
    %2192 = vmatpush1.bf16.msra.mxu0 0
    %2193 = vmatprep.subr.bf16.mxu0 0
    %2194 = vmatpush1.bf16.msra.mxu0 0
    %2195 = vmatprep.subr.bf16.mxu0 0
    %2196 = vmatpush1.bf16.msra.mxu0 0
    %2197 = vmatprep.subr.bf16.mxu0 0
    %2198 = vmatpush1.bf16.msra.mxu0 0
    %2199 = vmatprep.subr.bf16.mxu0 0
    %2200 = vmatpush1.bf16.msra.mxu0 0
    %2201 = vmatprep.subr.bf16.mxu0 0
    %2202 = vmatpush1.bf16.msra.mxu0 0
    %2203 = vmatprep.mubr.bf16.mxu0 0
    %2204 = vmatmul.mubr.bf16.gmra.mrb[0].mxu0 %v419
    %v2205 = vpop.f32.mrb[0].mxu0
    %v2206 = vadd.f32 0.0, %v2205
    %v2207 = vpop.f32.mrb[0].mxu0
    %v2208 = vadd.f32 0.0, %v2207
    %v2209 = vpop.f32.mrb[0].mxu0
    %v2210 = vadd.f32 0.0, %v2209
    %v2211 = vpop.f32.mrb[0].mxu0
    %v2212 = vadd.f32 0.0, %v2211
    %2213 = vdwg.mxu0
    %2214 = vmatprep.subr.bf16.mxu0 %v2164
    %2215 = vmatpush1.bf16.msra.mxu0 %v2163
    %2216 = vmatprep.subr.bf16.mxu0 0
    %2217 = vmatpush1.bf16.msra.mxu0 0
    %2218 = vmatprep.subr.bf16.mxu0 0
    %2219 = vmatpush1.bf16.msra.mxu0 0
    %2220 = vmatprep.subr.bf16.mxu0 0
    %2221 = vmatpush1.bf16.msra.mxu0 0
    %2222 = vmatprep.subr.bf16.mxu0 0
    %2223 = vmatpush1.bf16.msra.mxu0 0
    %2224 = vmatprep.subr.bf16.mxu0 0
    %2225 = vmatpush1.bf16.msra.mxu0 0
    %2226 = vmatprep.subr.bf16.mxu0 0
    %2227 = vmatpush1.bf16.msra.mxu0 0
    %2228 = vmatprep.subr.bf16.mxu0 0
    %2229 = vmatpush1.bf16.msra.mxu0 0
    %2230 = vmatprep.subr.bf16.mxu0 0
    %2231 = vmatpush1.bf16.msra.mxu0 0
    %2232 = vmatprep.subr.bf16.mxu0 0
    %2233 = vmatpush1.bf16.msra.mxu0 0
    %2234 = vmatprep.subr.bf16.mxu0 0
    %2235 = vmatpush1.bf16.msra.mxu0 0
    %2236 = vmatprep.subr.bf16.mxu0 0
    %2237 = vmatpush1.bf16.msra.mxu0 0
    %2238 = vmatprep.subr.bf16.mxu0 0
    %2239 = vmatpush1.bf16.msra.mxu0 0
    %2240 = vmatprep.subr.bf16.mxu0 0
    %2241 = vmatpush1.bf16.msra.mxu0 0
    %2242 = vmatprep.subr.bf16.mxu0 0
    %2243 = vmatpush1.bf16.msra.mxu0 0
    %2244 = vmatprep.subr.bf16.mxu0 0
    %2245 = vmatpush1.bf16.msra.mxu0 0
    %2246 = vmatprep.mubr.bf16.mxu0 0
    %2247 = vmatmul.mubr.bf16.gmra.mrb[0].mxu0 %v872
    %v2248 = vpop.f32.mrb[0].mxu0
    %v2249 = vadd.f32 0.0, %v2248
    %v2250 = vpop.f32.mrb[0].mxu0
    %v2251 = vadd.f32 0.0, %v2250
    %v2252 = vpop.f32.mrb[0].mxu0
    %v2253 = vadd.f32 0.0, %v2252
    %v2254 = vpop.f32.mrb[0].mxu0
    %v2255 = vadd.f32 0.0, %v2254
    %2256 = vdwg.mxu0
    %2257 = vmatprep.subr.bf16.mxu0 %v2170
    %2258 = vmatpush1.bf16.msra.mxu0 %v2169
    %2259 = vmatprep.subr.bf16.mxu0 0
    %2260 = vmatpush1.bf16.msra.mxu0 0
    %2261 = vmatprep.subr.bf16.mxu0 0
    %2262 = vmatpush1.bf16.msra.mxu0 0
    %2263 = vmatprep.subr.bf16.mxu0 0
    %2264 = vmatpush1.bf16.msra.mxu0 0
    %2265 = vmatprep.subr.bf16.mxu0 0
    %2266 = vmatpush1.bf16.msra.mxu0 0
    %2267 = vmatprep.subr.bf16.mxu0 0
    %2268 = vmatpush1.bf16.msra.mxu0 0
    %2269 = vmatprep.subr.bf16.mxu0 0
    %2270 = vmatpush1.bf16.msra.mxu0 0
    %2271 = vmatprep.subr.bf16.mxu0 0
    %2272 = vmatpush1.bf16.msra.mxu0 0
    %2273 = vmatprep.subr.bf16.mxu0 0
    %2274 = vmatpush1.bf16.msra.mxu0 0
    %2275 = vmatprep.subr.bf16.mxu0 0
    %2276 = vmatpush1.bf16.msra.mxu0 0
    %2277 = vmatprep.subr.bf16.mxu0 0
    %2278 = vmatpush1.bf16.msra.mxu0 0
    %2279 = vmatprep.subr.bf16.mxu0 0
    %2280 = vmatpush1.bf16.msra.mxu0 0
    %2281 = vmatprep.subr.bf16.mxu0 0
    %2282 = vmatpush1.bf16.msra.mxu0 0
    %2283 = vmatprep.subr.bf16.mxu0 0
    %2284 = vmatpush1.bf16.msra.mxu0 0
    %2285 = vmatprep.subr.bf16.mxu0 0
    %2286 = vmatpush1.bf16.msra.mxu0 0
    %2287 = vmatprep.subr.bf16.mxu0 0
    %2288 = vmatpush1.bf16.msra.mxu0 0
    %2289 = vmatprep.mubr.bf16.mxu0 0
    %2290 = vmatmul.mubr.bf16.gmra.mrb[0].mxu0 %v923
    %v2291 = vpop.f32.mrb[0].mxu0
    %v2292 = vadd.f32 0.0, %v2291
    %v2293 = vpop.f32.mrb[0].mxu0
    %v2294 = vadd.f32 0.0, %v2293
    %v2295 = vpop.f32.mrb[0].mxu0
    %v2296 = vadd.f32 0.0, %v2295
    %v2297 = vpop.f32.mrb[0].mxu0
    %v2298 = vadd.f32 0.0, %v2297
    %2299 = vdwg.mxu0
    %v2300 = vsub.f32 %v2206, %v2249
    %v2301 = vsub.f32 %v2208, %v2251
    %v2302 = vsub.f32 %v2210, %v2253
    %v2303 = vsub.f32 %v2212, %v2255
    %v2304 = vsub.f32 %v2292, %v2206
    %v2305 = vsub.f32 %v2294, %v2208
    %v2306 = vsub.f32 %v2296, %v2210
    %v2307 = vsub.f32 %v2298, %v2212
    %v2308 = vsub.f32 %v2304, %v2249
    %v2309 = vsub.f32 %v2305, %v2251
    %v2310 = vsub.f32 %v2306, %v2253
    %v2311 = vsub.f32 %v2307, %v2255
    %v2312 = vpack.c.bf16 %v2302, %v2300
    %v2313 = vpack.c.bf16 %v2303, %v2301
    %v2314 = vpack.c.bf16 %v2310, %v2308
    %v2315 = vpack.c.bf16 %v2311, %v2309
    %v2316 = vadd.f32 %v2300, %v2308
    %v2317 = vadd.f32 %v2302, %v2310
    %v2318 = vadd.f32 %v2301, %v2309
    %v2319 = vadd.f32 %v2303, %v2311
    %v2320 = vpack.c.bf16 %v2317, %v2316
    %v2321 = vpack.c.bf16 %v2319, %v2318
    %2322 = vmatprep.subr.bf16.mxu0 0
    %2323 = vmatpush1.bf16.msra.mxu0 %v1022
    %2324 = vmatprep.subr.bf16.mxu0 0
    %2325 = vmatpush1.bf16.msra.mxu0 %v1023
    %2326 = vmatprep.subr.bf16.mxu0 0
    %2327 = vmatpush1.bf16.msra.mxu0 %v1024
    %2328 = vmatprep.subr.bf16.mxu0 0
    %2329 = vmatpush1.bf16.msra.mxu0 %v1025
    %2330 = vmatprep.subr.bf16.mxu0 0
    %2331 = vmatpush1.bf16.msra.mxu0 %v1026
    %2332 = vmatprep.subr.bf16.mxu0 0
    %2333 = vmatpush1.bf16.msra.mxu0 %v1027
    %2334 = vmatprep.subr.bf16.mxu0 0
    %2335 = vmatpush1.bf16.msra.mxu0 %v1028
    %2336 = vmatprep.subr.bf16.mxu0 0
    %2337 = vmatpush1.bf16.msra.mxu0 %v1029
    %2338 = vmatprep.subr.bf16.mxu0 0
    %2339 = vmatpush1.bf16.msra.mxu0 0
    %2340 = vmatprep.subr.bf16.mxu0 0
    %2341 = vmatpush1.bf16.msra.mxu0 0
    %2342 = vmatprep.subr.bf16.mxu0 0
    %2343 = vmatpush1.bf16.msra.mxu0 0
    %2344 = vmatprep.subr.bf16.mxu0 0
    %2345 = vmatpush1.bf16.msra.mxu0 0
    %2346 = vmatprep.subr.bf16.mxu0 0
    %2347 = vmatpush1.bf16.msra.mxu0 0
    %2348 = vmatprep.subr.bf16.mxu0 0
    %2349 = vmatpush1.bf16.msra.mxu0 0
    %2350 = vmatprep.subr.bf16.mxu0 0
    %2351 = vmatpush1.bf16.msra.mxu0 0
    %2352 = vmatprep.subr.bf16.mxu0 0
    %2353 = vmatpush1.bf16.msra.mxu0 0
    %2354 = vmatprep.mubr.bf16.mxu0 0
    %2355 = vmatmul.mubr.bf16.gmra.mrb[0].mxu0 %v2312
    %v2356 = vpop.f32.mrb[0].mxu0
    %v2357 = vadd.f32 0.0, %v2356
    %v2358 = vpop.f32.mrb[0].mxu0
    %v2359 = vpop.f32.mrb[0].mxu0
    %v2360 = vadd.f32 0.0, %v2359
    %v2361 = vpop.f32.mrb[0].mxu0
    %2362 = vmatprep.mubr.bf16.mxu0 0
    %2363 = vmatmul.mubr.bf16.gmra.mrb[0].mxu0 %v2313
    %v2364 = vpop.f32.mrb[0].mxu0
    %v2365 = vadd.f32 0.0, %v2364
    %v2366 = vpop.f32.mrb[0].mxu0
    %v2367 = vpop.f32.mrb[0].mxu0
    %v2368 = vadd.f32 0.0, %v2367
    %v2369 = vpop.f32.mrb[0].mxu0
    %2370 = vdwg.mxu0
    %2371 = vmatprep.subr.bf16.mxu0 0
    %2372 = vmatpush1.bf16.msra.mxu0 %v1119
    %2373 = vmatprep.subr.bf16.mxu0 0
    %2374 = vmatpush1.bf16.msra.mxu0 %v1120
    %2375 = vmatprep.subr.bf16.mxu0 0
    %2376 = vmatpush1.bf16.msra.mxu0 %v1121
    %2377 = vmatprep.subr.bf16.mxu0 0
    %2378 = vmatpush1.bf16.msra.mxu0 %v1122
    %2379 = vmatprep.subr.bf16.mxu0 0
    %2380 = vmatpush1.bf16.msra.mxu0 %v1123
    %2381 = vmatprep.subr.bf16.mxu0 0
    %2382 = vmatpush1.bf16.msra.mxu0 %v1124
    %2383 = vmatprep.subr.bf16.mxu0 0
    %2384 = vmatpush1.bf16.msra.mxu0 %v1125
    %2385 = vmatprep.subr.bf16.mxu0 0
    %2386 = vmatpush1.bf16.msra.mxu0 %v1126
    %2387 = vmatprep.subr.bf16.mxu0 0
    %2388 = vmatpush1.bf16.msra.mxu0 0
    %2389 = vmatprep.subr.bf16.mxu0 0
    %2390 = vmatpush1.bf16.msra.mxu0 0
    %2391 = vmatprep.subr.bf16.mxu0 0
    %2392 = vmatpush1.bf16.msra.mxu0 0
    %2393 = vmatprep.subr.bf16.mxu0 0
    %2394 = vmatpush1.bf16.msra.mxu0 0
    %2395 = vmatprep.subr.bf16.mxu0 0
    %2396 = vmatpush1.bf16.msra.mxu0 0
    %2397 = vmatprep.subr.bf16.mxu0 0
    %2398 = vmatpush1.bf16.msra.mxu0 0
    %2399 = vmatprep.subr.bf16.mxu0 0
    %2400 = vmatpush1.bf16.msra.mxu0 0
    %2401 = vmatprep.subr.bf16.mxu0 0
    %2402 = vmatpush1.bf16.msra.mxu0 0
    %2403 = vmatprep.mubr.bf16.mxu0 0
    %2404 = vmatmul.mubr.bf16.gmra.mrb[0].mxu0 %v2314
    %v2405 = vpop.f32.mrb[0].mxu0
    %v2406 = vadd.f32 0.0, %v2405
    %v2407 = vpop.f32.mrb[0].mxu0
    %v2408 = vpop.f32.mrb[0].mxu0
    %v2409 = vadd.f32 0.0, %v2408
    %v2410 = vpop.f32.mrb[0].mxu0
    %2411 = vmatprep.mubr.bf16.mxu0 0
    %2412 = vmatmul.mubr.bf16.gmra.mrb[0].mxu0 %v2315
    %v2413 = vpop.f32.mrb[0].mxu0
    %v2414 = vadd.f32 0.0, %v2413
    %v2415 = vpop.f32.mrb[0].mxu0
    %v2416 = vpop.f32.mrb[0].mxu0
    %v2417 = vadd.f32 0.0, %v2416
    %v2418 = vpop.f32.mrb[0].mxu0
    %2419 = vdwg.mxu0
    %2420 = vmatprep.subr.bf16.mxu0 0
    %2421 = vmatpush1.bf16.msra.mxu0 %v1216
    %2422 = vmatprep.subr.bf16.mxu0 0
    %2423 = vmatpush1.bf16.msra.mxu0 %v1217
    %2424 = vmatprep.subr.bf16.mxu0 0
    %2425 = vmatpush1.bf16.msra.mxu0 %v1218
    %2426 = vmatprep.subr.bf16.mxu0 0
    %2427 = vmatpush1.bf16.msra.mxu0 %v1219
    %2428 = vmatprep.subr.bf16.mxu0 0
    %2429 = vmatpush1.bf16.msra.mxu0 %v1220
    %2430 = vmatprep.subr.bf16.mxu0 0
    %2431 = vmatpush1.bf16.msra.mxu0 %v1221
    %2432 = vmatprep.subr.bf16.mxu0 0
    %2433 = vmatpush1.bf16.msra.mxu0 %v1222
    %2434 = vmatprep.subr.bf16.mxu0 0
    %2435 = vmatpush1.bf16.msra.mxu0 %v1223
    %2436 = vmatprep.subr.bf16.mxu0 0
    %2437 = vmatpush1.bf16.msra.mxu0 0
    %2438 = vmatprep.subr.bf16.mxu0 0
    %2439 = vmatpush1.bf16.msra.mxu0 0
    %2440 = vmatprep.subr.bf16.mxu0 0
    %2441 = vmatpush1.bf16.msra.mxu0 0
    %2442 = vmatprep.subr.bf16.mxu0 0
    %2443 = vmatpush1.bf16.msra.mxu0 0
    %2444 = vmatprep.subr.bf16.mxu0 0
    %2445 = vmatpush1.bf16.msra.mxu0 0
    %2446 = vmatprep.subr.bf16.mxu0 0
    %2447 = vmatpush1.bf16.msra.mxu0 0
    %2448 = vmatprep.subr.bf16.mxu0 0
    %2449 = vmatpush1.bf16.msra.mxu0 0
    %2450 = vmatprep.subr.bf16.mxu0 0
    %2451 = vmatpush1.bf16.msra.mxu0 0
    %2452 = vmatprep.mubr.bf16.mxu0 0
    %2453 = vmatmul.mubr.bf16.gmra.mrb[0].mxu0 %v2320
    %v2454 = vpop.f32.mrb[0].mxu0
    %v2455 = vadd.f32 0.0, %v2454
    %v2456 = vpop.f32.mrb[0].mxu0
    %v2457 = vpop.f32.mrb[0].mxu0
    %v2458 = vadd.f32 0.0, %v2457
    %v2459 = vpop.f32.mrb[0].mxu0
    %2460 = vmatprep.mubr.bf16.mxu0 0
    %2461 = vmatmul.mubr.bf16.gmra.mrb[0].mxu0 %v2321
    %v2462 = vpop.f32.mrb[0].mxu0
    %v2463 = vadd.f32 0.0, %v2462
    %v2464 = vpop.f32.mrb[0].mxu0
    %v2465 = vpop.f32.mrb[0].mxu0
    %v2466 = vadd.f32 0.0, %v2465
    %v2467 = vpop.f32.mrb[0].mxu0
    %2468 = vdwg.mxu0
    %v2469 = vsub.f32 %v2357, %v2406
    %v2470 = vsub.f32 %v2360, %v2409
    %v2471 = vsub.f32 %v2365, %v2414
    %v2472 = vsub.f32 %v2368, %v2417
    %v2473 = vsub.f32 %v2455, %v2357
    %v2474 = vsub.f32 %v2458, %v2360
    %v2475 = vsub.f32 %v2463, %v2365
    %v2476 = vsub.f32 %v2466, %v2368
    %v2477 = vsub.f32 %v2473, %v2406
    %v2478 = vsub.f32 %v2474, %v2409
    %v2479 = vsub.f32 %v2475, %v2414
    %v2480 = vsub.f32 %v2476, %v2417
    %v2481 = vmul.f32 %v2471, %v2471
    %v2482 = vmul.f32 %v2472, %v2472
    %v2483 = vmul.f32 %v2479, %v2479
    %v2484 = vmul.f32 %v2480, %v2480
    %v2485 = vadd.f32 %v2481, %v2483
    %v2486 = vadd.f32 %v2482, %v2484
    %s2487 = scalar_lea.vmem [#allocation5], 16
    %v2488 = vld [vmem:[%s2487] sm:$0xff]
    %v2489 = vld [vmem:[%s2487 + $0x8] sm:$0xff]
    %s2490 = scalar_lea.vmem [#allocation7], 16
    %v2491 = vld [vmem:[%s2490] sm:$0xff]
    %v2492 = vld [vmem:[%s2490 + $0x8] sm:$0xff]
    %v2493 = vmul.f32 %v2469, %v2488
    %v2494 = vmul.f32 %v2470, %v2489
    %v2495 = vmul.f32 %v2477, %v2491
    %v2496 = vmul.f32 %v2478, %v2492
    %v2497 = vsub.f32 %v2493, %v2495
    %v2498 = vsub.f32 %v2494, %v2496
    %v2499 = vmul.f32 %v2469, %v2491
    %v2500 = vmul.f32 %v2470, %v2492
    %v2501 = vmul.f32 %v2477, %v2488
    %v2502 = vmul.f32 %v2478, %v2489
    %v2503 = vadd.f32 %v2499, %v2501
    %v2504 = vadd.f32 %v2500, %v2502
    %v2505 = vpack.c.bf16 %v2498, %v2497
    %v2506 = vpack.c.bf16 %v2504, %v2503
    %v2507 = vadd.f32 %v2497, %v2503
    %v2508 = vadd.f32 %v2498, %v2504
    %v2509 = vpack.c.bf16 %v2508, %v2507
    %2510 = vmatprep.subr.bf16.mxu0 0
    %2511 = vmatpush1.bf16.msra.mxu0 %v2505
    %2512 = vmatprep.subr.bf16.mxu0 0
    %2513 = vmatpush1.bf16.msra.mxu0 0
    %2514 = vmatprep.subr.bf16.mxu0 0
    %2515 = vmatpush1.bf16.msra.mxu0 0
    %2516 = vmatprep.subr.bf16.mxu0 0
    %2517 = vmatpush1.bf16.msra.mxu0 0
    %2518 = vmatprep.subr.bf16.mxu0 0
    %2519 = vmatpush1.bf16.msra.mxu0 0
    %2520 = vmatprep.subr.bf16.mxu0 0
    %2521 = vmatpush1.bf16.msra.mxu0 0
    %2522 = vmatprep.subr.bf16.mxu0 0
    %2523 = vmatpush1.bf16.msra.mxu0 0
    %2524 = vmatprep.subr.bf16.mxu0 0
    %2525 = vmatpush1.bf16.msra.mxu0 0
    %2526 = vmatprep.subr.bf16.mxu0 0
    %2527 = vmatpush1.bf16.msra.mxu0 0
    %2528 = vmatprep.subr.bf16.mxu0 0
    %2529 = vmatpush1.bf16.msra.mxu0 0
    %2530 = vmatprep.subr.bf16.mxu0 0
    %2531 = vmatpush1.bf16.msra.mxu0 0
    %2532 = vmatprep.subr.bf16.mxu0 0
    %2533 = vmatpush1.bf16.msra.mxu0 0
    %2534 = vmatprep.subr.bf16.mxu0 0
    %2535 = vmatpush1.bf16.msra.mxu0 0
    %2536 = vmatprep.subr.bf16.mxu0 0
    %2537 = vmatpush1.bf16.msra.mxu0 0
    %2538 = vmatprep.subr.bf16.mxu0 0
    %2539 = vmatpush1.bf16.msra.mxu0 0
    %2540 = vmatprep.subr.bf16.mxu0 0
    %2541 = vmatpush1.bf16.msra.mxu0 0
    %2542 = vmatprep.mubr.bf16.mxu0 0
    %2543 = vmatmul.mubr.bf16.gmra.mrb[0].mxu0 %v419
    %v2544 = vpop.f32.mrb[0].mxu0
    %v2545 = vadd.f32 0.0, %v2544
    %v2546 = vpop.f32.mrb[0].mxu0
    %v2547 = vpop.f32.mrb[0].mxu0
    %v2548 = vadd.f32 0.0, %v2547
    %v2549 = vpop.f32.mrb[0].mxu0
    %2550 = vdwg.mxu0
    %2551 = vmatprep.subr.bf16.mxu0 0
    %2552 = vmatpush1.bf16.msra.mxu0 %v2506
    %2553 = vmatprep.subr.bf16.mxu0 0
    %2554 = vmatpush1.bf16.msra.mxu0 0
    %2555 = vmatprep.subr.bf16.mxu0 0
    %2556 = vmatpush1.bf16.msra.mxu0 0
    %2557 = vmatprep.subr.bf16.mxu0 0
    %2558 = vmatpush1.bf16.msra.mxu0 0
    %2559 = vmatprep.subr.bf16.mxu0 0
    %2560 = vmatpush1.bf16.msra.mxu0 0
    %2561 = vmatprep.subr.bf16.mxu0 0
    %2562 = vmatpush1.bf16.msra.mxu0 0
    %2563 = vmatprep.subr.bf16.mxu0 0
    %2564 = vmatpush1.bf16.msra.mxu0 0
    %2565 = vmatprep.subr.bf16.mxu0 0
    %2566 = vmatpush1.bf16.msra.mxu0 0
    %2567 = vmatprep.subr.bf16.mxu0 0
    %2568 = vmatpush1.bf16.msra.mxu0 0
    %2569 = vmatprep.subr.bf16.mxu0 0
    %2570 = vmatpush1.bf16.msra.mxu0 0
    %2571 = vmatprep.subr.bf16.mxu0 0
    %2572 = vmatpush1.bf16.msra.mxu0 0
    %2573 = vmatprep.subr.bf16.mxu0 0
    %2574 = vmatpush1.bf16.msra.mxu0 0
    %2575 = vmatprep.subr.bf16.mxu0 0
    %2576 = vmatpush1.bf16.msra.mxu0 0
    %2577 = vmatprep.subr.bf16.mxu0 0
    %2578 = vmatpush1.bf16.msra.mxu0 0
    %2579 = vmatprep.subr.bf16.mxu0 0
    %2580 = vmatpush1.bf16.msra.mxu0 0
    %2581 = vmatprep.subr.bf16.mxu0 0
    %2582 = vmatpush1.bf16.msra.mxu0 0
    %2583 = vmatprep.mubr.bf16.mxu0 0
    %2584 = vmatmul.mubr.bf16.gmra.mrb[0].mxu0 %v468
    %v2585 = vpop.f32.mrb[0].mxu0
    %v2586 = vadd.f32 0.0, %v2585
    %v2587 = vpop.f32.mrb[0].mxu0
    %v2588 = vpop.f32.mrb[0].mxu0
    %v2589 = vadd.f32 0.0, %v2588
    %v2590 = vpop.f32.mrb[0].mxu0
    %2591 = vdwg.mxu0
    %2592 = vmatprep.subr.bf16.mxu0 0
    %2593 = vmatpush1.bf16.msra.mxu0 %v2509
    %2594 = vmatprep.subr.bf16.mxu0 0
    %2595 = vmatpush1.bf16.msra.mxu0 0
    %2596 = vmatprep.subr.bf16.mxu0 0
    %2597 = vmatpush1.bf16.msra.mxu0 0
    %2598 = vmatprep.subr.bf16.mxu0 0
    %2599 = vmatpush1.bf16.msra.mxu0 0
    %2600 = vmatprep.subr.bf16.mxu0 0
    %2601 = vmatpush1.bf16.msra.mxu0 0
    %2602 = vmatprep.subr.bf16.mxu0 0
    %2603 = vmatpush1.bf16.msra.mxu0 0
    %2604 = vmatprep.subr.bf16.mxu0 0
    %2605 = vmatpush1.bf16.msra.mxu0 0
    %2606 = vmatprep.subr.bf16.mxu0 0
    %2607 = vmatpush1.bf16.msra.mxu0 0
    %2608 = vmatprep.subr.bf16.mxu0 0
    %2609 = vmatpush1.bf16.msra.mxu0 0
    %2610 = vmatprep.subr.bf16.mxu0 0
    %2611 = vmatpush1.bf16.msra.mxu0 0
    %2612 = vmatprep.subr.bf16.mxu0 0
    %2613 = vmatpush1.bf16.msra.mxu0 0
    %2614 = vmatprep.subr.bf16.mxu0 0
    %2615 = vmatpush1.bf16.msra.mxu0 0
    %2616 = vmatprep.subr.bf16.mxu0 0
    %2617 = vmatpush1.bf16.msra.mxu0 0
    %2618 = vmatprep.subr.bf16.mxu0 0
    %2619 = vmatpush1.bf16.msra.mxu0 0
    %2620 = vmatprep.subr.bf16.mxu0 0
    %2621 = vmatpush1.bf16.msra.mxu0 0
    %2622 = vmatprep.subr.bf16.mxu0 0
    %2623 = vmatpush1.bf16.msra.mxu0 0
    %2624 = vmatprep.mubr.bf16.mxu0 0
    %2625 = vmatmul.mubr.bf16.gmra.mrb[0].mxu0 %v1408
    %v2626 = vpop.f32.mrb[0].mxu0
    %v2627 = vadd.f32 0.0, %v2626
    %v2628 = vpop.f32.mrb[0].mxu0
    %v2629 = vpop.f32.mrb[0].mxu0
    %v2630 = vadd.f32 0.0, %v2629
    %v2631 = vpop.f32.mrb[0].mxu0
    %2632 = vdwg.mxu0
    %v2633 = vsub.f32 %v2545, %v2586
    %v2634 = vsub.f32 %v2548, %v2589
    %v2635 = vsub.f32 %v2627, %v2545
    %v2636 = vsub.f32 %v2630, %v2548
    %v2637 = vsub.f32 %v2635, %v2586
    %v2638 = vsub.f32 %v2636, %v2589
    %v2639 = vpack.c.bf16 %v2634, %v2633
    %v2640 = vpack.c.bf16 %v2638, %v2637
    %v2641 = vadd.f32 %v2633, %v2637
    %v2642 = vadd.f32 %v2634, %v2638
    %v2643 = vpack.c.bf16 %v2642, %v2641
    %2644 = vmatprep.subr.bf16.mxu0 0
    %2645 = vmatpush1.bf16.msra.mxu0 %v548
    %2646 = vmatprep.subr.bf16.mxu0 0
    %2647 = vmatpush1.bf16.msra.mxu0 %v549
    %2648 = vmatprep.subr.bf16.mxu0 0
    %2649 = vmatpush1.bf16.msra.mxu0 %v550
    %2650 = vmatprep.subr.bf16.mxu0 0
    %2651 = vmatpush1.bf16.msra.mxu0 %v551
    %2652 = vmatprep.subr.bf16.mxu0 0
    %2653 = vmatpush1.bf16.msra.mxu0 %v552
    %2654 = vmatprep.subr.bf16.mxu0 0
    %2655 = vmatpush1.bf16.msra.mxu0 %v553
    %2656 = vmatprep.subr.bf16.mxu0 0
    %2657 = vmatpush1.bf16.msra.mxu0 %v554
    %2658 = vmatprep.subr.bf16.mxu0 0
    %2659 = vmatpush1.bf16.msra.mxu0 %v555
    %2660 = vmatprep.subr.bf16.mxu0 0
    %2661 = vmatpush1.bf16.msra.mxu0 0
    %2662 = vmatprep.subr.bf16.mxu0 0
    %2663 = vmatpush1.bf16.msra.mxu0 0
    %2664 = vmatprep.subr.bf16.mxu0 0
    %2665 = vmatpush1.bf16.msra.mxu0 0
    %2666 = vmatprep.subr.bf16.mxu0 0
    %2667 = vmatpush1.bf16.msra.mxu0 0
    %2668 = vmatprep.subr.bf16.mxu0 0
    %2669 = vmatpush1.bf16.msra.mxu0 0
    %2670 = vmatprep.subr.bf16.mxu0 0
    %2671 = vmatpush1.bf16.msra.mxu0 0
    %2672 = vmatprep.subr.bf16.mxu0 0
    %2673 = vmatpush1.bf16.msra.mxu0 0
    %2674 = vmatprep.subr.bf16.mxu0 0
    %2675 = vmatpush1.bf16.msra.mxu0 0
    %2676 = vmatprep.mubr.bf16.mxu0 0
    %2677 = vmatmul.mubr.bf16.gmra.mrb[0].mxu0 %v2639
    %v2678 = vpop.f32.mrb[0].mxu0
    %v2679 = vadd.f32 0.0, %v2678
    %v2680 = vpop.f32.mrb[0].mxu0
    %v2681 = vpop.f32.mrb[0].mxu0
    %v2682 = vadd.f32 0.0, %v2681
    %v2683 = vpop.f32.mrb[0].mxu0
    %2684 = vdwg.mxu0
    %2685 = vmatprep.subr.bf16.mxu0 0
    %2686 = vmatpush1.bf16.msra.mxu0 %v637
    %2687 = vmatprep.subr.bf16.mxu0 0
    %2688 = vmatpush1.bf16.msra.mxu0 %v638
    %2689 = vmatprep.subr.bf16.mxu0 0
    %2690 = vmatpush1.bf16.msra.mxu0 %v639
    %2691 = vmatprep.subr.bf16.mxu0 0
    %2692 = vmatpush1.bf16.msra.mxu0 %v640
    %2693 = vmatprep.subr.bf16.mxu0 0
    %2694 = vmatpush1.bf16.msra.mxu0 %v641
    %2695 = vmatprep.subr.bf16.mxu0 0
    %2696 = vmatpush1.bf16.msra.mxu0 %v642
    %2697 = vmatprep.subr.bf16.mxu0 0
    %2698 = vmatpush1.bf16.msra.mxu0 %v643
    %2699 = vmatprep.subr.bf16.mxu0 0
    %2700 = vmatpush1.bf16.msra.mxu0 %v644
    %2701 = vmatprep.subr.bf16.mxu0 0
    %2702 = vmatpush1.bf16.msra.mxu0 0
    %2703 = vmatprep.subr.bf16.mxu0 0
    %2704 = vmatpush1.bf16.msra.mxu0 0
    %2705 = vmatprep.subr.bf16.mxu0 0
    %2706 = vmatpush1.bf16.msra.mxu0 0
    %2707 = vmatprep.subr.bf16.mxu0 0
    %2708 = vmatpush1.bf16.msra.mxu0 0
    %2709 = vmatprep.subr.bf16.mxu0 0
    %2710 = vmatpush1.bf16.msra.mxu0 0
    %2711 = vmatprep.subr.bf16.mxu0 0
    %2712 = vmatpush1.bf16.msra.mxu0 0
    %2713 = vmatprep.subr.bf16.mxu0 0
    %2714 = vmatpush1.bf16.msra.mxu0 0
    %2715 = vmatprep.subr.bf16.mxu0 0
    %2716 = vmatpush1.bf16.msra.mxu0 0
    %2717 = vmatprep.mubr.bf16.mxu0 0
    %2718 = vmatmul.mubr.bf16.gmra.mrb[0].mxu0 %v2640
    %v2719 = vpop.f32.mrb[0].mxu0
    %v2720 = vadd.f32 0.0, %v2719
    %v2721 = vpop.f32.mrb[0].mxu0
    %v2722 = vpop.f32.mrb[0].mxu0
    %v2723 = vadd.f32 0.0, %v2722
    %v2724 = vpop.f32.mrb[0].mxu0
    %2725 = vdwg.mxu0
    %2726 = vmatprep.subr.bf16.mxu0 0
    %2727 = vmatpush1.bf16.msra.mxu0 %v726
    %2728 = vmatprep.subr.bf16.mxu0 0
    %2729 = vmatpush1.bf16.msra.mxu0 %v727
    %2730 = vmatprep.subr.bf16.mxu0 0
    %2731 = vmatpush1.bf16.msra.mxu0 %v728
    %2732 = vmatprep.subr.bf16.mxu0 0
    %2733 = vmatpush1.bf16.msra.mxu0 %v729
    %2734 = vmatprep.subr.bf16.mxu0 0
    %2735 = vmatpush1.bf16.msra.mxu0 %v730
    %2736 = vmatprep.subr.bf16.mxu0 0
    %2737 = vmatpush1.bf16.msra.mxu0 %v731
    %2738 = vmatprep.subr.bf16.mxu0 0
    %2739 = vmatpush1.bf16.msra.mxu0 %v732
    %2740 = vmatprep.subr.bf16.mxu0 0
    %2741 = vmatpush1.bf16.msra.mxu0 %v733
    %2742 = vmatprep.subr.bf16.mxu0 0
    %2743 = vmatpush1.bf16.msra.mxu0 0
    %2744 = vmatprep.subr.bf16.mxu0 0
    %2745 = vmatpush1.bf16.msra.mxu0 0
    %2746 = vmatprep.subr.bf16.mxu0 0
    %2747 = vmatpush1.bf16.msra.mxu0 0
    %2748 = vmatprep.subr.bf16.mxu0 0
    %2749 = vmatpush1.bf16.msra.mxu0 0
    %2750 = vmatprep.subr.bf16.mxu0 0
    %2751 = vmatpush1.bf16.msra.mxu0 0
    %2752 = vmatprep.subr.bf16.mxu0 0
    %2753 = vmatpush1.bf16.msra.mxu0 0
    %2754 = vmatprep.subr.bf16.mxu0 0
    %2755 = vmatpush1.bf16.msra.mxu0 0
    %2756 = vmatprep.subr.bf16.mxu0 0
    %2757 = vmatpush1.bf16.msra.mxu0 0
    %2758 = vmatprep.mubr.bf16.mxu0 0
    %2759 = vmatmul.mubr.bf16.gmra.mrb[0].mxu0 %v2643
    %v2760 = vpop.f32.mrb[0].mxu0
    %v2761 = vadd.f32 0.0, %v2760
    %v2762 = vpop.f32.mrb[0].mxu0
    %v2763 = vpop.f32.mrb[0].mxu0
    %v2764 = vadd.f32 0.0, %v2763
    %v2765 = vpop.f32.mrb[0].mxu0
    %2766 = vdwg.mxu0
    %v2767 = vsub.f32 %v2679, %v2720
    %v2768 = vsub.f32 %v2682, %v2723
    %v2769 = vsub.f32 %v2761, %v2679
    %v2770 = vsub.f32 %v2764, %v2682
    %v2771 = vsub.f32 %v2769, %v2720
    %v2772 = vsub.f32 %v2770, %v2723
    %v2773 = vmul.f32 %v2767, %v397
    %v2774 = vmul.f32 %v2768, %v398
    %v2775 = vmul.f32 %v2771, %v399
    %v2776 = vmul.f32 %v2772, %v400
    %v2777 = vsub.f32 %v2773, %v2775
    %v2778 = vsub.f32 %v2774, %v2776
    %v2779 = vmul.f32 %v2767, %v399
    %v2780 = vmul.f32 %v2768, %v400
    %v2781 = vmul.f32 %v2771, %v397
    %v2782 = vmul.f32 %v2772, %v398
    %v2783 = vadd.f32 %v2779, %v2781
    %v2784 = vadd.f32 %v2780, %v2782
    %v2785 = vpack.c.bf16 %v2778, %v2777
    %v2786 = vpack.c.bf16 %v2784, %v2783
    %v2787 = vadd.f32 %v2777, %v2783
    %v2788 = vadd.f32 %v2778, %v2784
    %v2789 = vpack.c.bf16 %v2788, %v2787
    %2790 = vmatprep.subr.bf16.mxu0 0
    %2791 = vmatpush1.bf16.msra.mxu0 %v2785
    %2792 = vmatprep.subr.bf16.mxu0 0
    %2793 = vmatpush1.bf16.msra.mxu0 0
    %2794 = vmatprep.subr.bf16.mxu0 0
    %2795 = vmatpush1.bf16.msra.mxu0 0
    %2796 = vmatprep.subr.bf16.mxu0 0
    %2797 = vmatpush1.bf16.msra.mxu0 0
    %2798 = vmatprep.subr.bf16.mxu0 0
    %2799 = vmatpush1.bf16.msra.mxu0 0
    %2800 = vmatprep.subr.bf16.mxu0 0
    %2801 = vmatpush1.bf16.msra.mxu0 0
    %2802 = vmatprep.subr.bf16.mxu0 0
    %2803 = vmatpush1.bf16.msra.mxu0 0
    %2804 = vmatprep.subr.bf16.mxu0 0
    %2805 = vmatpush1.bf16.msra.mxu0 0
    %2806 = vmatprep.subr.bf16.mxu0 0
    %2807 = vmatpush1.bf16.msra.mxu0 0
    %2808 = vmatprep.subr.bf16.mxu0 0
    %2809 = vmatpush1.bf16.msra.mxu0 0
    %2810 = vmatprep.subr.bf16.mxu0 0
    %2811 = vmatpush1.bf16.msra.mxu0 0
    %2812 = vmatprep.subr.bf16.mxu0 0
    %2813 = vmatpush1.bf16.msra.mxu0 0
    %2814 = vmatprep.subr.bf16.mxu0 0
    %2815 = vmatpush1.bf16.msra.mxu0 0
    %2816 = vmatprep.subr.bf16.mxu0 0
    %2817 = vmatpush1.bf16.msra.mxu0 0
    %2818 = vmatprep.subr.bf16.mxu0 0
    %2819 = vmatpush1.bf16.msra.mxu0 0
    %2820 = vmatprep.subr.bf16.mxu0 0
    %2821 = vmatpush1.bf16.msra.mxu0 0
    %2822 = vmatprep.mubr.bf16.mxu0 0
    %2823 = vmatmul.mubr.bf16.gmra.mrb[0].mxu0 %v419
    %v2824 = vpop.f32.mrb[0].mxu0
    %v2825 = vadd.f32 0.0, %v2824
    %v2826 = vpop.f32.mrb[0].mxu0
    %v2827 = vpop.f32.mrb[0].mxu0
    %v2828 = vadd.f32 0.0, %v2827
    %v2829 = vpop.f32.mrb[0].mxu0
    %2830 = vdwg.mxu0
    %2831 = vmatprep.subr.bf16.mxu0 0
    %2832 = vmatpush1.bf16.msra.mxu0 %v2786
    %2833 = vmatprep.subr.bf16.mxu0 0
    %2834 = vmatpush1.bf16.msra.mxu0 0
    %2835 = vmatprep.subr.bf16.mxu0 0
    %2836 = vmatpush1.bf16.msra.mxu0 0
    %2837 = vmatprep.subr.bf16.mxu0 0
    %2838 = vmatpush1.bf16.msra.mxu0 0
    %2839 = vmatprep.subr.bf16.mxu0 0
    %2840 = vmatpush1.bf16.msra.mxu0 0
    %2841 = vmatprep.subr.bf16.mxu0 0
    %2842 = vmatpush1.bf16.msra.mxu0 0
    %2843 = vmatprep.subr.bf16.mxu0 0
    %2844 = vmatpush1.bf16.msra.mxu0 0
    %2845 = vmatprep.subr.bf16.mxu0 0
    %2846 = vmatpush1.bf16.msra.mxu0 0
    %2847 = vmatprep.subr.bf16.mxu0 0
    %2848 = vmatpush1.bf16.msra.mxu0 0
    %2849 = vmatprep.subr.bf16.mxu0 0
    %2850 = vmatpush1.bf16.msra.mxu0 0
    %2851 = vmatprep.subr.bf16.mxu0 0
    %2852 = vmatpush1.bf16.msra.mxu0 0
    %2853 = vmatprep.subr.bf16.mxu0 0
    %2854 = vmatpush1.bf16.msra.mxu0 0
    %2855 = vmatprep.subr.bf16.mxu0 0
    %2856 = vmatpush1.bf16.msra.mxu0 0
    %2857 = vmatprep.subr.bf16.mxu0 0
    %2858 = vmatpush1.bf16.msra.mxu0 0
    %2859 = vmatprep.subr.bf16.mxu0 0
    %2860 = vmatpush1.bf16.msra.mxu0 0
    %2861 = vmatprep.subr.bf16.mxu0 0
    %2862 = vmatpush1.bf16.msra.mxu0 0
    %2863 = vmatprep.mubr.bf16.mxu0 0
    %2864 = vmatmul.mubr.bf16.gmra.mrb[0].mxu0 %v872
    %v2865 = vpop.f32.mrb[0].mxu0
    %v2866 = vadd.f32 0.0, %v2865
    %v2867 = vpop.f32.mrb[0].mxu0
    %v2868 = vpop.f32.mrb[0].mxu0
    %v2869 = vadd.f32 0.0, %v2868
    %v2870 = vpop.f32.mrb[0].mxu0
    %2871 = vdwg.mxu0
    %2872 = vmatprep.subr.bf16.mxu0 0
    %2873 = vmatpush1.bf16.msra.mxu0 %v2789
    %2874 = vmatprep.subr.bf16.mxu0 0
    %2875 = vmatpush1.bf16.msra.mxu0 0
    %2876 = vmatprep.subr.bf16.mxu0 0
    %2877 = vmatpush1.bf16.msra.mxu0 0
    %2878 = vmatprep.subr.bf16.mxu0 0
    %2879 = vmatpush1.bf16.msra.mxu0 0
    %2880 = vmatprep.subr.bf16.mxu0 0
    %2881 = vmatpush1.bf16.msra.mxu0 0
    %2882 = vmatprep.subr.bf16.mxu0 0
    %2883 = vmatpush1.bf16.msra.mxu0 0
    %2884 = vmatprep.subr.bf16.mxu0 0
    %2885 = vmatpush1.bf16.msra.mxu0 0
    %2886 = vmatprep.subr.bf16.mxu0 0
    %2887 = vmatpush1.bf16.msra.mxu0 0
    %2888 = vmatprep.subr.bf16.mxu0 0
    %2889 = vmatpush1.bf16.msra.mxu0 0
    %2890 = vmatprep.subr.bf16.mxu0 0
    %2891 = vmatpush1.bf16.msra.mxu0 0
    %2892 = vmatprep.subr.bf16.mxu0 0
    %2893 = vmatpush1.bf16.msra.mxu0 0
    %2894 = vmatprep.subr.bf16.mxu0 0
    %2895 = vmatpush1.bf16.msra.mxu0 0
    %2896 = vmatprep.subr.bf16.mxu0 0
    %2897 = vmatpush1.bf16.msra.mxu0 0
    %2898 = vmatprep.subr.bf16.mxu0 0
    %2899 = vmatpush1.bf16.msra.mxu0 0
    %2900 = vmatprep.subr.bf16.mxu0 0
    %2901 = vmatpush1.bf16.msra.mxu0 0
    %2902 = vmatprep.subr.bf16.mxu0 0
    %2903 = vmatpush1.bf16.msra.mxu0 0
    %2904 = vmatprep.mubr.bf16.mxu0 0
    %2905 = vmatmul.mubr.bf16.gmra.mrb[0].mxu0 %v923
    %v2906 = vpop.f32.mrb[0].mxu0
    %v2907 = vadd.f32 0.0, %v2906
    %v2908 = vpop.f32.mrb[0].mxu0
    %v2909 = vpop.f32.mrb[0].mxu0
    %v2910 = vadd.f32 0.0, %v2909
    %v2911 = vpop.f32.mrb[0].mxu0
    %2912 = vdwg.mxu0
    %v2913 = vsub.f32 %v2825, %v2866
    %v2914 = vsub.f32 %v2828, %v2869
    %v2915 = vsub.f32 %v2907, %v2825
    %v2916 = vsub.f32 %v2910, %v2828
    %v2917 = vsub.f32 %v2915, %v2866
    %v2918 = vsub.f32 %v2916, %v2869
    %v2919 = vpack.c.bf16 %v2914, %v2913
    %v2920 = vpack.c.bf16 %v2918, %v2917
    %v2921 = vadd.f32 %v2913, %v2917
    %v2922 = vadd.f32 %v2914, %v2918
    %v2923 = vpack.c.bf16 %v2922, %v2921
    %2924 = vmatprep.subr.bf16.mxu0 0
    %2925 = vmatpush1.bf16.msra.mxu0 %v1022
    %2926 = vmatprep.subr.bf16.mxu0 0
    %2927 = vmatpush1.bf16.msra.mxu0 %v1023
    %2928 = vmatprep.subr.bf16.mxu0 0
    %2929 = vmatpush1.bf16.msra.mxu0 %v1024
    %2930 = vmatprep.subr.bf16.mxu0 0
    %2931 = vmatpush1.bf16.msra.mxu0 %v1025
    %2932 = vmatprep.subr.bf16.mxu0 0
    %2933 = vmatpush1.bf16.msra.mxu0 %v1026
    %2934 = vmatprep.subr.bf16.mxu0 0
    %2935 = vmatpush1.bf16.msra.mxu0 %v1027
    %2936 = vmatprep.subr.bf16.mxu0 0
    %2937 = vmatpush1.bf16.msra.mxu0 %v1028
    %2938 = vmatprep.subr.bf16.mxu0 0
    %2939 = vmatpush1.bf16.msra.mxu0 %v1029
    %2940 = vmatprep.subr.bf16.mxu0 0
    %2941 = vmatpush1.bf16.msra.mxu0 0
    %2942 = vmatprep.subr.bf16.mxu0 0
    %2943 = vmatpush1.bf16.msra.mxu0 0
    %2944 = vmatprep.subr.bf16.mxu0 0
    %2945 = vmatpush1.bf16.msra.mxu0 0
    %2946 = vmatprep.subr.bf16.mxu0 0
    %2947 = vmatpush1.bf16.msra.mxu0 0
    %2948 = vmatprep.subr.bf16.mxu0 0
    %2949 = vmatpush1.bf16.msra.mxu0 0
    %2950 = vmatprep.subr.bf16.mxu0 0
    %2951 = vmatpush1.bf16.msra.mxu0 0
    %2952 = vmatprep.subr.bf16.mxu0 0
    %2953 = vmatpush1.bf16.msra.mxu0 0
    %2954 = vmatprep.subr.bf16.mxu0 0
    %2955 = vmatpush1.bf16.msra.mxu0 0
    %2956 = vmatprep.mubr.bf16.mxu0 0
    %2957 = vmatmul.mubr.bf16.gmra.mrb[0].mxu0 %v2919
    %v2958 = vpop.f32.mrb[0].mxu0
    %v2959 = vadd.f32 0.0, %v2958
    %v2960 = vpop.f32.mrb[0].mxu0
    %v2961 = vpop.f32.mrb[0].mxu0
    %v2962 = vadd.f32 0.0, %v2961
    %v2963 = vpop.f32.mrb[0].mxu0
    %2964 = vdwg.mxu0
    %2965 = vmatprep.subr.bf16.mxu0 0
    %2966 = vmatpush1.bf16.msra.mxu0 %v1119
    %2967 = vmatprep.subr.bf16.mxu0 0
    %2968 = vmatpush1.bf16.msra.mxu0 %v1120
    %2969 = vmatprep.subr.bf16.mxu0 0
    %2970 = vmatpush1.bf16.msra.mxu0 %v1121
    %2971 = vmatprep.subr.bf16.mxu0 0
    %2972 = vmatpush1.bf16.msra.mxu0 %v1122
    %2973 = vmatprep.subr.bf16.mxu0 0
    %2974 = vmatpush1.bf16.msra.mxu0 %v1123
    %2975 = vmatprep.subr.bf16.mxu0 0
    %2976 = vmatpush1.bf16.msra.mxu0 %v1124
    %2977 = vmatprep.subr.bf16.mxu0 0
    %2978 = vmatpush1.bf16.msra.mxu0 %v1125
    %2979 = vmatprep.subr.bf16.mxu0 0
    %2980 = vmatpush1.bf16.msra.mxu0 %v1126
    %2981 = vmatprep.subr.bf16.mxu0 0
    %2982 = vmatpush1.bf16.msra.mxu0 0
    %2983 = vmatprep.subr.bf16.mxu0 0
    %2984 = vmatpush1.bf16.msra.mxu0 0
    %2985 = vmatprep.subr.bf16.mxu0 0
    %2986 = vmatpush1.bf16.msra.mxu0 0
    %2987 = vmatprep.subr.bf16.mxu0 0
    %2988 = vmatpush1.bf16.msra.mxu0 0
    %2989 = vmatprep.subr.bf16.mxu0 0
    %2990 = vmatpush1.bf16.msra.mxu0 0
    %2991 = vmatprep.subr.bf16.mxu0 0
    %2992 = vmatpush1.bf16.msra.mxu0 0
    %2993 = vmatprep.subr.bf16.mxu0 0
    %2994 = vmatpush1.bf16.msra.mxu0 0
    %2995 = vmatprep.subr.bf16.mxu0 0
    %2996 = vmatpush1.bf16.msra.mxu0 0
    %2997 = vmatprep.mubr.bf16.mxu0 0
    %2998 = vmatmul.mubr.bf16.gmra.mrb[0].mxu0 %v2920
    %v2999 = vpop.f32.mrb[0].mxu0
    %v3000 = vadd.f32 0.0, %v2999
    %v3001 = vpop.f32.mrb[0].mxu0
    %v3002 = vpop.f32.mrb[0].mxu0
    %v3003 = vadd.f32 0.0, %v3002
    %v3004 = vpop.f32.mrb[0].mxu0
    %3005 = vdwg.mxu0
    %3006 = vmatprep.subr.bf16.mxu0 0
    %3007 = vmatpush1.bf16.msra.mxu0 %v1216
    %3008 = vmatprep.subr.bf16.mxu0 0
    %3009 = vmatpush1.bf16.msra.mxu0 %v1217
    %3010 = vmatprep.subr.bf16.mxu0 0
    %3011 = vmatpush1.bf16.msra.mxu0 %v1218
    %3012 = vmatprep.subr.bf16.mxu0 0
    %3013 = vmatpush1.bf16.msra.mxu0 %v1219
    %3014 = vmatprep.subr.bf16.mxu0 0
    %3015 = vmatpush1.bf16.msra.mxu0 %v1220
    %3016 = vmatprep.subr.bf16.mxu0 0
    %3017 = vmatpush1.bf16.msra.mxu0 %v1221
    %3018 = vmatprep.subr.bf16.mxu0 0
    %3019 = vmatpush1.bf16.msra.mxu0 %v1222
    %3020 = vmatprep.subr.bf16.mxu0 0
    %3021 = vmatpush1.bf16.msra.mxu0 %v1223
    %3022 = vmatprep.subr.bf16.mxu0 0
    %3023 = vmatpush1.bf16.msra.mxu0 0
    %3024 = vmatprep.subr.bf16.mxu0 0
    %3025 = vmatpush1.bf16.msra.mxu0 0
    %3026 = vmatprep.subr.bf16.mxu0 0
    %3027 = vmatpush1.bf16.msra.mxu0 0
    %3028 = vmatprep.subr.bf16.mxu0 0
    %3029 = vmatpush1.bf16.msra.mxu0 0
    %3030 = vmatprep.subr.bf16.mxu0 0
    %3031 = vmatpush1.bf16.msra.mxu0 0
    %3032 = vmatprep.subr.bf16.mxu0 0
    %3033 = vmatpush1.bf16.msra.mxu0 0
    %3034 = vmatprep.subr.bf16.mxu0 0
    %3035 = vmatpush1.bf16.msra.mxu0 0
    %3036 = vmatprep.subr.bf16.mxu0 0
    %3037 = vmatpush1.bf16.msra.mxu0 0
    %3038 = vmatprep.mubr.bf16.mxu0 0
    %3039 = vmatmul.mubr.bf16.gmra.mrb[0].mxu0 %v2923
    %v3040 = vpop.f32.mrb[0].mxu0
    %v3041 = vadd.f32 0.0, %v3040
    %v3042 = vpop.f32.mrb[0].mxu0
    %v3043 = vpop.f32.mrb[0].mxu0
    %v3044 = vadd.f32 0.0, %v3043
    %v3045 = vpop.f32.mrb[0].mxu0
    %3046 = vdwg.mxu0
    %v3047 = vsub.f32 %v2959, %v3000
    %v3048 = vsub.f32 %v2962, %v3003
    %v3049 = vsub.f32 %v3041, %v2959
    %v3050 = vsub.f32 %v3044, %v2962
    %v3051 = vsub.f32 %v3049, %v3000
    %v3052 = vsub.f32 %v3050, %v3003
    %v3053 = vmul.f32 %v3047, %v3047
    %v3054 = vmul.f32 %v3048, %v3048
    %v3055 = vmul.f32 %v3051, %v3051
    %v3056 = vmul.f32 %v3052, %v3052
    %v3057 = vadd.f32 %v3053, %v3055
    %v3058 = vadd.f32 %v3054, %v3056
    %v3059 = vmul.f32 %v2485, 0.5
    %v3060 = vmul.f32 %v2486, 0.5
    %v3061 = vmul.f32 %v3057, 0.5
    %v3062 = vmul.f32 %v3058, 0.5
    %v3063 = vadd.f32 %v3059, %v3061
    %v3064 = vadd.f32 %v3060, %v3062
    %v3065 = vadd.f32 %v3063, %v3064
    %3066 = vadd.xlane.f32.xlu0 %v3065
    %v3067 = vpop.xlane.xlu0 %3066
    %v3068 = vrot.slane %v3067, 4
    %v3069 = vadd.f32 %v3067, %v3068
    %v3070 = vrot.slane %v3069, 2
    %v3071 = vadd.f32 %v3069, %v3070
    %v3072 = vrot.slane %v3071, 1
    %v3073 = vadd.f32 %v3071, %v3072
    %s3074 = vtos %v3073
    %s3075 = smul.f32 %s3074, 0.00048828125
    %v3076 = vmul.f32 %v3063, %v3063
    %v3077 = vmul.f32 %v3064, %v3064
    %v3078 = vadd.f32 %v3076, %v3077
    %3079 = vadd.xlane.f32.xlu0 %v3078
    %v3080 = vpop.xlane.xlu0 %3079
    %v3081 = vrot.slane %v3080, 4
    %v3082 = vadd.f32 %v3080, %v3081
    %v3083 = vrot.slane %v3082, 2
    %v3084 = vadd.f32 %v3082, %v3083
    %v3085 = vrot.slane %v3084, 1
    %v3086 = vadd.f32 %v3084, %v3085
    %s3087 = vtos %v3086
    %s3088 = smul.f32 %s3087, 0.00048828125
    %s3089 = smul.f32 %s3075, %s3075
    %s3090 = ssub.f32 %s3088, %s3089
    %s3091 = smax.f32 %s3090, 0.0
    %v3092 = vstv %s3075
    %v3093 = vsub.f32 %v3063, %v3092
    %v3094 = vsub.f32 %v3064, %v3092
    %s3095 = sadd.f32 %s3091, 1e-05
    %v3096 = vstv %s3095
    %v3097 = vrsqrt.pop %v3096
    %s3098 = vtos %v3097
    %v3099 = vstv %s3098
    %v3100 = vmul.f32 %v3093, %v3099
    %v3101 = vmul.f32 %v3094, %v3099
    %3102 = vst [vmem:[#allocation29] sm:$0xff] %v3100
    %3103 = vst [vmem:[#allocation29 + $0x8] sm:$0xff] %v3101
    // Predicated region
    $region142: #{tpu_custom_call.1} parent=1 // pred_check
      _
    $region143: #{tpu_custom_call.1} parent=1 // pred_check_branch
      %3105 = sbr.rel (0) target = $region145
    $region144: #{tpu_custom_call.1} parent=1 // pred_region
      %s3107 = ssub.s32 256, 256
      %3108 = vsyncadd [#allocation4], %s3107
      %s3109 = sshll.u32 [#allocation29], 4
      %s3110 = int_to_ptr.vmem [resolvable:$true] %s3109
      %3115 = dma.vmem_to_hbm [thread:$0]  %s3110, 256, %s18, [#allocation4], 128, 128, 8
    $region145: #{tpu_custom_call.1} parent=1 // pred_fallthru
      _
    // Predicated region
    $region146: #{tpu_custom_call.1} parent=1 // pred_check
      _
    $region147: #{tpu_custom_call.1} parent=1 // pred_check_branch
      %3117 = sbr.rel (0) target = $region149
    $region148: #{tpu_custom_call.1} parent=1 // pred_region
      %3118 = dma.done [#allocation4], 256
    $region149: #{tpu_custom_call.1} parent=1 // pred_fallthru
      _
    %3119 = vsyncpa [#allocation3], 1
    %3120 = vsyncpa [#allocation6], 1
    %3121 = vsyncpa [#allocation9], 1
    %3122 = vsyncpa [#allocation12], 1
    %3123 = vsyncpa [#allocation15], 1
    %3124 = vsyncpa [#allocation18], 1
    %3125 = vsyncpa [#allocation21], 1
    %3126 = vsyncpa [#allocation24], 1
    %3127 = vsyncpa [#allocation27], 1
    %3128 = vsyncpa [#allocation4], 1

</llo_original>
